<compile_context>
chip_gen: v7x
topology: tpu7x:2x2x1
jax: 0.10.0
libtpu: 0.0.40
codegen_flags: <defaults>
</compile_context>

<pallas_src>
import functools

import jax
import jax.numpy as jnp
from jax.experimental import pallas as pl
from jax.experimental.pallas import tpu as pltpu


_MAX_UNROLL = 16                      # max statically-unrolled timesteps
_VMEM_TILE_BUDGET = 24 * 2 ** 20      # conservative per-tile VMEM budget


def lstm_encoder_kernel(x_ref, wih_ref, whh_ref, b_ref, fc1w_ref, fc1b_ref,
                        mu_ref, h_ref, c_ref, *, proj_dtype=jnp.float32):
    """One (batch tile, seq tile) grid step of the LSTM encoder.

    x_ref    : (tile_b, tile_seq, D)  batch-major input tile
    wih_ref  : (D, 4H)   W_ih^T, PyTorch gate order [i, f, g, o], g cols *2
    whh_ref  : (H, 4H)   W_hh^T, g cols *2
    b_ref    : (1, 4H)   b_ih + b_hh, g cols *2
    fc1w_ref : (H, H)    fc1.weight^T
    fc1b_ref : (1, H)    fc1.bias
    mu_ref   : (tile_b, H) output (written on the last seq tile)
    h_ref, c_ref : (tile_b, H) VMEM scratch carrying the recurrence state
    """
    s = pl.program_id(1)
    n_s = pl.num_programs(1)
    tile_b, tile_seq, D = x_ref.shape
    H = whh_ref.shape[0]

    @pl.when(s == 0)
    def _init():
        h_ref[...] = jnp.zeros_like(h_ref)
        c_ref[...] = jnp.zeros_like(c_ref)

    whh = whh_ref[...]
    b = b_ref[...]

    def step(gates, h, c):
        # g-gate pre-activations arrive pre-scaled by 2, so one sigmoid pass
        # covers all four gates: tanh(x) = 2*sigmoid(2x) - 1.
        sig = jax.nn.sigmoid(gates)
        i_g = sig[:, 0 * H:1 * H]
        f_g = sig[:, 1 * H:2 * H]
        g_g = 2.0 * sig[:, 2 * H:3 * H] - 1.0
        o_g = sig[:, 3 * H:4 * H]
        c = f_g * c + i_g * g_g
        h = o_g * jnp.tanh(c)
        return h, c

    h = h_ref[...]
    c = c_ref[...]

    if tile_seq <= _MAX_UNROLL:
        # Hoisted input projection: one well-shaped MXU call per seq tile,
        # bias folded in once.  Bounded static unroll over the seq tile.
        x_blk = x_ref[...].reshape(tile_b * tile_seq, D)
        wih = wih_ref[...]
        if x_blk.dtype != proj_dtype:
            x_blk = x_blk.astype(proj_dtype)
        if wih.dtype != proj_dtype:
            wih = wih.astype(proj_dtype)
        xg = (jnp.dot(x_blk, wih, preferred_element_type=jnp.float32)
              + b).reshape(tile_b, tile_seq, 4 * H)
        for t in range(tile_seq):
            gates = xg[:, t, :] + jnp.dot(h, whh,
                                          preferred_element_type=jnp.float32)
            h, c = step(gates, h, c)
    else:
        # Long seq tile: bound live ranges with a fori_loop; read x per
        # timestep from the VMEM ref and project inside the loop.
        wih = wih_ref[...]
        if wih.dtype != proj_dtype:
            wih = wih.astype(proj_dtype)

        def body(t, carry):
            h_t, c_t = carry
            x_t = x_ref[:, pl.ds(t, 1), :].reshape(tile_b, D)
            if x_t.dtype != proj_dtype:
                x_t = x_t.astype(proj_dtype)
            gates = (jnp.dot(x_t, wih, preferred_element_type=jnp.float32) + b
                     + jnp.dot(h_t, whh, preferred_element_type=jnp.float32))
            return step(gates, h_t, c_t)

        h, c = jax.lax.fori_loop(0, tile_seq, body, (h, c), unroll=2)

    h_ref[...] = h
    c_ref[...] = c

    @pl.when(s == n_s - 1)
    def _finalize():
        mu_ref[...] = (jnp.dot(h, fc1w_ref[...],
                               preferred_element_type=jnp.float32)
                       + fc1b_ref[...])


def _num_parallel_tensorcores():
    """2 on chips with two TensorCores sharing megacore (v7x/v4/v5p), else 1."""
    try:
        kind = jax.devices()[0].device_kind.lower()
    except Exception:
        return 1
    return 2 if any(t in kind for t in ("v7", "7x", "v4", "v5p")) else 1


def _prescale_g_gate(w_ih, w_hh, b, H):
    """Scale the g-gate (2H:3H) columns by 2 so tanh = 2*sigmoid(2x)-1."""
    scale = jnp.concatenate([jnp.ones((2 * H,), jnp.float32),
                             jnp.full((H,), 2.0, jnp.float32),
                             jnp.ones((H,), jnp.float32)])[None, :]
    return w_ih * scale, w_hh * scale, b * scale


def vae_lstm_encoder_forward(x, params, *, tile_seq=None, tile_b=None,
                             proj_dtype=jnp.float32):
    """x: (batch, seq, cont_dim) -> mu: (batch, n_hidden)."""
    proj_dtype = jnp.dtype(proj_dtype)
    x = x.astype(jnp.float32)
    B, seq, D = x.shape
    H = params["fc1_w"].shape[0]

    # --- Batch tiling: pad B to a sublane multiple.  On 2-TC chips the batch
    # grid axis gets 2 tiles so the "parallel" dim shards across cores; on
    # 1-TC chips keep one big tile (extra tiles are just serial overhead).
    if tile_b is None:
        n_tc = _num_parallel_tensorcores()
        B_pad = -(-B // (8 * n_tc)) * (8 * n_tc)
        tile_b = B_pad // n_tc
    else:
        assert tile_b % 8 == 0
        B_pad = -(-B // tile_b) * tile_b
    if B_pad != B:
        x = jnp.pad(x, ((0, B_pad - B), (0, 0), (0, 0)))

    # --- bf16 fast path for the hoisted projection: cast x here so the
    # HBM->VMEM DMA is also halved.  Recurrence / gate math stay f32.
    if proj_dtype != jnp.float32:
        x = x.astype(proj_dtype)
    sub = 8 if x.dtype.itemsize == 4 else 16   # sublane packing of (seq, D)

    # --- Seq tiling: bounded static unroll + streaming x via BlockSpec.
    if tile_seq is None:
        tile_seq = max(d for d in range(1, min(seq, _MAX_UNROLL) + 1)
                       if seq % d == 0)
        if tile_seq < 8 and seq > _MAX_UNROLL:
            # Awkward seq length: single whole-seq tile (fori_loop path) if
            # the x tile still fits a conservative VMEM budget.
            if 2 * tile_b * seq * D * x.dtype.itemsize <= _VMEM_TILE_BUDGET // 2:
                tile_seq = seq
    assert B_pad % tile_b == 0
    assert seq % tile_seq == 0
    assert tile_seq == seq or tile_seq % sub == 0, (
        "seq tile must be a sublane multiple for the x dtype, or the full seq")

    # --- g-gate pre-scaling (one cheap XLA op on the tiny weight tensors).
    w_ih, w_hh, b = _prescale_g_gate(params["w_ih"], params["w_hh"],
                                     params["b"], H)

    # --- VMEM budget estimate -> vmem_limit_bytes.
    x_item = x.dtype.itemsize
    est_bytes = (2 * tile_b * tile_seq * D * x_item          # x (double-buffered)
                 + tile_b * tile_seq * 4 * H * 4             # hoisted xg slab
                 + 2 * 4 * (D * 4 * H + H * 4 * H + 4 * H    # weights/bias
                            + H * H + H)
                 + 4 * tile_b * H * 4)                       # h/c scratch + mu
    vmem_limit = int(min(48 * 2 ** 20, max(16 * 2 ** 20, 2 * est_bytes)))

    grid = (B_pad // tile_b, seq // tile_seq)
    kernel = functools.partial(lstm_encoder_kernel, proj_dtype=proj_dtype)

    mu_pad = pl.pallas_call(
        kernel,
        out_shape=jax.ShapeDtypeStruct((B_pad, H), jnp.float32),
        grid_spec=pltpu.PrefetchScalarGridSpec(
            num_scalar_prefetch=0,
            grid=grid,
            in_specs=[
                pl.BlockSpec((tile_b, tile_seq, D), lambda bi, si: (bi, si, 0)),
                pl.BlockSpec((D, 4 * H), lambda bi, si: (0, 0)),
                pl.BlockSpec((H, 4 * H), lambda bi, si: (0, 0)),
                pl.BlockSpec((1, 4 * H), lambda bi, si: (0, 0)),
                pl.BlockSpec((H, H), lambda bi, si: (0, 0)),
                pl.BlockSpec((1, H), lambda bi, si: (0, 0)),
            ],
            out_specs=pl.BlockSpec((tile_b, H), lambda bi, si: (bi, 0)),
            scratch_shapes=[pltpu.VMEM((tile_b, H), jnp.float32),
                            pltpu.VMEM((tile_b, H), jnp.float32)],
        ),
        compiler_params=pltpu.CompilerParams(
            dimension_semantics=("parallel", "arbitrary"),
            vmem_limit_bytes=vmem_limit),
    )(x, w_ih, w_hh, b, params["fc1_w"], params["fc1_b"])

    return mu_pad[:B]


def init_params(key, cont_dim, n_hidden):
    """Deterministic init mimicking PyTorch's U(-1/sqrt(H), 1/sqrt(H))."""
    bound = 1.0 / jnp.sqrt(jnp.float32(n_hidden))
    ks = jax.random.split(key, 8)
    u = lambda k, shape: jax.random.uniform(k, shape, jnp.float32, -bound, bound)
    w_ih = u(ks[0], (4 * n_hidden, cont_dim))   # PyTorch layout [i,f,g,o]
    w_hh = u(ks[1], (4 * n_hidden, n_hidden))
    b_ih = u(ks[2], (4 * n_hidden,))
    b_hh = u(ks[3], (4 * n_hidden,))
    fc1_w = u(ks[4], (n_hidden, n_hidden))
    fc1_b = u(ks[5], (n_hidden,))
    # TODO(synk): fc2 (logvar head) exists in the module but is unused by forward(); omitted.
    return {
        "w_ih": w_ih.T,                         # (D, 4H)
        "w_hh": w_hh.T,                         # (H, 4H)
        "b": (b_ih + b_hh)[None, :],            # (1, 4H)
        "fc1_w": fc1_w.T,                       # (H, H)
        "fc1_b": fc1_b[None, :],                # (1, H)
    }


def _reference(x, params):
    """Pure-JAX reference of the same forward pass (batch-major x, std gates)."""
    x = x.astype(jnp.float32)
    B, seq, D = x.shape
    H = params["fc1_w"].shape[0]
    h = jnp.zeros((B, H), jnp.float32)
    c = jnp.zeros((B, H), jnp.float32)
    for t in range(seq):
        gates = x[:, t, :] @ params["w_ih"] + h @ params["w_hh"] + params["b"]
        i = jax.nn.sigmoid(gates[:, 0 * H:1 * H])
        f = jax.nn.sigmoid(gates[:, 1 * H:2 * H])
        g = jnp.tanh(gates[:, 2 * H:3 * H])
        o = jax.nn.sigmoid(gates[:, 3 * H:4 * H])
        c = f * c + i * g
        h = o * jnp.tanh(c)
    return h @ params["fc1_w"] + params["fc1_b"]


if __name__ == "__main__":
    batch, seq, cont_dim, n_hidden = 2, 16, 16, 32

    key = jax.random.PRNGKey(0)
    k_x, k_p = jax.random.split(key)
    x = jax.random.normal(k_x, (batch, seq, cont_dim), jnp.float32)
    params = init_params(k_p, cont_dim, n_hidden)
    mu_ref = _reference(x, params)

    # f32 path, tile_seq=8 -> two seq-grid steps (exercises the h/c scratch
    # carry and the pl.when init/finalize phases).
    mu = jax.block_until_ready(vae_lstm_encoder_forward(x, params, tile_seq=8))
    assert mu.shape == (batch, n_hidden)
    assert jnp.allclose(mu, mu_ref, atol=1e-4, rtol=1e-4)

    # Auto-tiled default path (generation-aware tile_b / bounded tile_seq).
    mu_auto = jax.block_until_ready(vae_lstm_encoder_forward(x, params))
    assert jnp.allclose(mu_auto, mu_ref, atol=1e-4, rtol=1e-4)

    # bf16 hoisted-projection path (v6e/v7x MXU fast path; recurrence stays
    # f32) -- only loose agreement with the f32 reference is expected.
    mu_bf16 = jax.block_until_ready(
        vae_lstm_encoder_forward(x, params, proj_dtype=jnp.bfloat16))
    assert mu_bf16.shape == (batch, n_hidden)
    assert bool(jnp.all(jnp.isfinite(mu_bf16)))
    assert float(jnp.max(jnp.abs(mu_bf16 - mu_ref))) < 0.2

    print("KERNEL_OK")
</pallas_src>

<mosaic_0001>
module attributes {stable_mosaic.version = 11 : i64} {
  func.func @lstm_encoder_kernel(%arg0: i32, %arg1: i32, %arg2: memref<8x8x16xf32, #tpu.memory_space<vmem>>, %arg3: memref<16x128xf32, #tpu.memory_space<vmem>>, %arg4: memref<32x128xf32, #tpu.memory_space<vmem>>, %arg5: memref<1x128xf32, #tpu.memory_space<vmem>>, %arg6: memref<32x32xf32, #tpu.memory_space<vmem>>, %arg7: memref<1x32xf32, #tpu.memory_space<vmem>>, %arg8: memref<8x32xf32, #tpu.memory_space<vmem>>, %arg9: memref<8x32xf32, #tpu.memory_space<vmem>>, %arg10: memref<8x32xf32, #tpu.memory_space<vmem>>) attributes {dimension_semantics = [#tpu.dimension_semantics<parallel>, #tpu.dimension_semantics<arbitrary>], iteration_bounds = array<i64: 1, 2>, scalar_prefetch = 0 : i64, scratch_operands = 2 : i64, tpu.core_type = #tpu.core_type<tc>, window_params = [{transform_indices = @transform_0, window_bounds = array<i64: 8, 8, 16>}, {pipeline_mode = #tpu.pipeline_mode<synchronous>, transform_indices = @transform_1, window_bounds = array<i64: 16, 128>}, {pipeline_mode = #tpu.pipeline_mode<synchronous>, transform_indices = @transform_2, window_bounds = array<i64: 32, 128>}, {pipeline_mode = #tpu.pipeline_mode<synchronous>, transform_indices = @transform_3, window_bounds = array<i64: 1, 128>}, {pipeline_mode = #tpu.pipeline_mode<synchronous>, transform_indices = @transform_4, window_bounds = array<i64: 32, 32>}, {pipeline_mode = #tpu.pipeline_mode<synchronous>, transform_indices = @transform_5, window_bounds = array<i64: 1, 32>}, {transform_indices = @transform_6, window_bounds = array<i64: 8, 32>}]} {
    %c0_i32 = arith.constant 0 : i32
    %0 = arith.cmpi eq, %arg1, %c0_i32 : i32
    %1 = arith.extui %0 : i1 to i32
    %c0_i32_0 = arith.constant 0 : i32
    %2 = arith.cmpi ne, %1, %c0_i32_0 : i32
    scf.if %2 {
      %cst_50 = arith.constant 0.000000e+00 : f32
      %195 = vector.broadcast %cst_50 : f32 to vector<8x32xf32>
      %c0_51 = arith.constant 0 : index
      %c0_52 = arith.constant 0 : index
      %196 = vector.load %arg9[%c0_51, %c0_52] : memref<8x32xf32, #tpu.memory_space<vmem>>, vector<8x32xf32>
      tpu.vector_store %arg9[%c0_51, %c0_52], %195 {strides = array<i32>} : memref<8x32xf32, #tpu.memory_space<vmem>>, vector<8x32xf32>,
      %cst_53 = arith.constant 0.000000e+00 : f32
      %197 = vector.broadcast %cst_53 : f32 to vector<8x32xf32>
      %c0_54 = arith.constant 0 : index
      %c0_55 = arith.constant 0 : index
      %198 = vector.load %arg10[%c0_54, %c0_55] : memref<8x32xf32, #tpu.memory_space<vmem>>, vector<8x32xf32>
      tpu.vector_store %arg10[%c0_54, %c0_55], %197 {strides = array<i32>} : memref<8x32xf32, #tpu.memory_space<vmem>>, vector<8x32xf32>,
    } else {
    }
    %c0 = arith.constant 0 : index
    %c0_1 = arith.constant 0 : index
    %3 = vector.load %arg4[%c0, %c0_1] : memref<32x128xf32, #tpu.memory_space<vmem>>, vector<32x128xf32>
    %c0_2 = arith.constant 0 : index
    %c0_3 = arith.constant 0 : index
    %4 = vector.load %arg5[%c0_2, %c0_3] : memref<1x128xf32, #tpu.memory_space<vmem>>, vector<1x128xf32>
    %c0_4 = arith.constant 0 : index
    %c0_5 = arith.constant 0 : index
    %5 = vector.load %arg9[%c0_4, %c0_5] : memref<8x32xf32, #tpu.memory_space<vmem>>, vector<8x32xf32>
    %c0_6 = arith.constant 0 : index
    %c0_7 = arith.constant 0 : index
    %6 = vector.load %arg10[%c0_6, %c0_7] : memref<8x32xf32, #tpu.memory_space<vmem>>, vector<8x32xf32>
    %c0_8 = arith.constant 0 : index
    %c0_9 = arith.constant 0 : index
    %c0_10 = arith.constant 0 : index
    %7 = vector.load %arg2[%c0_8, %c0_9, %c0_10] : memref<8x8x16xf32, #tpu.memory_space<vmem>>, vector<8x8x16xf32>
    %8 = vector.shape_cast %7 : vector<8x8x16xf32> to vector<64x16xf32>
    %c0_11 = arith.constant 0 : index
    %c0_12 = arith.constant 0 : index
    %9 = vector.load %arg3[%c0_11, %c0_12] : memref<16x128xf32, #tpu.memory_space<vmem>>, vector<16x128xf32>
    %cst = arith.constant dense<0.000000e+00> : vector<64x128xf32>
    %10 = tpu.matmul %8, %9, %cst {dimension_numbers = #tpu.dot_dimension_numbers<[1], [0], [0], [1], [0, 0, 1, 1], [], []>} : vector<64x16xf32>, vector<16x128xf32>, vector<64x128xf32> -> vector<64x128xf32>
    %11 = vector.broadcast %4 : vector<1x128xf32> to vector<64x128xf32>
    %12 = arith.addf %10, %11 : vector<64x128xf32>
    %13 = vector.shape_cast %12 : vector<64x128xf32> to vector<8x8x128xf32>
    %14 = vector.extract_strided_slice %13 {offsets = [0, 0, 0], sizes = [8, 1, 128], strides = [1, 1, 1]} : vector<8x8x128xf32> to vector<8x1x128xf32>
    %15 = vector.shape_cast %14 : vector<8x1x128xf32> to vector<8x128xf32>
    %cst_13 = arith.constant dense<0.000000e+00> : vector<8x128xf32>
    %16 = tpu.matmul %5, %3, %cst_13 {dimension_numbers = #tpu.dot_dimension_numbers<[1], [0], [0], [1], [0, 0, 1, 1], [], []>} : vector<8x32xf32>, vector<32x128xf32>, vector<8x128xf32> -> vector<8x128xf32>
    %17 = arith.addf %15, %16 : vector<8x128xf32>
    %18 = arith.negf %17 : vector<8x128xf32>
    %19 = math.exp %18 : vector<8x128xf32>
    %cst_14 = arith.constant 1.000000e+00 : f32
    %20 = vector.broadcast %cst_14 : f32 to vector<8x128xf32>
    %21 = arith.addf %20, %19 : vector<8x128xf32>
    %22 = arith.divf %20, %21 : vector<8x128xf32>
    %23 = vector.extract_strided_slice %22 {offsets = [0, 0], sizes = [8, 32], strides = [1, 1]} : vector<8x128xf32> to vector<8x32xf32>
    %24 = vector.extract_strided_slice %22 {offsets = [0, 32], sizes = [8, 32], strides = [1, 1]} : vector<8x128xf32> to vector<8x32xf32>
    %25 = vector.extract_strided_slice %22 {offsets = [0, 64], sizes = [8, 32], strides = [1, 1]} : vector<8x128xf32> to vector<8x32xf32>
    %cst_15 = arith.constant 2.000000e+00 : f32
    %26 = vector.broadcast %cst_15 : f32 to vector<8x32xf32>
    %27 = arith.mulf %26, %25 : vector<8x32xf32>
    %cst_16 = arith.constant 1.000000e+00 : f32
    %28 = vector.broadcast %cst_16 : f32 to vector<8x32xf32>
    %29 = arith.subf %27, %28 : vector<8x32xf32>
    %30 = vector.extract_strided_slice %22 {offsets = [0, 96], sizes = [8, 32], strides = [1, 1]} : vector<8x128xf32> to vector<8x32xf32>
    %31 = arith.mulf %24, %6 : vector<8x32xf32>
    %32 = arith.mulf %23, %29 : vector<8x32xf32>
    %33 = arith.addf %31, %32 : vector<8x32xf32>
    %34 = math.tanh %33 : vector<8x32xf32>
    %35 = arith.mulf %30, %34 : vector<8x32xf32>
    %36 = vector.extract_strided_slice %13 {offsets = [0, 1, 0], sizes = [8, 1, 128], strides = [1, 1, 1]} : vector<8x8x128xf32> to vector<8x1x128xf32>
    %37 = vector.shape_cast %36 : vector<8x1x128xf32> to vector<8x128xf32>
    %cst_17 = arith.constant dense<0.000000e+00> : vector<8x128xf32>
    %38 = tpu.matmul %35, %3, %cst_17 {dimension_numbers = #tpu.dot_dimension_numbers<[1], [0], [0], [1], [0, 0, 1, 1], [], []>} : vector<8x32xf32>, vector<32x128xf32>, vector<8x128xf32> -> vector<8x128xf32>
    %39 = arith.addf %37, %38 : vector<8x128xf32>
    %40 = arith.negf %39 : vector<8x128xf32>
    %41 = math.exp %40 : vector<8x128xf32>
    %cst_18 = arith.constant 1.000000e+00 : f32
    %42 = vector.broadcast %cst_18 : f32 to vector<8x128xf32>
    %43 = arith.addf %42, %41 : vector<8x128xf32>
    %44 = arith.divf %42, %43 : vector<8x128xf32>
    %45 = vector.extract_strided_slice %44 {offsets = [0, 0], sizes = [8, 32], strides = [1, 1]} : vector<8x128xf32> to vector<8x32xf32>
    %46 = vector.extract_strided_slice %44 {offsets = [0, 32], sizes = [8, 32], strides = [1, 1]} : vector<8x128xf32> to vector<8x32xf32>
    %47 = vector.extract_strided_slice %44 {offsets = [0, 64], sizes = [8, 32], strides = [1, 1]} : vector<8x128xf32> to vector<8x32xf32>
    %cst_19 = arith.constant 2.000000e+00 : f32
    %48 = vector.broadcast %cst_19 : f32 to vector<8x32xf32>
    %49 = arith.mulf %48, %47 : vector<8x32xf32>
    %cst_20 = arith.constant 1.000000e+00 : f32
    %50 = vector.broadcast %cst_20 : f32 to vector<8x32xf32>
    %51 = arith.subf %49, %50 : vector<8x32xf32>
    %52 = vector.extract_strided_slice %44 {offsets = [0, 96], sizes = [8, 32], strides = [1, 1]} : vector<8x128xf32> to vector<8x32xf32>
    %53 = arith.mulf %46, %33 : vector<8x32xf32>
    %54 = arith.mulf %45, %51 : vector<8x32xf32>
    %55 = arith.addf %53, %54 : vector<8x32xf32>
    %56 = math.tanh %55 : vector<8x32xf32>
    %57 = arith.mulf %52, %56 : vector<8x32xf32>
    %58 = vector.extract_strided_slice %13 {offsets = [0, 2, 0], sizes = [8, 1, 128], strides = [1, 1, 1]} : vector<8x8x128xf32> to vector<8x1x128xf32>
    %59 = vector.shape_cast %58 : vector<8x1x128xf32> to vector<8x128xf32>
    %cst_21 = arith.constant dense<0.000000e+00> : vector<8x128xf32>
    %60 = tpu.matmul %57, %3, %cst_21 {dimension_numbers = #tpu.dot_dimension_numbers<[1], [0], [0], [1], [0, 0, 1, 1], [], []>} : vector<8x32xf32>, vector<32x128xf32>, vector<8x128xf32> -> vector<8x128xf32>
    %61 = arith.addf %59, %60 : vector<8x128xf32>
    %62 = arith.negf %61 : vector<8x128xf32>
    %63 = math.exp %62 : vector<8x128xf32>
    %cst_22 = arith.constant 1.000000e+00 : f32
    %64 = vector.broadcast %cst_22 : f32 to vector<8x128xf32>
    %65 = arith.addf %64, %63 : vector<8x128xf32>
    %66 = arith.divf %64, %65 : vector<8x128xf32>
    %67 = vector.extract_strided_slice %66 {offsets = [0, 0], sizes = [8, 32], strides = [1, 1]} : vector<8x128xf32> to vector<8x32xf32>
    %68 = vector.extract_strided_slice %66 {offsets = [0, 32], sizes = [8, 32], strides = [1, 1]} : vector<8x128xf32> to vector<8x32xf32>
    %69 = vector.extract_strided_slice %66 {offsets = [0, 64], sizes = [8, 32], strides = [1, 1]} : vector<8x128xf32> to vector<8x32xf32>
    %cst_23 = arith.constant 2.000000e+00 : f32
    %70 = vector.broadcast %cst_23 : f32 to vector<8x32xf32>
    %71 = arith.mulf %70, %69 : vector<8x32xf32>
    %cst_24 = arith.constant 1.000000e+00 : f32
    %72 = vector.broadcast %cst_24 : f32 to vector<8x32xf32>
    %73 = arith.subf %71, %72 : vector<8x32xf32>
    %74 = vector.extract_strided_slice %66 {offsets = [0, 96], sizes = [8, 32], strides = [1, 1]} : vector<8x128xf32> to vector<8x32xf32>
    %75 = arith.mulf %68, %55 : vector<8x32xf32>
    %76 = arith.mulf %67, %73 : vector<8x32xf32>
    %77 = arith.addf %75, %76 : vector<8x32xf32>
    %78 = math.tanh %77 : vector<8x32xf32>
    %79 = arith.mulf %74, %78 : vector<8x32xf32>
    %80 = vector.extract_strided_slice %13 {offsets = [0, 3, 0], sizes = [8, 1, 128], strides = [1, 1, 1]} : vector<8x8x128xf32> to vector<8x1x128xf32>
    %81 = vector.shape_cast %80 : vector<8x1x128xf32> to vector<8x128xf32>
    %cst_25 = arith.constant dense<0.000000e+00> : vector<8x128xf32>
    %82 = tpu.matmul %79, %3, %cst_25 {dimension_numbers = #tpu.dot_dimension_numbers<[1], [0], [0], [1], [0, 0, 1, 1], [], []>} : vector<8x32xf32>, vector<32x128xf32>, vector<8x128xf32> -> vector<8x128xf32>
    %83 = arith.addf %81, %82 : vector<8x128xf32>
    %84 = arith.negf %83 : vector<8x128xf32>
    %85 = math.exp %84 : vector<8x128xf32>
    %cst_26 = arith.constant 1.000000e+00 : f32
    %86 = vector.broadcast %cst_26 : f32 to vector<8x128xf32>
    %87 = arith.addf %86, %85 : vector<8x128xf32>
    %88 = arith.divf %86, %87 : vector<8x128xf32>
    %89 = vector.extract_strided_slice %88 {offsets = [0, 0], sizes = [8, 32], strides = [1, 1]} : vector<8x128xf32> to vector<8x32xf32>
    %90 = vector.extract_strided_slice %88 {offsets = [0, 32], sizes = [8, 32], strides = [1, 1]} : vector<8x128xf32> to vector<8x32xf32>
    %91 = vector.extract_strided_slice %88 {offsets = [0, 64], sizes = [8, 32], strides = [1, 1]} : vector<8x128xf32> to vector<8x32xf32>
    %cst_27 = arith.constant 2.000000e+00 : f32
    %92 = vector.broadcast %cst_27 : f32 to vector<8x32xf32>
    %93 = arith.mulf %92, %91 : vector<8x32xf32>
    %cst_28 = arith.constant 1.000000e+00 : f32
    %94 = vector.broadcast %cst_28 : f32 to vector<8x32xf32>
    %95 = arith.subf %93, %94 : vector<8x32xf32>
    %96 = vector.extract_strided_slice %88 {offsets = [0, 96], sizes = [8, 32], strides = [1, 1]} : vector<8x128xf32> to vector<8x32xf32>
    %97 = arith.mulf %90, %77 : vector<8x32xf32>
    %98 = arith.mulf %89, %95 : vector<8x32xf32>
    %99 = arith.addf %97, %98 : vector<8x32xf32>
    %100 = math.tanh %99 : vector<8x32xf32>
    %101 = arith.mulf %96, %100 : vector<8x32xf32>
    %102 = vector.extract_strided_slice %13 {offsets = [0, 4, 0], sizes = [8, 1, 128], strides = [1, 1, 1]} : vector<8x8x128xf32> to vector<8x1x128xf32>
    %103 = vector.shape_cast %102 : vector<8x1x128xf32> to vector<8x128xf32>
    %cst_29 = arith.constant dense<0.000000e+00> : vector<8x128xf32>
    %104 = tpu.matmul %101, %3, %cst_29 {dimension_numbers = #tpu.dot_dimension_numbers<[1], [0], [0], [1], [0, 0, 1, 1], [], []>} : vector<8x32xf32>, vector<32x128xf32>, vector<8x128xf32> -> vector<8x128xf32>
    %105 = arith.addf %103, %104 : vector<8x128xf32>
    %106 = arith.negf %105 : vector<8x128xf32>
    %107 = math.exp %106 : vector<8x128xf32>
    %cst_30 = arith.constant 1.000000e+00 : f32
    %108 = vector.broadcast %cst_30 : f32 to vector<8x128xf32>
    %109 = arith.addf %108, %107 : vector<8x128xf32>
    %110 = arith.divf %108, %109 : vector<8x128xf32>
    %111 = vector.extract_strided_slice %110 {offsets = [0, 0], sizes = [8, 32], strides = [1, 1]} : vector<8x128xf32> to vector<8x32xf32>
    %112 = vector.extract_strided_slice %110 {offsets = [0, 32], sizes = [8, 32], strides = [1, 1]} : vector<8x128xf32> to vector<8x32xf32>
    %113 = vector.extract_strided_slice %110 {offsets = [0, 64], sizes = [8, 32], strides = [1, 1]} : vector<8x128xf32> to vector<8x32xf32>
    %cst_31 = arith.constant 2.000000e+00 : f32
    %114 = vector.broadcast %cst_31 : f32 to vector<8x32xf32>
    %115 = arith.mulf %114, %113 : vector<8x32xf32>
    %cst_32 = arith.constant 1.000000e+00 : f32
    %116 = vector.broadcast %cst_32 : f32 to vector<8x32xf32>
    %117 = arith.subf %115, %116 : vector<8x32xf32>
    %118 = vector.extract_strided_slice %110 {offsets = [0, 96], sizes = [8, 32], strides = [1, 1]} : vector<8x128xf32> to vector<8x32xf32>
    %119 = arith.mulf %112, %99 : vector<8x32xf32>
    %120 = arith.mulf %111, %117 : vector<8x32xf32>
    %121 = arith.addf %119, %120 : vector<8x32xf32>
    %122 = math.tanh %121 : vector<8x32xf32>
    %123 = arith.mulf %118, %122 : vector<8x32xf32>
    %124 = vector.extract_strided_slice %13 {offsets = [0, 5, 0], sizes = [8, 1, 128], strides = [1, 1, 1]} : vector<8x8x128xf32> to vector<8x1x128xf32>
    %125 = vector.shape_cast %124 : vector<8x1x128xf32> to vector<8x128xf32>
    %cst_33 = arith.constant dense<0.000000e+00> : vector<8x128xf32>
    %126 = tpu.matmul %123, %3, %cst_33 {dimension_numbers = #tpu.dot_dimension_numbers<[1], [0], [0], [1], [0, 0, 1, 1], [], []>} : vector<8x32xf32>, vector<32x128xf32>, vector<8x128xf32> -> vector<8x128xf32>
    %127 = arith.addf %125, %126 : vector<8x128xf32>
    %128 = arith.negf %127 : vector<8x128xf32>
    %129 = math.exp %128 : vector<8x128xf32>
    %cst_34 = arith.constant 1.000000e+00 : f32
    %130 = vector.broadcast %cst_34 : f32 to vector<8x128xf32>
    %131 = arith.addf %130, %129 : vector<8x128xf32>
    %132 = arith.divf %130, %131 : vector<8x128xf32>
    %133 = vector.extract_strided_slice %132 {offsets = [0, 0], sizes = [8, 32], strides = [1, 1]} : vector<8x128xf32> to vector<8x32xf32>
    %134 = vector.extract_strided_slice %132 {offsets = [0, 32], sizes = [8, 32], strides = [1, 1]} : vector<8x128xf32> to vector<8x32xf32>
    %135 = vector.extract_strided_slice %132 {offsets = [0, 64], sizes = [8, 32], strides = [1, 1]} : vector<8x128xf32> to vector<8x32xf32>
    %cst_35 = arith.constant 2.000000e+00 : f32
    %136 = vector.broadcast %cst_35 : f32 to vector<8x32xf32>
    %137 = arith.mulf %136, %135 : vector<8x32xf32>
    %cst_36 = arith.constant 1.000000e+00 : f32
    %138 = vector.broadcast %cst_36 : f32 to vector<8x32xf32>
    %139 = arith.subf %137, %138 : vector<8x32xf32>
    %140 = vector.extract_strided_slice %132 {offsets = [0, 96], sizes = [8, 32], strides = [1, 1]} : vector<8x128xf32> to vector<8x32xf32>
    %141 = arith.mulf %134, %121 : vector<8x32xf32>
    %142 = arith.mulf %133, %139 : vector<8x32xf32>
    %143 = arith.addf %141, %142 : vector<8x32xf32>
    %144 = math.tanh %143 : vector<8x32xf32>
    %145 = arith.mulf %140, %144 : vector<8x32xf32>
    %146 = vector.extract_strided_slice %13 {offsets = [0, 6, 0], sizes = [8, 1, 128], strides = [1, 1, 1]} : vector<8x8x128xf32> to vector<8x1x128xf32>
    %147 = vector.shape_cast %146 : vector<8x1x128xf32> to vector<8x128xf32>
    %cst_37 = arith.constant dense<0.000000e+00> : vector<8x128xf32>
    %148 = tpu.matmul %145, %3, %cst_37 {dimension_numbers = #tpu.dot_dimension_numbers<[1], [0], [0], [1], [0, 0, 1, 1], [], []>} : vector<8x32xf32>, vector<32x128xf32>, vector<8x128xf32> -> vector<8x128xf32>
    %149 = arith.addf %147, %148 : vector<8x128xf32>
    %150 = arith.negf %149 : vector<8x128xf32>
    %151 = math.exp %150 : vector<8x128xf32>
    %cst_38 = arith.constant 1.000000e+00 : f32
    %152 = vector.broadcast %cst_38 : f32 to vector<8x128xf32>
    %153 = arith.addf %152, %151 : vector<8x128xf32>
    %154 = arith.divf %152, %153 : vector<8x128xf32>
    %155 = vector.extract_strided_slice %154 {offsets = [0, 0], sizes = [8, 32], strides = [1, 1]} : vector<8x128xf32> to vector<8x32xf32>
    %156 = vector.extract_strided_slice %154 {offsets = [0, 32], sizes = [8, 32], strides = [1, 1]} : vector<8x128xf32> to vector<8x32xf32>
    %157 = vector.extract_strided_slice %154 {offsets = [0, 64], sizes = [8, 32], strides = [1, 1]} : vector<8x128xf32> to vector<8x32xf32>
    %cst_39 = arith.constant 2.000000e+00 : f32
    %158 = vector.broadcast %cst_39 : f32 to vector<8x32xf32>
    %159 = arith.mulf %158, %157 : vector<8x32xf32>
    %cst_40 = arith.constant 1.000000e+00 : f32
    %160 = vector.broadcast %cst_40 : f32 to vector<8x32xf32>
    %161 = arith.subf %159, %160 : vector<8x32xf32>
    %162 = vector.extract_strided_slice %154 {offsets = [0, 96], sizes = [8, 32], strides = [1, 1]} : vector<8x128xf32> to vector<8x32xf32>
    %163 = arith.mulf %156, %143 : vector<8x32xf32>
    %164 = arith.mulf %155, %161 : vector<8x32xf32>
    %165 = arith.addf %163, %164 : vector<8x32xf32>
    %166 = math.tanh %165 : vector<8x32xf32>
    %167 = arith.mulf %162, %166 : vector<8x32xf32>
    %168 = vector.extract_strided_slice %13 {offsets = [0, 7, 0], sizes = [8, 1, 128], strides = [1, 1, 1]} : vector<8x8x128xf32> to vector<8x1x128xf32>
    %169 = vector.shape_cast %168 : vector<8x1x128xf32> to vector<8x128xf32>
    %cst_41 = arith.constant dense<0.000000e+00> : vector<8x128xf32>
    %170 = tpu.matmul %167, %3, %cst_41 {dimension_numbers = #tpu.dot_dimension_numbers<[1], [0], [0], [1], [0, 0, 1, 1], [], []>} : vector<8x32xf32>, vector<32x128xf32>, vector<8x128xf32> -> vector<8x128xf32>
    %171 = arith.addf %169, %170 : vector<8x128xf32>
    %172 = arith.negf %171 : vector<8x128xf32>
    %173 = math.exp %172 : vector<8x128xf32>
    %cst_42 = arith.constant 1.000000e+00 : f32
    %174 = vector.broadcast %cst_42 : f32 to vector<8x128xf32>
    %175 = arith.addf %174, %173 : vector<8x128xf32>
    %176 = arith.divf %174, %175 : vector<8x128xf32>
    %177 = vector.extract_strided_slice %176 {offsets = [0, 0], sizes = [8, 32], strides = [1, 1]} : vector<8x128xf32> to vector<8x32xf32>
    %178 = vector.extract_strided_slice %176 {offsets = [0, 32], sizes = [8, 32], strides = [1, 1]} : vector<8x128xf32> to vector<8x32xf32>
    %179 = vector.extract_strided_slice %176 {offsets = [0, 64], sizes = [8, 32], strides = [1, 1]} : vector<8x128xf32> to vector<8x32xf32>
    %cst_43 = arith.constant 2.000000e+00 : f32
    %180 = vector.broadcast %cst_43 : f32 to vector<8x32xf32>
    %181 = arith.mulf %180, %179 : vector<8x32xf32>
    %cst_44 = arith.constant 1.000000e+00 : f32
    %182 = vector.broadcast %cst_44 : f32 to vector<8x32xf32>
    %183 = arith.subf %181, %182 : vector<8x32xf32>
    %184 = vector.extract_strided_slice %176 {offsets = [0, 96], sizes = [8, 32], strides = [1, 1]} : vector<8x128xf32> to vector<8x32xf32>
    %185 = arith.mulf %178, %165 : vector<8x32xf32>
    %186 = arith.mulf %177, %183 : vector<8x32xf32>
    %187 = arith.addf %185, %186 : vector<8x32xf32>
    %188 = math.tanh %187 : vector<8x32xf32>
    %189 = arith.mulf %184, %188 : vector<8x32xf32>
    %c0_45 = arith.constant 0 : index
    %c0_46 = arith.constant 0 : index
    %190 = vector.load %arg9[%c0_45, %c0_46] : memref<8x32xf32, #tpu.memory_space<vmem>>, vector<8x32xf32>
    tpu.vector_store %arg9[%c0_45, %c0_46], %189 {strides = array<i32>} : memref<8x32xf32, #tpu.memory_space<vmem>>, vector<8x32xf32>,
    %c0_47 = arith.constant 0 : index
    %c0_48 = arith.constant 0 : index
    %191 = vector.load %arg10[%c0_47, %c0_48] : memref<8x32xf32, #tpu.memory_space<vmem>>, vector<8x32xf32>
    tpu.vector_store %arg10[%c0_47, %c0_48], %187 {strides = array<i32>} : memref<8x32xf32, #tpu.memory_space<vmem>>, vector<8x32xf32>,
    %c1_i32 = arith.constant 1 : i32
    %192 = arith.cmpi eq, %arg1, %c1_i32 : i32
    %193 = arith.extui %192 : i1 to i32
    %c0_i32_49 = arith.constant 0 : i32
    %194 = arith.cmpi ne, %193, %c0_i32_49 : i32
    scf.if %194 {
      %c0_50 = arith.constant 0 : index
      %c0_51 = arith.constant 0 : index
      %195 = vector.load %arg6[%c0_50, %c0_51] : memref<32x32xf32, #tpu.memory_space<vmem>>, vector<32x32xf32>
      %cst_52 = arith.constant dense<0.000000e+00> : vector<8x32xf32>
      %196 = tpu.matmul %189, %195, %cst_52 {dimension_numbers = #tpu.dot_dimension_numbers<[1], [0], [0], [1], [0, 0, 1, 1], [], []>} : vector<8x32xf32>, vector<32x32xf32>, vector<8x32xf32> -> vector<8x32xf32>
      %c0_53 = arith.constant 0 : index
      %c0_54 = arith.constant 0 : index
      %197 = vector.load %arg7[%c0_53, %c0_54] : memref<1x32xf32, #tpu.memory_space<vmem>>, vector<1x32xf32>
      %198 = vector.broadcast %197 : vector<1x32xf32> to vector<8x32xf32>
      %199 = arith.addf %196, %198 : vector<8x32xf32>
      %c0_55 = arith.constant 0 : index
      %c0_56 = arith.constant 0 : index
      %200 = vector.load %arg8[%c0_55, %c0_56] : memref<8x32xf32, #tpu.memory_space<vmem>>, vector<8x32xf32>
      tpu.vector_store %arg8[%c0_55, %c0_56], %199 {strides = array<i32>} : memref<8x32xf32, #tpu.memory_space<vmem>>, vector<8x32xf32>,
    } else {
    }
    return
  }
  func.func @transform_0(%arg0: i32, %arg1: i32) -> (i32, i32, i32) {
    %c0_i32 = arith.constant 0 : i32
    %c0_i32_0 = arith.constant 0 : i32
    return %arg0, %arg1, %c0_i32 : i32, i32, i32
  }
  func.func @transform_1(%arg0: i32, %arg1: i32) -> (i32, i32) {
    %c0_i32 = arith.constant 0 : i32
    %c0_i32_0 = arith.constant 0 : i32
    %c0_i32_1 = arith.constant 0 : i32
    return %c0_i32, %c0_i32_0 : i32, i32
  }
  func.func @transform_2(%arg0: i32, %arg1: i32) -> (i32, i32) {
    %c0_i32 = arith.constant 0 : i32
    %c0_i32_0 = arith.constant 0 : i32
    %c0_i32_1 = arith.constant 0 : i32
    return %c0_i32, %c0_i32_0 : i32, i32
  }
  func.func @transform_3(%arg0: i32, %arg1: i32) -> (i32, i32) {
    %c0_i32 = arith.constant 0 : i32
    %c0_i32_0 = arith.constant 0 : i32
    %c0_i32_1 = arith.constant 0 : i32
    return %c0_i32, %c0_i32_0 : i32, i32
  }
  func.func @transform_4(%arg0: i32, %arg1: i32) -> (i32, i32) {
    %c0_i32 = arith.constant 0 : i32
    %c0_i32_0 = arith.constant 0 : i32
    %c0_i32_1 = arith.constant 0 : i32
    return %c0_i32, %c0_i32_0 : i32, i32
  }
  func.func @transform_5(%arg0: i32, %arg1: i32) -> (i32, i32) {
    %c0_i32 = arith.constant 0 : i32
    %c0_i32_0 = arith.constant 0 : i32
    %c0_i32_1 = arith.constant 0 : i32
    return %c0_i32, %c0_i32_0 : i32, i32
  }
  func.func @transform_6(%arg0: i32, %arg1: i32) -> (i32, i32) {
    %c0_i32 = arith.constant 0 : i32
    %c0_i32_0 = arith.constant 0 : i32
    return %arg0, %c0_i32 : i32, i32
  }
}

</mosaic_0001>

<llo_original>
// kernel: tpu_custom_call.1
$region0: #{tpu_custom_call.1}
  #allocation0 [shape = 'u32[]', space=smem, size = 0x4, offset = 0x4, fixed_abs, tag = 'smem constant byte address 0x4 - core index']
  #allocation1 [shape = 'u32[144,128]{1,0:T(1,128)}', space=vmem, size = 0x12000, scoped, tag = 'internal scratch']
  #allocation2 [shape = 'f32[8,32]{1,0:T(8,128)}', space=vmem, size = 0x1000, scoped, tag = 'scratch operand']
  #allocation3 [shape = 'f32[8,32]{1,0:T(8,128)}', space=vmem, size = 0x1000, scoped, tag = 'scratch operand']
  %s0 = inlined_call_operand.hbm [shape: f32[8,16,16], index: 0, kind: input, shape index: {}]
  %s1 = inlined_call_operand.hbm [shape: f32[16,128], index: 1, kind: input, shape index: {}]
  %s2 = inlined_call_operand.hbm [shape: f32[32,128], index: 2, kind: input, shape index: {}]
  %s3 = inlined_call_operand.vmem [shape: f32[1,128], index: 3, kind: input, shape index: {}]
  %s4 = inlined_call_operand.hbm [shape: f32[32,32], index: 4, kind: input, shape index: {}]
  %s5 = inlined_call_operand.vmem [shape: f32[1,32], index: 5, kind: input, shape index: {}]
  %s6 = inlined_call_operand.hbm [shape: f32[8,32], index: 6, kind: output, shape index: {}]
  %s7 = sld [smem:[#allocation0]]
  $region81: #{tpu_custom_call.1} parent=0
    _
  %s9 = ssub.s32 1, %s7
  %s10 = scalar_select 0, %s9, %s7
  $region1: #{tpu_custom_call.1} parent=0
    #allocation4 [shape = 'u8[65536]{0}', space=vmem, size = 0x10000, scoped, tag = 'input window, operand 0']
    #allocation5 [shape = 's32[2]{0}', space=sflag, size = 0x8, scoped, tag = 'scoped memory for tpu_custom_call.1']
    #allocation6 [shape = 's32[2]{0}', space=sflag, size = 0x8, scoped, tag = 'scoped memory for tpu_custom_call.1']
    #allocation7 [shape = 'u8[8192]{0}', space=vmem, size = 0x2000, scoped, tag = 'input window, operand 1, single buffered']
    #allocation8 [shape = 's32[1]{0}', space=sflag, size = 0x4, scoped, tag = 'scoped memory for tpu_custom_call.1']
    #allocation9 [shape = 'u8[16384]{0}', space=vmem, size = 0x4000, scoped, tag = 'input window, operand 2, single buffered']
    #allocation10 [shape = 'u8[16384]{0}', space=vmem, size = 0x4000, scoped, tag = 'input window, operand 4, single buffered']
    #allocation11 [shape = 's32[1]{0}', space=sflag, size = 0x4, scoped, tag = 'scoped memory for tpu_custom_call.1']
    #allocation12 [shape = 'u8[4096]{0}', space=vmem, size = 0x1000, scoped, tag = 'output window, operand 0, single buffered']
    %11 = vsyncpa [#allocation5], 0
    %s12 = scalar_lea.sflag [#allocation5], 1
    %13 = vsyncpa %s12, 0
    %14 = vsyncpa [#allocation8], 0
    %15 = vsyncpa [#allocation11], 0
    %16 = vsyncpa [#allocation6], 0
    loop: start=0, step=1, limit=4
    $region2: #{tpu_custom_call.1} parent=1 // loop_pre_header
      _
    $region3: #{tpu_custom_call.1} parent=1 // loop_header
      %s18 = sphi 0, %s22
      %p19 = scmp.ge.s32.totalorder %s18, 4
      %s25 = sphi 0, %s37
      %s26 = sphi 0, %s33
      %s27 = sphi 0, %s25
      %s28 = sphi 0, %s26
      %s29 = sphi 0, %s27
      %s30 = sphi 0, %s28
      %s42 = sphi 0, %s44
      %s45 = sphi 0, %s42
      %s46 = sphi 0, %s45
      %s62 = sphi 0, %s46
      %s66 = sphi 0, %s66
      %s68 = sphi 0, %s66
      %s69 = sphi 0, %s68
      %s83 = sphi 0, %s69
      %s87 = sphi 0, %s87
      %s89 = sphi 0, %s87
      %s90 = sphi 0, %s89
      %s104 = sphi 0, %s90
      %s108 = sphi 0, %s108
      %s110 = sphi 0, %s108
      %s111 = sphi 0, %s110
      %s125 = sphi 0, %s111
      %s129 = sphi 0, %s129
      %s131 = sphi 0, %s129
      %s132 = sphi 0, %s131
      %s146 = sphi 0, %s132
      %s150 = sphi 0, %s150
      %s152 = sphi 0, %s150
      %s153 = sphi 0, %s152
      %s167 = sphi 0, %s153
      %s173 = sphi 0, %s175
      %s176 = sphi 0, %s173
      %s177 = sphi 0, %s176
      %s193 = sphi 0, %s177
    $region4: #{tpu_custom_call.1} parent=1 // loop_header_branch
      %21 = sbr.rel (%p19) target = $region8
    $region5: #{tpu_custom_call.1} parent=1 // loop_body
      %s23 = ssub.s32 %s18, 1
      %s24 = ssub.s32 %s18, 2
      %s31 = sadd.s32 1, %s26
      %p32 = scmp.ge.s32.totalorder %s31, 2
      %s33 = scalar_select %p32, 0, %s31
      %s34 = sadd.s32 1, %s25
      %s35 = scalar_select %p32, %s34, %s25
      %p36 = scmp.ge.s32.totalorder %s35, 1
      %s37 = scalar_select %p36, 0, %s35
      %s38 = ssub.s32 %s25, %s37
      %s39 = ssub.s32 %s26, %s33
      %s40 = sor.u32 %s38, %s39
      %p41 = scmp.eq.s32.totalorder %s40, 0
      %s43 = sadd.s32 %s42, 1
      %s44 = scalar_select %p41, %s42, %s43
      %p47 = pneg %p41
      %p48 = scmp.eq.s32.totalorder %s18, 1
      %p49 = por %p47, %p48
      %p50 = scmp.ne.s32.totalorder %s42, %s45
      %p51 = scmp.eq.s32.totalorder %s18, 0
      %p52 = por %p50, %p51
      %p53 = scmp.ne.s32.totalorder %s42, %s45
      %p54 = scmp.eq.s32.totalorder %s23, 1
      %p55 = por %p53, %p54
      %p56 = scmp.ne.s32.totalorder %s45, %s46
      %p57 = scmp.eq.s32.totalorder %s23, 0
      %p58 = por %p56, %p57
      %p59 = scmp.ne.s32.totalorder %s45, %s46
      %p60 = scmp.eq.s32.totalorder %s24, 1
      %p61 = por %p59, %p60
      %p63 = scmp.ne.s32.totalorder %s46, %s62
      %p64 = scmp.eq.s32.totalorder %s24, 0
      %p65 = por %p63, %p64
      %s67 = sadd.s32 %s66, 1
      %p70 = scmp.eq.s32.totalorder %s18, 1
      %p71 = scmp.ne.s32.totalorder %s66, %s68
      %p72 = scmp.eq.s32.totalorder %s18, 0
      %p73 = por %p71, %p72
      %p74 = scmp.ne.s32.totalorder %s66, %s68
      %p75 = scmp.eq.s32.totalorder %s23, 1
      %p76 = por %p74, %p75
      %p77 = scmp.ne.s32.totalorder %s68, %s69
      %p78 = scmp.eq.s32.totalorder %s23, 0
      %p79 = por %p77, %p78
      %p80 = scmp.ne.s32.totalorder %s68, %s69
      %p81 = scmp.eq.s32.totalorder %s24, 1
      %p82 = por %p80, %p81
      %p84 = scmp.ne.s32.totalorder %s69, %s83
      %p85 = scmp.eq.s32.totalorder %s24, 0
      %p86 = por %p84, %p85
      %s88 = sadd.s32 %s87, 1
      %p91 = scmp.eq.s32.totalorder %s18, 1
      %p92 = scmp.ne.s32.totalorder %s87, %s89
      %p93 = scmp.eq.s32.totalorder %s18, 0
      %p94 = por %p92, %p93
      %p95 = scmp.ne.s32.totalorder %s87, %s89
      %p96 = scmp.eq.s32.totalorder %s23, 1
      %p97 = por %p95, %p96
      %p98 = scmp.ne.s32.totalorder %s89, %s90
      %p99 = scmp.eq.s32.totalorder %s23, 0
      %p100 = por %p98, %p99
      %p101 = scmp.ne.s32.totalorder %s89, %s90
      %p102 = scmp.eq.s32.totalorder %s24, 1
      %p103 = por %p101, %p102
      %p105 = scmp.ne.s32.totalorder %s90, %s104
      %p106 = scmp.eq.s32.totalorder %s24, 0
      %p107 = por %p105, %p106
      %s109 = sadd.s32 %s108, 1
      %p112 = scmp.eq.s32.totalorder %s18, 1
      %p113 = scmp.ne.s32.totalorder %s108, %s110
      %p114 = scmp.eq.s32.totalorder %s18, 0
      %p115 = por %p113, %p114
      %p116 = scmp.ne.s32.totalorder %s108, %s110
      %p117 = scmp.eq.s32.totalorder %s23, 1
      %p118 = por %p116, %p117
      %p119 = scmp.ne.s32.totalorder %s110, %s111
      %p120 = scmp.eq.s32.totalorder %s23, 0
      %p121 = por %p119, %p120
      %p122 = scmp.ne.s32.totalorder %s110, %s111
      %p123 = scmp.eq.s32.totalorder %s24, 1
      %p124 = por %p122, %p123
      %p126 = scmp.ne.s32.totalorder %s111, %s125
      %p127 = scmp.eq.s32.totalorder %s24, 0
      %p128 = por %p126, %p127
      %s130 = sadd.s32 %s129, 1
      %p133 = scmp.eq.s32.totalorder %s18, 1
      %p134 = scmp.ne.s32.totalorder %s129, %s131
      %p135 = scmp.eq.s32.totalorder %s18, 0
      %p136 = por %p134, %p135
      %p137 = scmp.ne.s32.totalorder %s129, %s131
      %p138 = scmp.eq.s32.totalorder %s23, 1
      %p139 = por %p137, %p138
      %p140 = scmp.ne.s32.totalorder %s131, %s132
      %p141 = scmp.eq.s32.totalorder %s23, 0
      %p142 = por %p140, %p141
      %p143 = scmp.ne.s32.totalorder %s131, %s132
      %p144 = scmp.eq.s32.totalorder %s24, 1
      %p145 = por %p143, %p144
      %p147 = scmp.ne.s32.totalorder %s132, %s146
      %p148 = scmp.eq.s32.totalorder %s24, 0
      %p149 = por %p147, %p148
      %s151 = sadd.s32 %s150, 1
      %p154 = scmp.eq.s32.totalorder %s18, 1
      %p155 = scmp.ne.s32.totalorder %s150, %s152
      %p156 = scmp.eq.s32.totalorder %s18, 0
      %p157 = por %p155, %p156
      %p158 = scmp.ne.s32.totalorder %s150, %s152
      %p159 = scmp.eq.s32.totalorder %s23, 1
      %p160 = por %p158, %p159
      %p161 = scmp.ne.s32.totalorder %s152, %s153
      %p162 = scmp.eq.s32.totalorder %s23, 0
      %p163 = por %p161, %p162
      %p164 = scmp.ne.s32.totalorder %s152, %s153
      %p165 = scmp.eq.s32.totalorder %s24, 1
      %p166 = por %p164, %p165
      %p168 = scmp.ne.s32.totalorder %s153, %s167
      %p169 = scmp.eq.s32.totalorder %s24, 0
      %p170 = por %p168, %p169
      %s171 = ssub.s32 %s25, %s37
      %p172 = scmp.eq.s32.totalorder %s171, 0
      %s174 = sadd.s32 %s173, 1
      %s175 = scalar_select %p172, %s173, %s174
      %p178 = pneg %p172
      %p179 = scmp.eq.s32.totalorder %s18, 1
      %p180 = por %p178, %p179
      %p181 = scmp.ne.s32.totalorder %s173, %s176
      %p182 = scmp.eq.s32.totalorder %s18, 0
      %p183 = por %p181, %p182
      %p184 = scmp.ne.s32.totalorder %s173, %s176
      %p185 = scmp.eq.s32.totalorder %s23, 1
      %p186 = por %p184, %p185
      %p187 = scmp.ne.s32.totalorder %s176, %s177
      %p188 = scmp.eq.s32.totalorder %s23, 0
      %p189 = por %p187, %p188
      %p190 = scmp.ne.s32.totalorder %s176, %s177
      %p191 = scmp.eq.s32.totalorder %s24, 1
      %p192 = por %p190, %p191
      %p194 = scmp.ne.s32.totalorder %s177, %s193
      %p195 = scmp.eq.s32.totalorder %s24, 0
      %p196 = por %p194, %p195
      %p197 = scmp.le.s32.totalorder 1, %s18
      %p198 = scmp.lt.s32.totalorder %s18, 3
      %p199 = pnand %p197, %p198
      %p200 = pneg %p199
      // Predicated region
      $region9: #{tpu_custom_call.1} parent=5 // pred_check
        _
      $region10: #{tpu_custom_call.1} parent=5 // pred_check_branch
        %202 = sbr.rel (%p199) target = $region12
      $region11: #{tpu_custom_call.1} parent=5 // pred_region
        %s203 = ssub.s32 %s18, 1
        // Predicated region
        $region13: #{tpu_custom_call.1} parent=11 // pred_check
          %p204 = pneg %p79
        $region14: #{tpu_custom_call.1} parent=11 // pred_check_branch
          %206 = sbr.rel (%p204) target = $region16
        $region15: #{tpu_custom_call.1} parent=11 // pred_region
          %s208 = ssub.s32 256, 256
          %209 = vsyncadd [#allocation8], %s208
          %s210 = sshll.u32 [#allocation7], 4
          %s211 = int_to_ptr.vmem [resolvable:$true] %s210
          %216 = dma.hbm_to_vmem [thread:$0]  %s1, 256, %s211, [#allocation8], 128, 128, 8
        $region16: #{tpu_custom_call.1} parent=11 // pred_fallthru
          _
        // Predicated region
        $region17: #{tpu_custom_call.1} parent=11 // pred_check
          %p217 = pneg %p100
        $region18: #{tpu_custom_call.1} parent=11 // pred_check_branch
          %219 = sbr.rel (%p217) target = $region20
        $region19: #{tpu_custom_call.1} parent=11 // pred_region
          %s221 = ssub.s32 512, 512
          %222 = vsyncadd [#allocation8], %s221
          %s223 = sshll.u32 [#allocation9], 4
          %s224 = int_to_ptr.vmem [resolvable:$true] %s223
          %229 = dma.hbm_to_vmem [thread:$0]  %s2, 512, %s224, [#allocation8], 128, 128, 8
        $region20: #{tpu_custom_call.1} parent=11 // pred_fallthru
          _
        // Predicated region
        $region21: #{tpu_custom_call.1} parent=11 // pred_check
          %p230 = pneg %p121
        $region22: #{tpu_custom_call.1} parent=11 // pred_check_branch
          %232 = sbr.rel (%p230) target = $region24
        $region23: #{tpu_custom_call.1} parent=11 // pred_region
          _
        $region24: #{tpu_custom_call.1} parent=11 // pred_fallthru
          _
        // Predicated region
        $region25: #{tpu_custom_call.1} parent=11 // pred_check
          %p233 = pneg %p142
        $region26: #{tpu_custom_call.1} parent=11 // pred_check_branch
          %235 = sbr.rel (%p233) target = $region28
        $region27: #{tpu_custom_call.1} parent=11 // pred_region
          %s237 = ssub.s32 512, 512
          %238 = vsyncadd [#allocation11], %s237
          %s239 = sshll.u32 [#allocation10], 4
          %s240 = int_to_ptr.vmem [resolvable:$true] %s239
          %245 = dma.hbm_to_vmem [thread:$0]  %s4, 512, %s240, [#allocation11], 128, 128, 8
        $region28: #{tpu_custom_call.1} parent=11 // pred_fallthru
          _
        // Predicated region
        $region29: #{tpu_custom_call.1} parent=11 // pred_check
          %p246 = pneg %p163
        $region30: #{tpu_custom_call.1} parent=11 // pred_check_branch
          %248 = sbr.rel (%p246) target = $region32
        $region31: #{tpu_custom_call.1} parent=11 // pred_region
          _
        $region32: #{tpu_custom_call.1} parent=11 // pred_fallthru
          _
      $region12: #{tpu_custom_call.1} parent=5 // pred_fallthru
        _
      %p249 = scmp.lt.s32.totalorder %s18, 2
      // Predicated region
      $region33: #{tpu_custom_call.1} parent=5 // pred_check
        %p250 = pneg %p249
      $region34: #{tpu_custom_call.1} parent=5 // pred_check_branch
        %252 = sbr.rel (%p250) target = $region36
      $region35: #{tpu_custom_call.1} parent=5 // pred_region
        // Predicated region
        $region37: #{tpu_custom_call.1} parent=35 // pred_check
          %p253 = pneg %p52
        $region38: #{tpu_custom_call.1} parent=35 // pred_check_branch
          %255 = sbr.rel (%p253) target = $region40
        $region39: #{tpu_custom_call.1} parent=35 // pred_region
          %s256 = sand.u32 %s42, 1
          %s257 = scalar_lea.sflag [#allocation5], %s256
          %s258 = sand.u32 %s42, 1
          %s259 = smul.addr %s258, 64
          %s260 = scalar_lea.vmem [#allocation4], %s259
          %s261 = smul.u32 8, %s25
          %s263 = ssub.s32 1024, 1024
          %264 = vsyncadd %s257, %s263
          %s265 = smul.addr %s261, 2
          %s266 = sadd.s32 %s26, %s265
          %s267 = smul.addr %s266, 128
          %s268 = scalar_lea.hbm %s0, %s267
          %s269 = sshll.u32 %s260, 4
          %s270 = int_to_ptr.vmem [resolvable:$true] %s269
          %275 = dma.hbm_to_vmem [thread:$0]  %s268, 1024, %s270, %s257, 256, 128, 8
        $region40: #{tpu_custom_call.1} parent=35 // pred_fallthru
          _
      $region36: #{tpu_custom_call.1} parent=5 // pred_fallthru
        _
      %p276 = scmp.le.s32.totalorder 1, %s18
      %p277 = scmp.lt.s32.totalorder %s18, 3
      %p278 = pnand %p276, %p277
      %p279 = pneg %p278
      // Predicated region
      $region41: #{tpu_custom_call.1} parent=5 // pred_check
        _
      $region42: #{tpu_custom_call.1} parent=5 // pred_check_branch
        %281 = sbr.rel (%p278) target = $region44
      $region43: #{tpu_custom_call.1} parent=5 // pred_region
        %s282 = ssub.s32 %s18, 1
        %s283 = sand.u32 %s45, 1
        %s284 = scalar_lea.sflag [#allocation5], %s283
        %s285 = sand.u32 %s45, 1
        %s286 = smul.addr %s285, 64
        %s287 = scalar_lea.vmem [#allocation4], %s286
        // Predicated region
        $region45: #{tpu_custom_call.1} parent=43 // pred_check
          %p288 = pneg %p58
        $region46: #{tpu_custom_call.1} parent=43 // pred_check_branch
          %290 = sbr.rel (%p288) target = $region48
        $region47: #{tpu_custom_call.1} parent=43 // pred_region
          %291 = dma.done %s284, 1024
        $region48: #{tpu_custom_call.1} parent=43 // pred_fallthru
          _
        // Predicated region
        $region49: #{tpu_custom_call.1} parent=43 // pred_check
          %p292 = pneg %p79
        $region50: #{tpu_custom_call.1} parent=43 // pred_check_branch
          %294 = sbr.rel (%p292) target = $region52
        $region51: #{tpu_custom_call.1} parent=43 // pred_region
          %295 = dma.done [#allocation8], 256
        $region52: #{tpu_custom_call.1} parent=43 // pred_fallthru
          _
        // Predicated region
        $region53: #{tpu_custom_call.1} parent=43 // pred_check
          %p296 = pneg %p100
        $region54: #{tpu_custom_call.1} parent=43 // pred_check_branch
          %298 = sbr.rel (%p296) target = $region56
        $region55: #{tpu_custom_call.1} parent=43 // pred_region
          %299 = dma.done [#allocation8], 512
        $region56: #{tpu_custom_call.1} parent=43 // pred_fallthru
          _
        // Predicated region
        $region57: #{tpu_custom_call.1} parent=43 // pred_check
          %p300 = pneg %p142
        $region58: #{tpu_custom_call.1} parent=43 // pred_check_branch
          %302 = sbr.rel (%p300) target = $region60
        $region59: #{tpu_custom_call.1} parent=43 // pred_region
          %303 = dma.done [#allocation11], 512
        $region60: #{tpu_custom_call.1} parent=43 // pred_fallthru
          _
        %s304 = sand.u32 %s45, 1
        %s305 = scalar_lea.sflag [#allocation5], %s304
        %s306 = sand.u32 %s45, 1
        %s307 = smul.addr %s306, 64
        %s308 = scalar_lea.vmem [#allocation4], %s307
        %p309 = pneg %p58
        %p310 = pneg %p55
        %p311 = pneg %p79
        %p312 = pneg %p76
        %p313 = pneg %p100
        %p314 = pneg %p97
        %p315 = pneg %p121
        %p316 = pneg %p118
        %p317 = pneg %p142
        %p318 = pneg %p139
        %p319 = pneg %p163
        %p320 = pneg %p160
        %p321 = pneg %p189
        %p322 = pneg %p186
        %s323 = smul.u32 8, %s27
        %p324 = scmp.eq.s32.totalorder %s28, 0
        // Predicated region
        $region61: #{tpu_custom_call.1} parent=43 // pred_check
          %p325 = pneg %p324
        $region62: #{tpu_custom_call.1} parent=43 // pred_check_branch
          %327 = sbr.rel (%p325) target = $region64
        $region63: #{tpu_custom_call.1} parent=43 // pred_region
          %vm328 = vcmask 261120
          %329 = vst.msk [vmem:[#allocation2] sm:$0xff] %vm328, 0.0
          %330 = vst.msk [vmem:[#allocation3] sm:$0xff] %vm328, 0.0
        $region64: #{tpu_custom_call.1} parent=43 // pred_fallthru
          _
        %v331 = vld [vmem:[#allocation9] sm:$0xff]
        %v332 = vld [vmem:[#allocation9 + $0x8] sm:$0xff]
        %v333 = vld [vmem:[#allocation9 + $0x10] sm:$0xff]
        %v334 = vld [vmem:[#allocation9 + $0x18] sm:$0xff]
        %v335 = vld [vmem:[%s3] sm:$0x1]
        %v336 = vld [vmem:[#allocation2] sm:$0xff]
        %v337 = vld [vmem:[#allocation3] sm:$0xff]
        %v338 = vld [vmem:[%s287] sm:$0xff]
        %v339 = vld [vmem:[%s287 + $0x8] sm:$0xff]
        %v340 = vld [vmem:[%s287 + $0x10] sm:$0xff]
        %v341 = vld [vmem:[%s287 + $0x18] sm:$0xff]
        %v342 = vld [vmem:[%s287 + $0x20] sm:$0xff]
        %v343 = vld [vmem:[%s287 + $0x28] sm:$0xff]
        %v344 = vld [vmem:[%s287 + $0x30] sm:$0xff]
        %v345 = vld [vmem:[%s287 + $0x38] sm:$0xff]
        %v346 = vld [vmem:[#allocation7] sm:$0xff]
        %v347 = vld [vmem:[#allocation7 + $0x8] sm:$0xff]
        %v349 = vlaneseq
        %v350 = vshrl.u32 %v349, 7
        %v351 = vsub.s32 0, %v350
        %v352 = vrot.slane %v335, %v351
        %vm354 = vcmask 130048
        %v356 = vsel %vm354, %v338, 0
        %v359 = vsel %vm354, %v339, 0
        %v362 = vsel %vm354, %v340, 0
        %v365 = vsel %vm354, %v341, 0
        %v368 = vsel %vm354, %v342, 0
        %v371 = vsel %vm354, %v343, 0
        %v374 = vsel %vm354, %v344, 0
        %v377 = vsel %vm354, %v345, 0
        %379 = vmatprep.subr.mxu0 0.0
        %380 = vmatpush1.msra.mxu0 %v346
        %381 = vmatprep.subr.mxu0 0.0
        %382 = vmatpush1.msra.mxu0 %v347
        %383 = vmatprep.subr.mxu0 0.0
        %384 = vmatpush1.msra.mxu0 0.0
        %385 = vmatprep.subr.mxu0 0.0
        %386 = vmatpush1.msra.mxu0 0.0
        %387 = vmatprep.subr.mxu0 0.0
        %388 = vmatpush1.msra.mxu0 0.0
        %389 = vmatprep.subr.mxu0 0.0
        %390 = vmatpush1.msra.mxu0 0.0
        %391 = vmatprep.subr.mxu0 0.0
        %392 = vmatpush1.msra.mxu0 0.0
        %393 = vmatprep.subr.mxu0 0.0
        %394 = vmatpush1.msra.mxu0 0.0
        %395 = vmatprep.subr.mxu0 0.0
        %396 = vmatpush1.msra.mxu0 0.0
        %397 = vmatprep.subr.mxu0 0.0
        %398 = vmatpush1.msra.mxu0 0.0
        %399 = vmatprep.subr.mxu0 0.0
        %400 = vmatpush1.msra.mxu0 0.0
        %401 = vmatprep.subr.mxu0 0.0
        %402 = vmatpush1.msra.mxu0 0.0
        %403 = vmatprep.subr.mxu0 0.0
        %404 = vmatpush1.msra.mxu0 0.0
        %405 = vmatprep.subr.mxu0 0.0
        %406 = vmatpush1.msra.mxu0 0.0
        %407 = vmatprep.subr.mxu0 0.0
        %408 = vmatpush1.msra.mxu0 0.0
        %409 = vmatprep.subr.mxu0 0.0
        %410 = vmatpush1.msra.mxu0 0.0
        %411 = vmatprep.subr.mxu0 0.0
        %412 = vmatpush1.msra.mxu0 0.0
        %413 = vmatprep.subr.mxu0 0.0
        %414 = vmatpush1.msra.mxu0 0.0
        %415 = vmatprep.subr.mxu0 0.0
        %416 = vmatpush1.msra.mxu0 0.0
        %417 = vmatprep.subr.mxu0 0.0
        %418 = vmatpush1.msra.mxu0 0.0
        %419 = vmatprep.subr.mxu0 0.0
        %420 = vmatpush1.msra.mxu0 0.0
        %421 = vmatprep.subr.mxu0 0.0
        %422 = vmatpush1.msra.mxu0 0.0
        %423 = vmatprep.subr.mxu0 0.0
        %424 = vmatpush1.msra.mxu0 0.0
        %425 = vmatprep.subr.mxu0 0.0
        %426 = vmatpush1.msra.mxu0 0.0
        %427 = vmatprep.subr.mxu0 0.0
        %428 = vmatpush1.msra.mxu0 0.0
        %429 = vmatprep.subr.mxu0 0.0
        %430 = vmatpush1.msra.mxu0 0.0
        %431 = vmatprep.subr.mxu0 0.0
        %432 = vmatpush1.msra.mxu0 0.0
        %433 = vmatprep.subr.mxu0 0.0
        %434 = vmatpush1.msra.mxu0 0.0
        %435 = vmatprep.subr.mxu0 0.0
        %436 = vmatpush1.msra.mxu0 0.0
        %437 = vmatprep.subr.mxu0 0.0
        %438 = vmatpush1.msra.mxu0 0.0
        %439 = vmatprep.subr.mxu0 0.0
        %440 = vmatpush1.msra.mxu0 0.0
        %441 = vmatprep.subr.mxu0 0.0
        %442 = vmatpush1.msra.mxu0 0.0
        %443 = vmatprep.mubr.f32.mxu0 0.0
        %444 = vmatmul.mubr.f32.gmra.mrb[0].mxu0 %v356
        %v445 = vpop.f32.mrb[0].mxu0
        %v446 = vadd.f32 %v352, %v445
        %v447 = vpop.f32.mrb[0].mxu0
        %448 = vmatprep.mubr.f32.mxu0 0.0
        %449 = vmatmul.mubr.f32.gmra.mrb[0].mxu0 %v359
        %v450 = vpop.f32.mrb[0].mxu0
        %v451 = vadd.f32 %v352, %v450
        %v452 = vpop.f32.mrb[0].mxu0
        %453 = vmatprep.mubr.f32.mxu0 0.0
        %454 = vmatmul.mubr.f32.gmra.mrb[0].mxu0 %v362
        %v455 = vpop.f32.mrb[0].mxu0
        %v456 = vadd.f32 %v352, %v455
        %v457 = vpop.f32.mrb[0].mxu0
        %458 = vmatprep.mubr.f32.mxu0 0.0
        %459 = vmatmul.mubr.f32.gmra.mrb[0].mxu0 %v365
        %v460 = vpop.f32.mrb[0].mxu0
        %v461 = vadd.f32 %v352, %v460
        %v462 = vpop.f32.mrb[0].mxu0
        %463 = vmatprep.mubr.f32.mxu0 0.0
        %464 = vmatmul.mubr.f32.gmra.mrb[0].mxu0 %v368
        %v465 = vpop.f32.mrb[0].mxu0
        %v466 = vadd.f32 %v352, %v465
        %v467 = vpop.f32.mrb[0].mxu0
        %468 = vmatprep.mubr.f32.mxu0 0.0
        %469 = vmatmul.mubr.f32.gmra.mrb[0].mxu0 %v371
        %v470 = vpop.f32.mrb[0].mxu0
        %v471 = vadd.f32 %v352, %v470
        %v472 = vpop.f32.mrb[0].mxu0
        %473 = vmatprep.mubr.f32.mxu0 0.0
        %474 = vmatmul.mubr.f32.gmra.mrb[0].mxu0 %v374
        %v475 = vpop.f32.mrb[0].mxu0
        %v476 = vadd.f32 %v352, %v475
        %v477 = vpop.f32.mrb[0].mxu0
        %478 = vmatprep.mubr.f32.mxu0 0.0
        %479 = vmatmul.mubr.f32.gmra.mrb[0].mxu0 %v377
        %v480 = vpop.f32.mrb[0].mxu0
        %v481 = vadd.f32 %v352, %v480
        %v482 = vpop.f32.mrb[0].mxu0
        %483 = vdwg.mxu0
        %vm484 = vcmask 261120
        %v486 = vsel %vm484, %v336, 0
        %488 = vmatprep.subr.mxu0 0.0
        %489 = vmatpush1.msra.mxu0 %v331
        %490 = vmatprep.subr.mxu0 0.0
        %491 = vmatpush1.msra.mxu0 %v332
        %492 = vmatprep.subr.mxu0 0.0
        %493 = vmatpush1.msra.mxu0 %v333
        %494 = vmatprep.subr.mxu0 0.0
        %495 = vmatpush1.msra.mxu0 %v334
        %496 = vmatprep.subr.mxu0 0.0
        %497 = vmatpush1.msra.mxu0 0.0
        %498 = vmatprep.subr.mxu0 0.0
        %499 = vmatpush1.msra.mxu0 0.0
        %500 = vmatprep.subr.mxu0 0.0
        %501 = vmatpush1.msra.mxu0 0.0
        %502 = vmatprep.subr.mxu0 0.0
        %503 = vmatpush1.msra.mxu0 0.0
        %504 = vmatprep.subr.mxu0 0.0
        %505 = vmatpush1.msra.mxu0 0.0
        %506 = vmatprep.subr.mxu0 0.0
        %507 = vmatpush1.msra.mxu0 0.0
        %508 = vmatprep.subr.mxu0 0.0
        %509 = vmatpush1.msra.mxu0 0.0
        %510 = vmatprep.subr.mxu0 0.0
        %511 = vmatpush1.msra.mxu0 0.0
        %512 = vmatprep.subr.mxu0 0.0
        %513 = vmatpush1.msra.mxu0 0.0
        %514 = vmatprep.subr.mxu0 0.0
        %515 = vmatpush1.msra.mxu0 0.0
        %516 = vmatprep.subr.mxu0 0.0
        %517 = vmatpush1.msra.mxu0 0.0
        %518 = vmatprep.subr.mxu0 0.0
        %519 = vmatpush1.msra.mxu0 0.0
        %520 = vmatprep.subr.mxu0 0.0
        %521 = vmatpush1.msra.mxu0 0.0
        %522 = vmatprep.subr.mxu0 0.0
        %523 = vmatpush1.msra.mxu0 0.0
        %524 = vmatprep.subr.mxu0 0.0
        %525 = vmatpush1.msra.mxu0 0.0
        %526 = vmatprep.subr.mxu0 0.0
        %527 = vmatpush1.msra.mxu0 0.0
        %528 = vmatprep.subr.mxu0 0.0
        %529 = vmatpush1.msra.mxu0 0.0
        %530 = vmatprep.subr.mxu0 0.0
        %531 = vmatpush1.msra.mxu0 0.0
        %532 = vmatprep.subr.mxu0 0.0
        %533 = vmatpush1.msra.mxu0 0.0
        %534 = vmatprep.subr.mxu0 0.0
        %535 = vmatpush1.msra.mxu0 0.0
        %536 = vmatprep.subr.mxu0 0.0
        %537 = vmatpush1.msra.mxu0 0.0
        %538 = vmatprep.subr.mxu0 0.0
        %539 = vmatpush1.msra.mxu0 0.0
        %540 = vmatprep.subr.mxu0 0.0
        %541 = vmatpush1.msra.mxu0 0.0
        %542 = vmatprep.subr.mxu0 0.0
        %543 = vmatpush1.msra.mxu0 0.0
        %544 = vmatprep.subr.mxu0 0.0
        %545 = vmatpush1.msra.mxu0 0.0
        %546 = vmatprep.subr.mxu0 0.0
        %547 = vmatpush1.msra.mxu0 0.0
        %548 = vmatprep.subr.mxu0 0.0
        %549 = vmatpush1.msra.mxu0 0.0
        %550 = vmatprep.subr.mxu0 0.0
        %551 = vmatpush1.msra.mxu0 0.0
        %552 = vmatprep.mubr.f32.mxu0 0.0
        %553 = vmatmul.mubr.f32.gmra.mrb[0].mxu0 %v486
        %v554 = vpop.f32.mrb[0].mxu0
        %v555 = vadd.f32 0.0, %v554
        %v556 = vpop.f32.mrb[0].mxu0
        %557 = vdwg.mxu0
        %v559 = vrot.slane %v555, 1
        %v560 = vrot.slane %v555, 2
        %v561 = vrot.slane %v555, 3
        %v562 = vrot.slane %v555, 4
        %v563 = vrot.slane %v555, 5
        %v564 = vrot.slane %v555, 6
        %v565 = vrot.slane %v555, 7
        %v574 = vadd.f32 %v446, %v555
        %v575 = vadd.f32 %v451, %v559
        %v576 = vadd.f32 %v456, %v560
        %v577 = vadd.f32 %v461, %v561
        %v578 = vadd.f32 %v466, %v562
        %v579 = vadd.f32 %v471, %v563
        %v580 = vadd.f32 %v476, %v564
        %v581 = vadd.f32 %v481, %v565
        %v582 = vxor.u32 %v574, 2147483648
        %v583 = vxor.u32 %v575, 2147483648
        %v584 = vxor.u32 %v576, 2147483648
        %v585 = vxor.u32 %v577, 2147483648
        %v586 = vxor.u32 %v578, 2147483648
        %v587 = vxor.u32 %v579, 2147483648
        %v588 = vxor.u32 %v580, 2147483648
        %v589 = vxor.u32 %v581, 2147483648
        %v590 = vmul.f32 %v582, 1.442695
        %v591 = vpow.pop %v590
        %v592 = vmul.f32 %v583, 1.442695
        %v593 = vpow.pop %v592
        %v594 = vmul.f32 %v584, 1.442695
        %v595 = vpow.pop %v594
        %v596 = vmul.f32 %v585, 1.442695
        %v597 = vpow.pop %v596
        %v598 = vmul.f32 %v586, 1.442695
        %v599 = vpow.pop %v598
        %v600 = vmul.f32 %v587, 1.442695
        %v601 = vpow.pop %v600
        %v602 = vmul.f32 %v588, 1.442695
        %v603 = vpow.pop %v602
        %v604 = vmul.f32 %v589, 1.442695
        %v605 = vpow.pop %v604
        %v606 = vadd.f32 %v591, 1.0
        %v607 = vadd.f32 %v593, 1.0
        %v608 = vadd.f32 %v595, 1.0
        %v609 = vadd.f32 %v597, 1.0
        %v610 = vadd.f32 %v599, 1.0
        %v611 = vadd.f32 %v601, 1.0
        %v612 = vadd.f32 %v603, 1.0
        %v613 = vadd.f32 %v605, 1.0
        %v614 = vrcp.pop %v606
        %v615 = vmul.f32 1.0, %v614
        %v616 = vrcp.pop %v607
        %v617 = vmul.f32 1.0, %v616
        %v618 = vrcp.pop %v608
        %v619 = vmul.f32 1.0, %v618
        %v620 = vrcp.pop %v609
        %v621 = vmul.f32 1.0, %v620
        %v622 = vrcp.pop %v610
        %v623 = vmul.f32 1.0, %v622
        %v624 = vrcp.pop %v611
        %v625 = vmul.f32 1.0, %v624
        %v626 = vrcp.pop %v612
        %v627 = vmul.f32 1.0, %v626
        %v628 = vrcp.pop %v613
        %v629 = vmul.f32 1.0, %v628
        %v630 = vmul.f32 %v615, 2.0
        %v631 = vmul.f32 %v617, 2.0
        %v632 = vmul.f32 %v619, 2.0
        %v633 = vmul.f32 %v621, 2.0
        %v634 = vmul.f32 %v623, 2.0
        %v635 = vmul.f32 %v625, 2.0
        %v636 = vmul.f32 %v627, 2.0
        %v637 = vmul.f32 %v629, 2.0
        %v638 = vsub.f32 %v630, 1.0
        %v639 = vsub.f32 %v631, 1.0
        %v640 = vsub.f32 %v632, 1.0
        %v641 = vsub.f32 %v633, 1.0
        %v642 = vsub.f32 %v634, 1.0
        %v643 = vsub.f32 %v635, 1.0
        %v644 = vsub.f32 %v636, 1.0
        %v645 = vsub.f32 %v637, 1.0
        %v647 = vrot.slane %v337, 1
        %v648 = vrot.slane %v337, 2
        %v649 = vrot.slane %v337, 3
        %v650 = vrot.slane %v337, 4
        %v651 = vrot.slane %v337, 5
        %v652 = vrot.slane %v337, 6
        %v653 = vrot.slane %v337, 7
        %654 = vrot.lane.b32.xlu0 %v337, 32
        %v655 = vpop.permute.xlu0 %654
        %656 = vrot.lane.b32.xlu0 %v647, 32
        %v657 = vpop.permute.xlu0 %656
        %658 = vrot.lane.b32.xlu0 %v648, 32
        %v659 = vpop.permute.xlu0 %658
        %660 = vrot.lane.b32.xlu0 %v649, 32
        %v661 = vpop.permute.xlu0 %660
        %662 = vrot.lane.b32.xlu0 %v650, 32
        %v663 = vpop.permute.xlu0 %662
        %664 = vrot.lane.b32.xlu0 %v651, 32
        %v665 = vpop.permute.xlu0 %664
        %666 = vrot.lane.b32.xlu0 %v652, 32
        %v667 = vpop.permute.xlu0 %666
        %668 = vrot.lane.b32.xlu0 %v653, 32
        %v669 = vpop.permute.xlu0 %668
        %v678 = vmul.f32 %v615, %v655
        %v679 = vmul.f32 %v617, %v657
        %v680 = vmul.f32 %v619, %v659
        %v681 = vmul.f32 %v621, %v661
        %v682 = vmul.f32 %v623, %v663
        %v683 = vmul.f32 %v625, %v665
        %v684 = vmul.f32 %v627, %v667
        %v685 = vmul.f32 %v629, %v669
        %694 = vrot.lane.b32.xlu0 %v638, 64
        %v695 = vpop.permute.xlu0 %694
        %696 = vrot.lane.b32.xlu0 %v639, 64
        %v697 = vpop.permute.xlu0 %696
        %698 = vrot.lane.b32.xlu0 %v640, 64
        %v699 = vpop.permute.xlu0 %698
        %700 = vrot.lane.b32.xlu0 %v641, 64
        %v701 = vpop.permute.xlu0 %700
        %702 = vrot.lane.b32.xlu0 %v642, 64
        %v703 = vpop.permute.xlu0 %702
        %704 = vrot.lane.b32.xlu0 %v643, 64
        %v705 = vpop.permute.xlu0 %704
        %706 = vrot.lane.b32.xlu0 %v644, 64
        %v707 = vpop.permute.xlu0 %706
        %708 = vrot.lane.b32.xlu0 %v645, 64
        %v709 = vpop.permute.xlu0 %708
        %v718 = vmul.f32 %v615, %v695
        %v719 = vmul.f32 %v617, %v697
        %v720 = vmul.f32 %v619, %v699
        %v721 = vmul.f32 %v621, %v701
        %v722 = vmul.f32 %v623, %v703
        %v723 = vmul.f32 %v625, %v705
        %v724 = vmul.f32 %v627, %v707
        %v725 = vmul.f32 %v629, %v709
        %734 = vrot.lane.b32.xlu0 %v718, 32
        %v735 = vpop.permute.xlu0 %734
        %736 = vrot.lane.b32.xlu0 %v719, 32
        %v737 = vpop.permute.xlu0 %736
        %738 = vrot.lane.b32.xlu0 %v720, 32
        %v739 = vpop.permute.xlu0 %738
        %740 = vrot.lane.b32.xlu0 %v721, 32
        %v741 = vpop.permute.xlu0 %740
        %742 = vrot.lane.b32.xlu0 %v722, 32
        %v743 = vpop.permute.xlu0 %742
        %744 = vrot.lane.b32.xlu0 %v723, 32
        %v745 = vpop.permute.xlu0 %744
        %746 = vrot.lane.b32.xlu0 %v724, 32
        %v747 = vpop.permute.xlu0 %746
        %748 = vrot.lane.b32.xlu0 %v725, 32
        %v749 = vpop.permute.xlu0 %748
        %v758 = vadd.f32 %v678, %v735
        %v759 = vadd.f32 %v679, %v737
        %v760 = vadd.f32 %v680, %v739
        %v761 = vadd.f32 %v681, %v741
        %v762 = vadd.f32 %v682, %v743
        %v763 = vadd.f32 %v683, %v745
        %v764 = vadd.f32 %v684, %v747
        %v765 = vadd.f32 %v685, %v749
        %v766 = vtanh.pop %v758
        %v767 = vtanh.pop %v759
        %v768 = vtanh.pop %v760
        %v769 = vtanh.pop %v761
        %v770 = vtanh.pop %v762
        %v771 = vtanh.pop %v763
        %v772 = vtanh.pop %v764
        %v773 = vtanh.pop %v765
        %782 = vrot.lane.b32.xlu0 %v766, 64
        %v783 = vpop.permute.xlu0 %782
        %784 = vrot.lane.b32.xlu0 %v767, 64
        %v785 = vpop.permute.xlu0 %784
        %786 = vrot.lane.b32.xlu0 %v768, 64
        %v787 = vpop.permute.xlu0 %786
        %788 = vrot.lane.b32.xlu0 %v769, 64
        %v789 = vpop.permute.xlu0 %788
        %790 = vrot.lane.b32.xlu0 %v770, 64
        %v791 = vpop.permute.xlu0 %790
        %792 = vrot.lane.b32.xlu0 %v771, 64
        %v793 = vpop.permute.xlu0 %792
        %794 = vrot.lane.b32.xlu0 %v772, 64
        %v795 = vpop.permute.xlu0 %794
        %796 = vrot.lane.b32.xlu0 %v773, 64
        %v797 = vpop.permute.xlu0 %796
        %v806 = vmul.f32 %v615, %v783
        %v807 = vmul.f32 %v617, %v785
        %v808 = vmul.f32 %v619, %v787
        %v809 = vmul.f32 %v621, %v789
        %v810 = vmul.f32 %v623, %v791
        %v811 = vmul.f32 %v625, %v793
        %v812 = vmul.f32 %v627, %v795
        %v813 = vmul.f32 %v629, %v797
        %v822 = vrot.slane %v807, 7
        %vm823 = vcmask 1041409
        %v824 = vsel %vm823, %v822, %v806
        %v825 = vrot.slane %v808, 6
        %vm826 = vcmask 1042434
        %v827 = vsel %vm826, %v825, %v824
        %v828 = vrot.slane %v809, 5
        %vm829 = vcmask 1043459
        %v830 = vsel %vm829, %v828, %v827
        %v831 = vrot.slane %v810, 4
        %vm832 = vcmask 1044484
        %v833 = vsel %vm832, %v831, %v830
        %v834 = vrot.slane %v811, 3
        %vm835 = vcmask 1045509
        %v836 = vsel %vm835, %v834, %v833
        %v837 = vrot.slane %v812, 2
        %vm838 = vcmask 1046534
        %v839 = vsel %vm838, %v837, %v836
        %v840 = vrot.slane %v813, 1
        %vm841 = vcmask 1047559
        %v842 = vsel %vm841, %v840, %v839
        %843 = vrot.lane.b32.xlu0 %v842, 32
        %v844 = vpop.permute.xlu0 %843
        %v845 = vsel %vm484, %v844, 0
        %847 = vmatprep.subr.mxu0 0.0
        %848 = vmatpush1.msra.mxu0 %v331
        %849 = vmatprep.subr.mxu0 0.0
        %850 = vmatpush1.msra.mxu0 %v332
        %851 = vmatprep.subr.mxu0 0.0
        %852 = vmatpush1.msra.mxu0 %v333
        %853 = vmatprep.subr.mxu0 0.0
        %854 = vmatpush1.msra.mxu0 %v334
        %855 = vmatprep.subr.mxu0 0.0
        %856 = vmatpush1.msra.mxu0 0.0
        %857 = vmatprep.subr.mxu0 0.0
        %858 = vmatpush1.msra.mxu0 0.0
        %859 = vmatprep.subr.mxu0 0.0
        %860 = vmatpush1.msra.mxu0 0.0
        %861 = vmatprep.subr.mxu0 0.0
        %862 = vmatpush1.msra.mxu0 0.0
        %863 = vmatprep.subr.mxu0 0.0
        %864 = vmatpush1.msra.mxu0 0.0
        %865 = vmatprep.subr.mxu0 0.0
        %866 = vmatpush1.msra.mxu0 0.0
        %867 = vmatprep.subr.mxu0 0.0
        %868 = vmatpush1.msra.mxu0 0.0
        %869 = vmatprep.subr.mxu0 0.0
        %870 = vmatpush1.msra.mxu0 0.0
        %871 = vmatprep.subr.mxu0 0.0
        %872 = vmatpush1.msra.mxu0 0.0
        %873 = vmatprep.subr.mxu0 0.0
        %874 = vmatpush1.msra.mxu0 0.0
        %875 = vmatprep.subr.mxu0 0.0
        %876 = vmatpush1.msra.mxu0 0.0
        %877 = vmatprep.subr.mxu0 0.0
        %878 = vmatpush1.msra.mxu0 0.0
        %879 = vmatprep.subr.mxu0 0.0
        %880 = vmatpush1.msra.mxu0 0.0
        %881 = vmatprep.subr.mxu0 0.0
        %882 = vmatpush1.msra.mxu0 0.0
        %883 = vmatprep.subr.mxu0 0.0
        %884 = vmatpush1.msra.mxu0 0.0
        %885 = vmatprep.subr.mxu0 0.0
        %886 = vmatpush1.msra.mxu0 0.0
        %887 = vmatprep.subr.mxu0 0.0
        %888 = vmatpush1.msra.mxu0 0.0
        %889 = vmatprep.subr.mxu0 0.0
        %890 = vmatpush1.msra.mxu0 0.0
        %891 = vmatprep.subr.mxu0 0.0
        %892 = vmatpush1.msra.mxu0 0.0
        %893 = vmatprep.subr.mxu0 0.0
        %894 = vmatpush1.msra.mxu0 0.0
        %895 = vmatprep.subr.mxu0 0.0
        %896 = vmatpush1.msra.mxu0 0.0
        %897 = vmatprep.subr.mxu0 0.0
        %898 = vmatpush1.msra.mxu0 0.0
        %899 = vmatprep.subr.mxu0 0.0
        %900 = vmatpush1.msra.mxu0 0.0
        %901 = vmatprep.subr.mxu0 0.0
        %902 = vmatpush1.msra.mxu0 0.0
        %903 = vmatprep.subr.mxu0 0.0
        %904 = vmatpush1.msra.mxu0 0.0
        %905 = vmatprep.subr.mxu0 0.0
        %906 = vmatpush1.msra.mxu0 0.0
        %907 = vmatprep.subr.mxu0 0.0
        %908 = vmatpush1.msra.mxu0 0.0
        %909 = vmatprep.subr.mxu0 0.0
        %910 = vmatpush1.msra.mxu0 0.0
        %911 = vmatprep.mubr.f32.mxu0 0.0
        %912 = vmatmul.mubr.f32.gmra.mrb[0].mxu0 %v845
        %v913 = vpop.f32.mrb[0].mxu0
        %v914 = vadd.f32 0.0, %v913
        %v915 = vpop.f32.mrb[0].mxu0
        %916 = vdwg.mxu0
        %v918 = vrot.slane %v914, 7
        %v919 = vrot.slane %v914, 1
        %v920 = vrot.slane %v914, 2
        %v921 = vrot.slane %v914, 3
        %v922 = vrot.slane %v914, 4
        %v923 = vrot.slane %v914, 5
        %v924 = vrot.slane %v914, 6
        %v933 = vadd.f32 %v446, %v918
        %v934 = vadd.f32 %v451, %v914
        %v935 = vadd.f32 %v456, %v919
        %v936 = vadd.f32 %v461, %v920
        %v937 = vadd.f32 %v466, %v921
        %v938 = vadd.f32 %v471, %v922
        %v939 = vadd.f32 %v476, %v923
        %v940 = vadd.f32 %v481, %v924
        %v941 = vxor.u32 %v933, 2147483648
        %v942 = vxor.u32 %v934, 2147483648
        %v943 = vxor.u32 %v935, 2147483648
        %v944 = vxor.u32 %v936, 2147483648
        %v945 = vxor.u32 %v937, 2147483648
        %v946 = vxor.u32 %v938, 2147483648
        %v947 = vxor.u32 %v939, 2147483648
        %v948 = vxor.u32 %v940, 2147483648
        %v949 = vmul.f32 %v941, 1.442695
        %v950 = vpow.pop %v949
        %v951 = vmul.f32 %v942, 1.442695
        %v952 = vpow.pop %v951
        %v953 = vmul.f32 %v943, 1.442695
        %v954 = vpow.pop %v953
        %v955 = vmul.f32 %v944, 1.442695
        %v956 = vpow.pop %v955
        %v957 = vmul.f32 %v945, 1.442695
        %v958 = vpow.pop %v957
        %v959 = vmul.f32 %v946, 1.442695
        %v960 = vpow.pop %v959
        %v961 = vmul.f32 %v947, 1.442695
        %v962 = vpow.pop %v961
        %v963 = vmul.f32 %v948, 1.442695
        %v964 = vpow.pop %v963
        %v965 = vadd.f32 %v950, 1.0
        %v966 = vadd.f32 %v952, 1.0
        %v967 = vadd.f32 %v954, 1.0
        %v968 = vadd.f32 %v956, 1.0
        %v969 = vadd.f32 %v958, 1.0
        %v970 = vadd.f32 %v960, 1.0
        %v971 = vadd.f32 %v962, 1.0
        %v972 = vadd.f32 %v964, 1.0
        %v973 = vrcp.pop %v965
        %v974 = vmul.f32 1.0, %v973
        %v975 = vrcp.pop %v966
        %v976 = vmul.f32 1.0, %v975
        %v977 = vrcp.pop %v967
        %v978 = vmul.f32 1.0, %v977
        %v979 = vrcp.pop %v968
        %v980 = vmul.f32 1.0, %v979
        %v981 = vrcp.pop %v969
        %v982 = vmul.f32 1.0, %v981
        %v983 = vrcp.pop %v970
        %v984 = vmul.f32 1.0, %v983
        %v985 = vrcp.pop %v971
        %v986 = vmul.f32 1.0, %v985
        %v987 = vrcp.pop %v972
        %v988 = vmul.f32 1.0, %v987
        %v989 = vmul.f32 %v974, 2.0
        %v990 = vmul.f32 %v976, 2.0
        %v991 = vmul.f32 %v978, 2.0
        %v992 = vmul.f32 %v980, 2.0
        %v993 = vmul.f32 %v982, 2.0
        %v994 = vmul.f32 %v984, 2.0
        %v995 = vmul.f32 %v986, 2.0
        %v996 = vmul.f32 %v988, 2.0
        %v997 = vsub.f32 %v989, 1.0
        %v998 = vsub.f32 %v990, 1.0
        %v999 = vsub.f32 %v991, 1.0
        %v1000 = vsub.f32 %v992, 1.0
        %v1001 = vsub.f32 %v993, 1.0
        %v1002 = vsub.f32 %v994, 1.0
        %v1003 = vsub.f32 %v995, 1.0
        %v1004 = vsub.f32 %v996, 1.0
        %v1013 = vrot.slane %v758, 7
        %v1014 = vrot.slane %v759, 7
        %v1015 = vrot.slane %v760, 7
        %v1016 = vrot.slane %v761, 7
        %v1017 = vrot.slane %v762, 7
        %v1018 = vrot.slane %v763, 7
        %v1019 = vrot.slane %v764, 7
        %v1020 = vrot.slane %v765, 7
        %v1029 = vmul.f32 %v974, %v1013
        %v1030 = vmul.f32 %v976, %v1014
        %v1031 = vmul.f32 %v978, %v1015
        %v1032 = vmul.f32 %v980, %v1016
        %v1033 = vmul.f32 %v982, %v1017
        %v1034 = vmul.f32 %v984, %v1018
        %v1035 = vmul.f32 %v986, %v1019
        %v1036 = vmul.f32 %v988, %v1020
        %1045 = vrot.lane.b32.xlu0 %v997, 64
        %v1046 = vpop.permute.xlu0 %1045
        %1047 = vrot.lane.b32.xlu0 %v998, 64
        %v1048 = vpop.permute.xlu0 %1047
        %1049 = vrot.lane.b32.xlu0 %v999, 64
        %v1050 = vpop.permute.xlu0 %1049
        %1051 = vrot.lane.b32.xlu0 %v1000, 64
        %v1052 = vpop.permute.xlu0 %1051
        %1053 = vrot.lane.b32.xlu0 %v1001, 64
        %v1054 = vpop.permute.xlu0 %1053
        %1055 = vrot.lane.b32.xlu0 %v1002, 64
        %v1056 = vpop.permute.xlu0 %1055
        %1057 = vrot.lane.b32.xlu0 %v1003, 64
        %v1058 = vpop.permute.xlu0 %1057
        %1059 = vrot.lane.b32.xlu0 %v1004, 64
        %v1060 = vpop.permute.xlu0 %1059
        %v1069 = vmul.f32 %v974, %v1046
        %v1070 = vmul.f32 %v976, %v1048
        %v1071 = vmul.f32 %v978, %v1050
        %v1072 = vmul.f32 %v980, %v1052
        %v1073 = vmul.f32 %v982, %v1054
        %v1074 = vmul.f32 %v984, %v1056
        %v1075 = vmul.f32 %v986, %v1058
        %v1076 = vmul.f32 %v988, %v1060
        %1085 = vrot.lane.b32.xlu0 %v1069, 32
        %v1086 = vpop.permute.xlu0 %1085
        %1087 = vrot.lane.b32.xlu0 %v1070, 32
        %v1088 = vpop.permute.xlu0 %1087
        %1089 = vrot.lane.b32.xlu0 %v1071, 32
        %v1090 = vpop.permute.xlu0 %1089
        %1091 = vrot.lane.b32.xlu0 %v1072, 32
        %v1092 = vpop.permute.xlu0 %1091
        %1093 = vrot.lane.b32.xlu0 %v1073, 32
        %v1094 = vpop.permute.xlu0 %1093
        %1095 = vrot.lane.b32.xlu0 %v1074, 32
        %v1096 = vpop.permute.xlu0 %1095
        %1097 = vrot.lane.b32.xlu0 %v1075, 32
        %v1098 = vpop.permute.xlu0 %1097
        %1099 = vrot.lane.b32.xlu0 %v1076, 32
        %v1100 = vpop.permute.xlu0 %1099
        %v1109 = vadd.f32 %v1029, %v1086
        %v1110 = vadd.f32 %v1030, %v1088
        %v1111 = vadd.f32 %v1031, %v1090
        %v1112 = vadd.f32 %v1032, %v1092
        %v1113 = vadd.f32 %v1033, %v1094
        %v1114 = vadd.f32 %v1034, %v1096
        %v1115 = vadd.f32 %v1035, %v1098
        %v1116 = vadd.f32 %v1036, %v1100
        %v1117 = vtanh.pop %v1109
        %v1118 = vtanh.pop %v1110
        %v1119 = vtanh.pop %v1111
        %v1120 = vtanh.pop %v1112
        %v1121 = vtanh.pop %v1113
        %v1122 = vtanh.pop %v1114
        %v1123 = vtanh.pop %v1115
        %v1124 = vtanh.pop %v1116
        %1133 = vrot.lane.b32.xlu0 %v1117, 64
        %v1134 = vpop.permute.xlu0 %1133
        %1135 = vrot.lane.b32.xlu0 %v1118, 64
        %v1136 = vpop.permute.xlu0 %1135
        %1137 = vrot.lane.b32.xlu0 %v1119, 64
        %v1138 = vpop.permute.xlu0 %1137
        %1139 = vrot.lane.b32.xlu0 %v1120, 64
        %v1140 = vpop.permute.xlu0 %1139
        %1141 = vrot.lane.b32.xlu0 %v1121, 64
        %v1142 = vpop.permute.xlu0 %1141
        %1143 = vrot.lane.b32.xlu0 %v1122, 64
        %v1144 = vpop.permute.xlu0 %1143
        %1145 = vrot.lane.b32.xlu0 %v1123, 64
        %v1146 = vpop.permute.xlu0 %1145
        %1147 = vrot.lane.b32.xlu0 %v1124, 64
        %v1148 = vpop.permute.xlu0 %1147
        %v1157 = vmul.f32 %v974, %v1134
        %v1158 = vmul.f32 %v976, %v1136
        %v1159 = vmul.f32 %v978, %v1138
        %v1160 = vmul.f32 %v980, %v1140
        %v1161 = vmul.f32 %v982, %v1142
        %v1162 = vmul.f32 %v984, %v1144
        %v1163 = vmul.f32 %v986, %v1146
        %v1164 = vmul.f32 %v988, %v1148
        %v1173 = vrot.slane %v1157, 1
        %v1174 = vsel %vm823, %v1158, %v1173
        %v1175 = vrot.slane %v1159, 7
        %v1176 = vsel %vm826, %v1175, %v1174
        %v1177 = vrot.slane %v1160, 6
        %v1178 = vsel %vm829, %v1177, %v1176
        %v1179 = vrot.slane %v1161, 5
        %v1180 = vsel %vm832, %v1179, %v1178
        %v1181 = vrot.slane %v1162, 4
        %v1182 = vsel %vm835, %v1181, %v1180
        %v1183 = vrot.slane %v1163, 3
        %v1184 = vsel %vm838, %v1183, %v1182
        %v1185 = vrot.slane %v1164, 2
        %v1186 = vsel %vm841, %v1185, %v1184
        %1187 = vrot.lane.b32.xlu0 %v1186, 32
        %v1188 = vpop.permute.xlu0 %1187
        %v1189 = vsel %vm484, %v1188, 0
        %1191 = vmatprep.subr.mxu0 0.0
        %1192 = vmatpush1.msra.mxu0 %v331
        %1193 = vmatprep.subr.mxu0 0.0
        %1194 = vmatpush1.msra.mxu0 %v332
        %1195 = vmatprep.subr.mxu0 0.0
        %1196 = vmatpush1.msra.mxu0 %v333
        %1197 = vmatprep.subr.mxu0 0.0
        %1198 = vmatpush1.msra.mxu0 %v334
        %1199 = vmatprep.subr.mxu0 0.0
        %1200 = vmatpush1.msra.mxu0 0.0
        %1201 = vmatprep.subr.mxu0 0.0
        %1202 = vmatpush1.msra.mxu0 0.0
        %1203 = vmatprep.subr.mxu0 0.0
        %1204 = vmatpush1.msra.mxu0 0.0
        %1205 = vmatprep.subr.mxu0 0.0
        %1206 = vmatpush1.msra.mxu0 0.0
        %1207 = vmatprep.subr.mxu0 0.0
        %1208 = vmatpush1.msra.mxu0 0.0
        %1209 = vmatprep.subr.mxu0 0.0
        %1210 = vmatpush1.msra.mxu0 0.0
        %1211 = vmatprep.subr.mxu0 0.0
        %1212 = vmatpush1.msra.mxu0 0.0
        %1213 = vmatprep.subr.mxu0 0.0
        %1214 = vmatpush1.msra.mxu0 0.0
        %1215 = vmatprep.subr.mxu0 0.0
        %1216 = vmatpush1.msra.mxu0 0.0
        %1217 = vmatprep.subr.mxu0 0.0
        %1218 = vmatpush1.msra.mxu0 0.0
        %1219 = vmatprep.subr.mxu0 0.0
        %1220 = vmatpush1.msra.mxu0 0.0
        %1221 = vmatprep.subr.mxu0 0.0
        %1222 = vmatpush1.msra.mxu0 0.0
        %1223 = vmatprep.subr.mxu0 0.0
        %1224 = vmatpush1.msra.mxu0 0.0
        %1225 = vmatprep.subr.mxu0 0.0
        %1226 = vmatpush1.msra.mxu0 0.0
        %1227 = vmatprep.subr.mxu0 0.0
        %1228 = vmatpush1.msra.mxu0 0.0
        %1229 = vmatprep.subr.mxu0 0.0
        %1230 = vmatpush1.msra.mxu0 0.0
        %1231 = vmatprep.subr.mxu0 0.0
        %1232 = vmatpush1.msra.mxu0 0.0
        %1233 = vmatprep.subr.mxu0 0.0
        %1234 = vmatpush1.msra.mxu0 0.0
        %1235 = vmatprep.subr.mxu0 0.0
        %1236 = vmatpush1.msra.mxu0 0.0
        %1237 = vmatprep.subr.mxu0 0.0
        %1238 = vmatpush1.msra.mxu0 0.0
        %1239 = vmatprep.subr.mxu0 0.0
        %1240 = vmatpush1.msra.mxu0 0.0
        %1241 = vmatprep.subr.mxu0 0.0
        %1242 = vmatpush1.msra.mxu0 0.0
        %1243 = vmatprep.subr.mxu0 0.0
        %1244 = vmatpush1.msra.mxu0 0.0
        %1245 = vmatprep.subr.mxu0 0.0
        %1246 = vmatpush1.msra.mxu0 0.0
        %1247 = vmatprep.subr.mxu0 0.0
        %1248 = vmatpush1.msra.mxu0 0.0
        %1249 = vmatprep.subr.mxu0 0.0
        %1250 = vmatpush1.msra.mxu0 0.0
        %1251 = vmatprep.subr.mxu0 0.0
        %1252 = vmatpush1.msra.mxu0 0.0
        %1253 = vmatprep.subr.mxu0 0.0
        %1254 = vmatpush1.msra.mxu0 0.0
        %1255 = vmatprep.mubr.f32.mxu0 0.0
        %1256 = vmatmul.mubr.f32.gmra.mrb[0].mxu0 %v1189
        %v1257 = vpop.f32.mrb[0].mxu0
        %v1258 = vadd.f32 0.0, %v1257
        %v1259 = vpop.f32.mrb[0].mxu0
        %1260 = vdwg.mxu0
        %v1262 = vrot.slane %v1258, 6
        %v1263 = vrot.slane %v1258, 7
        %v1264 = vrot.slane %v1258, 1
        %v1265 = vrot.slane %v1258, 2
        %v1266 = vrot.slane %v1258, 3
        %v1267 = vrot.slane %v1258, 4
        %v1268 = vrot.slane %v1258, 5
        %v1277 = vadd.f32 %v446, %v1262
        %v1278 = vadd.f32 %v451, %v1263
        %v1279 = vadd.f32 %v456, %v1258
        %v1280 = vadd.f32 %v461, %v1264
        %v1281 = vadd.f32 %v466, %v1265
        %v1282 = vadd.f32 %v471, %v1266
        %v1283 = vadd.f32 %v476, %v1267
        %v1284 = vadd.f32 %v481, %v1268
        %v1285 = vxor.u32 %v1277, 2147483648
        %v1286 = vxor.u32 %v1278, 2147483648
        %v1287 = vxor.u32 %v1279, 2147483648
        %v1288 = vxor.u32 %v1280, 2147483648
        %v1289 = vxor.u32 %v1281, 2147483648
        %v1290 = vxor.u32 %v1282, 2147483648
        %v1291 = vxor.u32 %v1283, 2147483648
        %v1292 = vxor.u32 %v1284, 2147483648
        %v1293 = vmul.f32 %v1285, 1.442695
        %v1294 = vpow.pop %v1293
        %v1295 = vmul.f32 %v1286, 1.442695
        %v1296 = vpow.pop %v1295
        %v1297 = vmul.f32 %v1287, 1.442695
        %v1298 = vpow.pop %v1297
        %v1299 = vmul.f32 %v1288, 1.442695
        %v1300 = vpow.pop %v1299
        %v1301 = vmul.f32 %v1289, 1.442695
        %v1302 = vpow.pop %v1301
        %v1303 = vmul.f32 %v1290, 1.442695
        %v1304 = vpow.pop %v1303
        %v1305 = vmul.f32 %v1291, 1.442695
        %v1306 = vpow.pop %v1305
        %v1307 = vmul.f32 %v1292, 1.442695
        %v1308 = vpow.pop %v1307
        %v1309 = vadd.f32 %v1294, 1.0
        %v1310 = vadd.f32 %v1296, 1.0
        %v1311 = vadd.f32 %v1298, 1.0
        %v1312 = vadd.f32 %v1300, 1.0
        %v1313 = vadd.f32 %v1302, 1.0
        %v1314 = vadd.f32 %v1304, 1.0
        %v1315 = vadd.f32 %v1306, 1.0
        %v1316 = vadd.f32 %v1308, 1.0
        %v1317 = vrcp.pop %v1309
        %v1318 = vmul.f32 1.0, %v1317
        %v1319 = vrcp.pop %v1310
        %v1320 = vmul.f32 1.0, %v1319
        %v1321 = vrcp.pop %v1311
        %v1322 = vmul.f32 1.0, %v1321
        %v1323 = vrcp.pop %v1312
        %v1324 = vmul.f32 1.0, %v1323
        %v1325 = vrcp.pop %v1313
        %v1326 = vmul.f32 1.0, %v1325
        %v1327 = vrcp.pop %v1314
        %v1328 = vmul.f32 1.0, %v1327
        %v1329 = vrcp.pop %v1315
        %v1330 = vmul.f32 1.0, %v1329
        %v1331 = vrcp.pop %v1316
        %v1332 = vmul.f32 1.0, %v1331
        %v1333 = vmul.f32 %v1318, 2.0
        %v1334 = vmul.f32 %v1320, 2.0
        %v1335 = vmul.f32 %v1322, 2.0
        %v1336 = vmul.f32 %v1324, 2.0
        %v1337 = vmul.f32 %v1326, 2.0
        %v1338 = vmul.f32 %v1328, 2.0
        %v1339 = vmul.f32 %v1330, 2.0
        %v1340 = vmul.f32 %v1332, 2.0
        %v1341 = vsub.f32 %v1333, 1.0
        %v1342 = vsub.f32 %v1334, 1.0
        %v1343 = vsub.f32 %v1335, 1.0
        %v1344 = vsub.f32 %v1336, 1.0
        %v1345 = vsub.f32 %v1337, 1.0
        %v1346 = vsub.f32 %v1338, 1.0
        %v1347 = vsub.f32 %v1339, 1.0
        %v1348 = vsub.f32 %v1340, 1.0
        %v1357 = vrot.slane %v1109, 7
        %v1358 = vrot.slane %v1110, 7
        %v1359 = vrot.slane %v1111, 7
        %v1360 = vrot.slane %v1112, 7
        %v1361 = vrot.slane %v1113, 7
        %v1362 = vrot.slane %v1114, 7
        %v1363 = vrot.slane %v1115, 7
        %v1364 = vrot.slane %v1116, 7
        %v1373 = vmul.f32 %v1318, %v1357
        %v1374 = vmul.f32 %v1320, %v1358
        %v1375 = vmul.f32 %v1322, %v1359
        %v1376 = vmul.f32 %v1324, %v1360
        %v1377 = vmul.f32 %v1326, %v1361
        %v1378 = vmul.f32 %v1328, %v1362
        %v1379 = vmul.f32 %v1330, %v1363
        %v1380 = vmul.f32 %v1332, %v1364
        %1389 = vrot.lane.b32.xlu0 %v1341, 64
        %v1390 = vpop.permute.xlu0 %1389
        %1391 = vrot.lane.b32.xlu0 %v1342, 64
        %v1392 = vpop.permute.xlu0 %1391
        %1393 = vrot.lane.b32.xlu0 %v1343, 64
        %v1394 = vpop.permute.xlu0 %1393
        %1395 = vrot.lane.b32.xlu0 %v1344, 64
        %v1396 = vpop.permute.xlu0 %1395
        %1397 = vrot.lane.b32.xlu0 %v1345, 64
        %v1398 = vpop.permute.xlu0 %1397
        %1399 = vrot.lane.b32.xlu0 %v1346, 64
        %v1400 = vpop.permute.xlu0 %1399
        %1401 = vrot.lane.b32.xlu0 %v1347, 64
        %v1402 = vpop.permute.xlu0 %1401
        %1403 = vrot.lane.b32.xlu0 %v1348, 64
        %v1404 = vpop.permute.xlu0 %1403
        %v1413 = vmul.f32 %v1318, %v1390
        %v1414 = vmul.f32 %v1320, %v1392
        %v1415 = vmul.f32 %v1322, %v1394
        %v1416 = vmul.f32 %v1324, %v1396
        %v1417 = vmul.f32 %v1326, %v1398
        %v1418 = vmul.f32 %v1328, %v1400
        %v1419 = vmul.f32 %v1330, %v1402
        %v1420 = vmul.f32 %v1332, %v1404
        %1429 = vrot.lane.b32.xlu0 %v1413, 32
        %v1430 = vpop.permute.xlu0 %1429
        %1431 = vrot.lane.b32.xlu0 %v1414, 32
        %v1432 = vpop.permute.xlu0 %1431
        %1433 = vrot.lane.b32.xlu0 %v1415, 32
        %v1434 = vpop.permute.xlu0 %1433
        %1435 = vrot.lane.b32.xlu0 %v1416, 32
        %v1436 = vpop.permute.xlu0 %1435
        %1437 = vrot.lane.b32.xlu0 %v1417, 32
        %v1438 = vpop.permute.xlu0 %1437
        %1439 = vrot.lane.b32.xlu0 %v1418, 32
        %v1440 = vpop.permute.xlu0 %1439
        %1441 = vrot.lane.b32.xlu0 %v1419, 32
        %v1442 = vpop.permute.xlu0 %1441
        %1443 = vrot.lane.b32.xlu0 %v1420, 32
        %v1444 = vpop.permute.xlu0 %1443
        %v1453 = vadd.f32 %v1373, %v1430
        %v1454 = vadd.f32 %v1374, %v1432
        %v1455 = vadd.f32 %v1375, %v1434
        %v1456 = vadd.f32 %v1376, %v1436
        %v1457 = vadd.f32 %v1377, %v1438
        %v1458 = vadd.f32 %v1378, %v1440
        %v1459 = vadd.f32 %v1379, %v1442
        %v1460 = vadd.f32 %v1380, %v1444
        %v1461 = vtanh.pop %v1453
        %v1462 = vtanh.pop %v1454
        %v1463 = vtanh.pop %v1455
        %v1464 = vtanh.pop %v1456
        %v1465 = vtanh.pop %v1457
        %v1466 = vtanh.pop %v1458
        %v1467 = vtanh.pop %v1459
        %v1468 = vtanh.pop %v1460
        %1477 = vrot.lane.b32.xlu0 %v1461, 64
        %v1478 = vpop.permute.xlu0 %1477
        %1479 = vrot.lane.b32.xlu0 %v1462, 64
        %v1480 = vpop.permute.xlu0 %1479
        %1481 = vrot.lane.b32.xlu0 %v1463, 64
        %v1482 = vpop.permute.xlu0 %1481
        %1483 = vrot.lane.b32.xlu0 %v1464, 64
        %v1484 = vpop.permute.xlu0 %1483
        %1485 = vrot.lane.b32.xlu0 %v1465, 64
        %v1486 = vpop.permute.xlu0 %1485
        %1487 = vrot.lane.b32.xlu0 %v1466, 64
        %v1488 = vpop.permute.xlu0 %1487
        %1489 = vrot.lane.b32.xlu0 %v1467, 64
        %v1490 = vpop.permute.xlu0 %1489
        %1491 = vrot.lane.b32.xlu0 %v1468, 64
        %v1492 = vpop.permute.xlu0 %1491
        %v1501 = vmul.f32 %v1318, %v1478
        %v1502 = vmul.f32 %v1320, %v1480
        %v1503 = vmul.f32 %v1322, %v1482
        %v1504 = vmul.f32 %v1324, %v1484
        %v1505 = vmul.f32 %v1326, %v1486
        %v1506 = vmul.f32 %v1328, %v1488
        %v1507 = vmul.f32 %v1330, %v1490
        %v1508 = vmul.f32 %v1332, %v1492
        %v1517 = vrot.slane %v1501, 2
        %v1518 = vrot.slane %v1502, 1
        %v1519 = vsel %vm823, %v1518, %v1517
        %v1520 = vsel %vm826, %v1503, %v1519
        %v1521 = vrot.slane %v1504, 7
        %v1522 = vsel %vm829, %v1521, %v1520
        %v1523 = vrot.slane %v1505, 6
        %v1524 = vsel %vm832, %v1523, %v1522
        %v1525 = vrot.slane %v1506, 5
        %v1526 = vsel %vm835, %v1525, %v1524
        %v1527 = vrot.slane %v1507, 4
        %v1528 = vsel %vm838, %v1527, %v1526
        %v1529 = vrot.slane %v1508, 3
        %v1530 = vsel %vm841, %v1529, %v1528
        %1531 = vrot.lane.b32.xlu0 %v1530, 32
        %v1532 = vpop.permute.xlu0 %1531
        %v1533 = vsel %vm484, %v1532, 0
        %1535 = vmatprep.subr.mxu0 0.0
        %1536 = vmatpush1.msra.mxu0 %v331
        %1537 = vmatprep.subr.mxu0 0.0
        %1538 = vmatpush1.msra.mxu0 %v332
        %1539 = vmatprep.subr.mxu0 0.0
        %1540 = vmatpush1.msra.mxu0 %v333
        %1541 = vmatprep.subr.mxu0 0.0
        %1542 = vmatpush1.msra.mxu0 %v334
        %1543 = vmatprep.subr.mxu0 0.0
        %1544 = vmatpush1.msra.mxu0 0.0
        %1545 = vmatprep.subr.mxu0 0.0
        %1546 = vmatpush1.msra.mxu0 0.0
        %1547 = vmatprep.subr.mxu0 0.0
        %1548 = vmatpush1.msra.mxu0 0.0
        %1549 = vmatprep.subr.mxu0 0.0
        %1550 = vmatpush1.msra.mxu0 0.0
        %1551 = vmatprep.subr.mxu0 0.0
        %1552 = vmatpush1.msra.mxu0 0.0
        %1553 = vmatprep.subr.mxu0 0.0
        %1554 = vmatpush1.msra.mxu0 0.0
        %1555 = vmatprep.subr.mxu0 0.0
        %1556 = vmatpush1.msra.mxu0 0.0
        %1557 = vmatprep.subr.mxu0 0.0
        %1558 = vmatpush1.msra.mxu0 0.0
        %1559 = vmatprep.subr.mxu0 0.0
        %1560 = vmatpush1.msra.mxu0 0.0
        %1561 = vmatprep.subr.mxu0 0.0
        %1562 = vmatpush1.msra.mxu0 0.0
        %1563 = vmatprep.subr.mxu0 0.0
        %1564 = vmatpush1.msra.mxu0 0.0
        %1565 = vmatprep.subr.mxu0 0.0
        %1566 = vmatpush1.msra.mxu0 0.0
        %1567 = vmatprep.subr.mxu0 0.0
        %1568 = vmatpush1.msra.mxu0 0.0
        %1569 = vmatprep.subr.mxu0 0.0
        %1570 = vmatpush1.msra.mxu0 0.0
        %1571 = vmatprep.subr.mxu0 0.0
        %1572 = vmatpush1.msra.mxu0 0.0
        %1573 = vmatprep.subr.mxu0 0.0
        %1574 = vmatpush1.msra.mxu0 0.0
        %1575 = vmatprep.subr.mxu0 0.0
        %1576 = vmatpush1.msra.mxu0 0.0
        %1577 = vmatprep.subr.mxu0 0.0
        %1578 = vmatpush1.msra.mxu0 0.0
        %1579 = vmatprep.subr.mxu0 0.0
        %1580 = vmatpush1.msra.mxu0 0.0
        %1581 = vmatprep.subr.mxu0 0.0
        %1582 = vmatpush1.msra.mxu0 0.0
        %1583 = vmatprep.subr.mxu0 0.0
        %1584 = vmatpush1.msra.mxu0 0.0
        %1585 = vmatprep.subr.mxu0 0.0
        %1586 = vmatpush1.msra.mxu0 0.0
        %1587 = vmatprep.subr.mxu0 0.0
        %1588 = vmatpush1.msra.mxu0 0.0
        %1589 = vmatprep.subr.mxu0 0.0
        %1590 = vmatpush1.msra.mxu0 0.0
        %1591 = vmatprep.subr.mxu0 0.0
        %1592 = vmatpush1.msra.mxu0 0.0
        %1593 = vmatprep.subr.mxu0 0.0
        %1594 = vmatpush1.msra.mxu0 0.0
        %1595 = vmatprep.subr.mxu0 0.0
        %1596 = vmatpush1.msra.mxu0 0.0
        %1597 = vmatprep.subr.mxu0 0.0
        %1598 = vmatpush1.msra.mxu0 0.0
        %1599 = vmatprep.mubr.f32.mxu0 0.0
        %1600 = vmatmul.mubr.f32.gmra.mrb[0].mxu0 %v1533
        %v1601 = vpop.f32.mrb[0].mxu0
        %v1602 = vadd.f32 0.0, %v1601
        %v1603 = vpop.f32.mrb[0].mxu0
        %1604 = vdwg.mxu0
        %v1606 = vrot.slane %v1602, 5
        %v1607 = vrot.slane %v1602, 6
        %v1608 = vrot.slane %v1602, 7
        %v1609 = vrot.slane %v1602, 1
        %v1610 = vrot.slane %v1602, 2
        %v1611 = vrot.slane %v1602, 3
        %v1612 = vrot.slane %v1602, 4
        %v1621 = vadd.f32 %v446, %v1606
        %v1622 = vadd.f32 %v451, %v1607
        %v1623 = vadd.f32 %v456, %v1608
        %v1624 = vadd.f32 %v461, %v1602
        %v1625 = vadd.f32 %v466, %v1609
        %v1626 = vadd.f32 %v471, %v1610
        %v1627 = vadd.f32 %v476, %v1611
        %v1628 = vadd.f32 %v481, %v1612
        %v1629 = vxor.u32 %v1621, 2147483648
        %v1630 = vxor.u32 %v1622, 2147483648
        %v1631 = vxor.u32 %v1623, 2147483648
        %v1632 = vxor.u32 %v1624, 2147483648
        %v1633 = vxor.u32 %v1625, 2147483648
        %v1634 = vxor.u32 %v1626, 2147483648
        %v1635 = vxor.u32 %v1627, 2147483648
        %v1636 = vxor.u32 %v1628, 2147483648
        %v1637 = vmul.f32 %v1629, 1.442695
        %v1638 = vpow.pop %v1637
        %v1639 = vmul.f32 %v1630, 1.442695
        %v1640 = vpow.pop %v1639
        %v1641 = vmul.f32 %v1631, 1.442695
        %v1642 = vpow.pop %v1641
        %v1643 = vmul.f32 %v1632, 1.442695
        %v1644 = vpow.pop %v1643
        %v1645 = vmul.f32 %v1633, 1.442695
        %v1646 = vpow.pop %v1645
        %v1647 = vmul.f32 %v1634, 1.442695
        %v1648 = vpow.pop %v1647
        %v1649 = vmul.f32 %v1635, 1.442695
        %v1650 = vpow.pop %v1649
        %v1651 = vmul.f32 %v1636, 1.442695
        %v1652 = vpow.pop %v1651
        %v1653 = vadd.f32 %v1638, 1.0
        %v1654 = vadd.f32 %v1640, 1.0
        %v1655 = vadd.f32 %v1642, 1.0
        %v1656 = vadd.f32 %v1644, 1.0
        %v1657 = vadd.f32 %v1646, 1.0
        %v1658 = vadd.f32 %v1648, 1.0
        %v1659 = vadd.f32 %v1650, 1.0
        %v1660 = vadd.f32 %v1652, 1.0
        %v1661 = vrcp.pop %v1653
        %v1662 = vmul.f32 1.0, %v1661
        %v1663 = vrcp.pop %v1654
        %v1664 = vmul.f32 1.0, %v1663
        %v1665 = vrcp.pop %v1655
        %v1666 = vmul.f32 1.0, %v1665
        %v1667 = vrcp.pop %v1656
        %v1668 = vmul.f32 1.0, %v1667
        %v1669 = vrcp.pop %v1657
        %v1670 = vmul.f32 1.0, %v1669
        %v1671 = vrcp.pop %v1658
        %v1672 = vmul.f32 1.0, %v1671
        %v1673 = vrcp.pop %v1659
        %v1674 = vmul.f32 1.0, %v1673
        %v1675 = vrcp.pop %v1660
        %v1676 = vmul.f32 1.0, %v1675
        %v1677 = vmul.f32 %v1662, 2.0
        %v1678 = vmul.f32 %v1664, 2.0
        %v1679 = vmul.f32 %v1666, 2.0
        %v1680 = vmul.f32 %v1668, 2.0
        %v1681 = vmul.f32 %v1670, 2.0
        %v1682 = vmul.f32 %v1672, 2.0
        %v1683 = vmul.f32 %v1674, 2.0
        %v1684 = vmul.f32 %v1676, 2.0
        %v1685 = vsub.f32 %v1677, 1.0
        %v1686 = vsub.f32 %v1678, 1.0
        %v1687 = vsub.f32 %v1679, 1.0
        %v1688 = vsub.f32 %v1680, 1.0
        %v1689 = vsub.f32 %v1681, 1.0
        %v1690 = vsub.f32 %v1682, 1.0
        %v1691 = vsub.f32 %v1683, 1.0
        %v1692 = vsub.f32 %v1684, 1.0
        %v1701 = vrot.slane %v1453, 7
        %v1702 = vrot.slane %v1454, 7
        %v1703 = vrot.slane %v1455, 7
        %v1704 = vrot.slane %v1456, 7
        %v1705 = vrot.slane %v1457, 7
        %v1706 = vrot.slane %v1458, 7
        %v1707 = vrot.slane %v1459, 7
        %v1708 = vrot.slane %v1460, 7
        %v1717 = vmul.f32 %v1662, %v1701
        %v1718 = vmul.f32 %v1664, %v1702
        %v1719 = vmul.f32 %v1666, %v1703
        %v1720 = vmul.f32 %v1668, %v1704
        %v1721 = vmul.f32 %v1670, %v1705
        %v1722 = vmul.f32 %v1672, %v1706
        %v1723 = vmul.f32 %v1674, %v1707
        %v1724 = vmul.f32 %v1676, %v1708
        %1733 = vrot.lane.b32.xlu0 %v1685, 64
        %v1734 = vpop.permute.xlu0 %1733
        %1735 = vrot.lane.b32.xlu0 %v1686, 64
        %v1736 = vpop.permute.xlu0 %1735
        %1737 = vrot.lane.b32.xlu0 %v1687, 64
        %v1738 = vpop.permute.xlu0 %1737
        %1739 = vrot.lane.b32.xlu0 %v1688, 64
        %v1740 = vpop.permute.xlu0 %1739
        %1741 = vrot.lane.b32.xlu0 %v1689, 64
        %v1742 = vpop.permute.xlu0 %1741
        %1743 = vrot.lane.b32.xlu0 %v1690, 64
        %v1744 = vpop.permute.xlu0 %1743
        %1745 = vrot.lane.b32.xlu0 %v1691, 64
        %v1746 = vpop.permute.xlu0 %1745
        %1747 = vrot.lane.b32.xlu0 %v1692, 64
        %v1748 = vpop.permute.xlu0 %1747
        %v1757 = vmul.f32 %v1662, %v1734
        %v1758 = vmul.f32 %v1664, %v1736
        %v1759 = vmul.f32 %v1666, %v1738
        %v1760 = vmul.f32 %v1668, %v1740
        %v1761 = vmul.f32 %v1670, %v1742
        %v1762 = vmul.f32 %v1672, %v1744
        %v1763 = vmul.f32 %v1674, %v1746
        %v1764 = vmul.f32 %v1676, %v1748
        %1773 = vrot.lane.b32.xlu0 %v1757, 32
        %v1774 = vpop.permute.xlu0 %1773
        %1775 = vrot.lane.b32.xlu0 %v1758, 32
        %v1776 = vpop.permute.xlu0 %1775
        %1777 = vrot.lane.b32.xlu0 %v1759, 32
        %v1778 = vpop.permute.xlu0 %1777
        %1779 = vrot.lane.b32.xlu0 %v1760, 32
        %v1780 = vpop.permute.xlu0 %1779
        %1781 = vrot.lane.b32.xlu0 %v1761, 32
        %v1782 = vpop.permute.xlu0 %1781
        %1783 = vrot.lane.b32.xlu0 %v1762, 32
        %v1784 = vpop.permute.xlu0 %1783
        %1785 = vrot.lane.b32.xlu0 %v1763, 32
        %v1786 = vpop.permute.xlu0 %1785
        %1787 = vrot.lane.b32.xlu0 %v1764, 32
        %v1788 = vpop.permute.xlu0 %1787
        %v1797 = vadd.f32 %v1717, %v1774
        %v1798 = vadd.f32 %v1718, %v1776
        %v1799 = vadd.f32 %v1719, %v1778
        %v1800 = vadd.f32 %v1720, %v1780
        %v1801 = vadd.f32 %v1721, %v1782
        %v1802 = vadd.f32 %v1722, %v1784
        %v1803 = vadd.f32 %v1723, %v1786
        %v1804 = vadd.f32 %v1724, %v1788
        %v1805 = vtanh.pop %v1797
        %v1806 = vtanh.pop %v1798
        %v1807 = vtanh.pop %v1799
        %v1808 = vtanh.pop %v1800
        %v1809 = vtanh.pop %v1801
        %v1810 = vtanh.pop %v1802
        %v1811 = vtanh.pop %v1803
        %v1812 = vtanh.pop %v1804
        %1821 = vrot.lane.b32.xlu0 %v1805, 64
        %v1822 = vpop.permute.xlu0 %1821
        %1823 = vrot.lane.b32.xlu0 %v1806, 64
        %v1824 = vpop.permute.xlu0 %1823
        %1825 = vrot.lane.b32.xlu0 %v1807, 64
        %v1826 = vpop.permute.xlu0 %1825
        %1827 = vrot.lane.b32.xlu0 %v1808, 64
        %v1828 = vpop.permute.xlu0 %1827
        %1829 = vrot.lane.b32.xlu0 %v1809, 64
        %v1830 = vpop.permute.xlu0 %1829
        %1831 = vrot.lane.b32.xlu0 %v1810, 64
        %v1832 = vpop.permute.xlu0 %1831
        %1833 = vrot.lane.b32.xlu0 %v1811, 64
        %v1834 = vpop.permute.xlu0 %1833
        %1835 = vrot.lane.b32.xlu0 %v1812, 64
        %v1836 = vpop.permute.xlu0 %1835
        %v1845 = vmul.f32 %v1662, %v1822
        %v1846 = vmul.f32 %v1664, %v1824
        %v1847 = vmul.f32 %v1666, %v1826
        %v1848 = vmul.f32 %v1668, %v1828
        %v1849 = vmul.f32 %v1670, %v1830
        %v1850 = vmul.f32 %v1672, %v1832
        %v1851 = vmul.f32 %v1674, %v1834
        %v1852 = vmul.f32 %v1676, %v1836
        %v1861 = vrot.slane %v1845, 3
        %v1862 = vrot.slane %v1846, 2
        %v1863 = vsel %vm823, %v1862, %v1861
        %v1864 = vrot.slane %v1847, 1
        %v1865 = vsel %vm826, %v1864, %v1863
        %v1866 = vsel %vm829, %v1848, %v1865
        %v1867 = vrot.slane %v1849, 7
        %v1868 = vsel %vm832, %v1867, %v1866
        %v1869 = vrot.slane %v1850, 6
        %v1870 = vsel %vm835, %v1869, %v1868
        %v1871 = vrot.slane %v1851, 5
        %v1872 = vsel %vm838, %v1871, %v1870
        %v1873 = vrot.slane %v1852, 4
        %v1874 = vsel %vm841, %v1873, %v1872
        %1875 = vrot.lane.b32.xlu0 %v1874, 32
        %v1876 = vpop.permute.xlu0 %1875
        %v1877 = vsel %vm484, %v1876, 0
        %1879 = vmatprep.subr.mxu0 0.0
        %1880 = vmatpush1.msra.mxu0 %v331
        %1881 = vmatprep.subr.mxu0 0.0
        %1882 = vmatpush1.msra.mxu0 %v332
        %1883 = vmatprep.subr.mxu0 0.0
        %1884 = vmatpush1.msra.mxu0 %v333
        %1885 = vmatprep.subr.mxu0 0.0
        %1886 = vmatpush1.msra.mxu0 %v334
        %1887 = vmatprep.subr.mxu0 0.0
        %1888 = vmatpush1.msra.mxu0 0.0
        %1889 = vmatprep.subr.mxu0 0.0
        %1890 = vmatpush1.msra.mxu0 0.0
        %1891 = vmatprep.subr.mxu0 0.0
        %1892 = vmatpush1.msra.mxu0 0.0
        %1893 = vmatprep.subr.mxu0 0.0
        %1894 = vmatpush1.msra.mxu0 0.0
        %1895 = vmatprep.subr.mxu0 0.0
        %1896 = vmatpush1.msra.mxu0 0.0
        %1897 = vmatprep.subr.mxu0 0.0
        %1898 = vmatpush1.msra.mxu0 0.0
        %1899 = vmatprep.subr.mxu0 0.0
        %1900 = vmatpush1.msra.mxu0 0.0
        %1901 = vmatprep.subr.mxu0 0.0
        %1902 = vmatpush1.msra.mxu0 0.0
        %1903 = vmatprep.subr.mxu0 0.0
        %1904 = vmatpush1.msra.mxu0 0.0
        %1905 = vmatprep.subr.mxu0 0.0
        %1906 = vmatpush1.msra.mxu0 0.0
        %1907 = vmatprep.subr.mxu0 0.0
        %1908 = vmatpush1.msra.mxu0 0.0
        %1909 = vmatprep.subr.mxu0 0.0
        %1910 = vmatpush1.msra.mxu0 0.0
        %1911 = vmatprep.subr.mxu0 0.0
        %1912 = vmatpush1.msra.mxu0 0.0
        %1913 = vmatprep.subr.mxu0 0.0
        %1914 = vmatpush1.msra.mxu0 0.0
        %1915 = vmatprep.subr.mxu0 0.0
        %1916 = vmatpush1.msra.mxu0 0.0
        %1917 = vmatprep.subr.mxu0 0.0
        %1918 = vmatpush1.msra.mxu0 0.0
        %1919 = vmatprep.subr.mxu0 0.0
        %1920 = vmatpush1.msra.mxu0 0.0
        %1921 = vmatprep.subr.mxu0 0.0
        %1922 = vmatpush1.msra.mxu0 0.0
        %1923 = vmatprep.subr.mxu0 0.0
        %1924 = vmatpush1.msra.mxu0 0.0
        %1925 = vmatprep.subr.mxu0 0.0
        %1926 = vmatpush1.msra.mxu0 0.0
        %1927 = vmatprep.subr.mxu0 0.0
        %1928 = vmatpush1.msra.mxu0 0.0
        %1929 = vmatprep.subr.mxu0 0.0
        %1930 = vmatpush1.msra.mxu0 0.0
        %1931 = vmatprep.subr.mxu0 0.0
        %1932 = vmatpush1.msra.mxu0 0.0
        %1933 = vmatprep.subr.mxu0 0.0
        %1934 = vmatpush1.msra.mxu0 0.0
        %1935 = vmatprep.subr.mxu0 0.0
        %1936 = vmatpush1.msra.mxu0 0.0
        %1937 = vmatprep.subr.mxu0 0.0
        %1938 = vmatpush1.msra.mxu0 0.0
        %1939 = vmatprep.subr.mxu0 0.0
        %1940 = vmatpush1.msra.mxu0 0.0
        %1941 = vmatprep.subr.mxu0 0.0
        %1942 = vmatpush1.msra.mxu0 0.0
        %1943 = vmatprep.mubr.f32.mxu0 0.0
        %1944 = vmatmul.mubr.f32.gmra.mrb[0].mxu0 %v1877
        %v1945 = vpop.f32.mrb[0].mxu0
        %v1946 = vadd.f32 0.0, %v1945
        %v1947 = vpop.f32.mrb[0].mxu0
        %1948 = vdwg.mxu0
        %v1950 = vrot.slane %v1946, 4
        %v1951 = vrot.slane %v1946, 5
        %v1952 = vrot.slane %v1946, 6
        %v1953 = vrot.slane %v1946, 7
        %v1954 = vrot.slane %v1946, 1
        %v1955 = vrot.slane %v1946, 2
        %v1956 = vrot.slane %v1946, 3
        %v1965 = vadd.f32 %v446, %v1950
        %v1966 = vadd.f32 %v451, %v1951
        %v1967 = vadd.f32 %v456, %v1952
        %v1968 = vadd.f32 %v461, %v1953
        %v1969 = vadd.f32 %v466, %v1946
        %v1970 = vadd.f32 %v471, %v1954
        %v1971 = vadd.f32 %v476, %v1955
        %v1972 = vadd.f32 %v481, %v1956
        %v1973 = vxor.u32 %v1965, 2147483648
        %v1974 = vxor.u32 %v1966, 2147483648
        %v1975 = vxor.u32 %v1967, 2147483648
        %v1976 = vxor.u32 %v1968, 2147483648
        %v1977 = vxor.u32 %v1969, 2147483648
        %v1978 = vxor.u32 %v1970, 2147483648
        %v1979 = vxor.u32 %v1971, 2147483648
        %v1980 = vxor.u32 %v1972, 2147483648
        %v1981 = vmul.f32 %v1973, 1.442695
        %v1982 = vpow.pop %v1981
        %v1983 = vmul.f32 %v1974, 1.442695
        %v1984 = vpow.pop %v1983
        %v1985 = vmul.f32 %v1975, 1.442695
        %v1986 = vpow.pop %v1985
        %v1987 = vmul.f32 %v1976, 1.442695
        %v1988 = vpow.pop %v1987
        %v1989 = vmul.f32 %v1977, 1.442695
        %v1990 = vpow.pop %v1989
        %v1991 = vmul.f32 %v1978, 1.442695
        %v1992 = vpow.pop %v1991
        %v1993 = vmul.f32 %v1979, 1.442695
        %v1994 = vpow.pop %v1993
        %v1995 = vmul.f32 %v1980, 1.442695
        %v1996 = vpow.pop %v1995
        %v1997 = vadd.f32 %v1982, 1.0
        %v1998 = vadd.f32 %v1984, 1.0
        %v1999 = vadd.f32 %v1986, 1.0
        %v2000 = vadd.f32 %v1988, 1.0
        %v2001 = vadd.f32 %v1990, 1.0
        %v2002 = vadd.f32 %v1992, 1.0
        %v2003 = vadd.f32 %v1994, 1.0
        %v2004 = vadd.f32 %v1996, 1.0
        %v2005 = vrcp.pop %v1997
        %v2006 = vmul.f32 1.0, %v2005
        %v2007 = vrcp.pop %v1998
        %v2008 = vmul.f32 1.0, %v2007
        %v2009 = vrcp.pop %v1999
        %v2010 = vmul.f32 1.0, %v2009
        %v2011 = vrcp.pop %v2000
        %v2012 = vmul.f32 1.0, %v2011
        %v2013 = vrcp.pop %v2001
        %v2014 = vmul.f32 1.0, %v2013
        %v2015 = vrcp.pop %v2002
        %v2016 = vmul.f32 1.0, %v2015
        %v2017 = vrcp.pop %v2003
        %v2018 = vmul.f32 1.0, %v2017
        %v2019 = vrcp.pop %v2004
        %v2020 = vmul.f32 1.0, %v2019
        %v2021 = vmul.f32 %v2006, 2.0
        %v2022 = vmul.f32 %v2008, 2.0
        %v2023 = vmul.f32 %v2010, 2.0
        %v2024 = vmul.f32 %v2012, 2.0
        %v2025 = vmul.f32 %v2014, 2.0
        %v2026 = vmul.f32 %v2016, 2.0
        %v2027 = vmul.f32 %v2018, 2.0
        %v2028 = vmul.f32 %v2020, 2.0
        %v2029 = vsub.f32 %v2021, 1.0
        %v2030 = vsub.f32 %v2022, 1.0
        %v2031 = vsub.f32 %v2023, 1.0
        %v2032 = vsub.f32 %v2024, 1.0
        %v2033 = vsub.f32 %v2025, 1.0
        %v2034 = vsub.f32 %v2026, 1.0
        %v2035 = vsub.f32 %v2027, 1.0
        %v2036 = vsub.f32 %v2028, 1.0
        %v2045 = vrot.slane %v1797, 7
        %v2046 = vrot.slane %v1798, 7
        %v2047 = vrot.slane %v1799, 7
        %v2048 = vrot.slane %v1800, 7
        %v2049 = vrot.slane %v1801, 7
        %v2050 = vrot.slane %v1802, 7
        %v2051 = vrot.slane %v1803, 7
        %v2052 = vrot.slane %v1804, 7
        %v2061 = vmul.f32 %v2006, %v2045
        %v2062 = vmul.f32 %v2008, %v2046
        %v2063 = vmul.f32 %v2010, %v2047
        %v2064 = vmul.f32 %v2012, %v2048
        %v2065 = vmul.f32 %v2014, %v2049
        %v2066 = vmul.f32 %v2016, %v2050
        %v2067 = vmul.f32 %v2018, %v2051
        %v2068 = vmul.f32 %v2020, %v2052
        %2077 = vrot.lane.b32.xlu0 %v2029, 64
        %v2078 = vpop.permute.xlu0 %2077
        %2079 = vrot.lane.b32.xlu0 %v2030, 64
        %v2080 = vpop.permute.xlu0 %2079
        %2081 = vrot.lane.b32.xlu0 %v2031, 64
        %v2082 = vpop.permute.xlu0 %2081
        %2083 = vrot.lane.b32.xlu0 %v2032, 64
        %v2084 = vpop.permute.xlu0 %2083
        %2085 = vrot.lane.b32.xlu0 %v2033, 64
        %v2086 = vpop.permute.xlu0 %2085
        %2087 = vrot.lane.b32.xlu0 %v2034, 64
        %v2088 = vpop.permute.xlu0 %2087
        %2089 = vrot.lane.b32.xlu0 %v2035, 64
        %v2090 = vpop.permute.xlu0 %2089
        %2091 = vrot.lane.b32.xlu0 %v2036, 64
        %v2092 = vpop.permute.xlu0 %2091
        %v2101 = vmul.f32 %v2006, %v2078
        %v2102 = vmul.f32 %v2008, %v2080
        %v2103 = vmul.f32 %v2010, %v2082
        %v2104 = vmul.f32 %v2012, %v2084
        %v2105 = vmul.f32 %v2014, %v2086
        %v2106 = vmul.f32 %v2016, %v2088
        %v2107 = vmul.f32 %v2018, %v2090
        %v2108 = vmul.f32 %v2020, %v2092
        %2117 = vrot.lane.b32.xlu0 %v2101, 32
        %v2118 = vpop.permute.xlu0 %2117
        %2119 = vrot.lane.b32.xlu0 %v2102, 32
        %v2120 = vpop.permute.xlu0 %2119
        %2121 = vrot.lane.b32.xlu0 %v2103, 32
        %v2122 = vpop.permute.xlu0 %2121
        %2123 = vrot.lane.b32.xlu0 %v2104, 32
        %v2124 = vpop.permute.xlu0 %2123
        %2125 = vrot.lane.b32.xlu0 %v2105, 32
        %v2126 = vpop.permute.xlu0 %2125
        %2127 = vrot.lane.b32.xlu0 %v2106, 32
        %v2128 = vpop.permute.xlu0 %2127
        %2129 = vrot.lane.b32.xlu0 %v2107, 32
        %v2130 = vpop.permute.xlu0 %2129
        %2131 = vrot.lane.b32.xlu0 %v2108, 32
        %v2132 = vpop.permute.xlu0 %2131
        %v2141 = vadd.f32 %v2061, %v2118
        %v2142 = vadd.f32 %v2062, %v2120
        %v2143 = vadd.f32 %v2063, %v2122
        %v2144 = vadd.f32 %v2064, %v2124
        %v2145 = vadd.f32 %v2065, %v2126
        %v2146 = vadd.f32 %v2066, %v2128
        %v2147 = vadd.f32 %v2067, %v2130
        %v2148 = vadd.f32 %v2068, %v2132
        %v2149 = vtanh.pop %v2141
        %v2150 = vtanh.pop %v2142
        %v2151 = vtanh.pop %v2143
        %v2152 = vtanh.pop %v2144
        %v2153 = vtanh.pop %v2145
        %v2154 = vtanh.pop %v2146
        %v2155 = vtanh.pop %v2147
        %v2156 = vtanh.pop %v2148
        %2165 = vrot.lane.b32.xlu0 %v2149, 64
        %v2166 = vpop.permute.xlu0 %2165
        %2167 = vrot.lane.b32.xlu0 %v2150, 64
        %v2168 = vpop.permute.xlu0 %2167
        %2169 = vrot.lane.b32.xlu0 %v2151, 64
        %v2170 = vpop.permute.xlu0 %2169
        %2171 = vrot.lane.b32.xlu0 %v2152, 64
        %v2172 = vpop.permute.xlu0 %2171
        %2173 = vrot.lane.b32.xlu0 %v2153, 64
        %v2174 = vpop.permute.xlu0 %2173
        %2175 = vrot.lane.b32.xlu0 %v2154, 64
        %v2176 = vpop.permute.xlu0 %2175
        %2177 = vrot.lane.b32.xlu0 %v2155, 64
        %v2178 = vpop.permute.xlu0 %2177
        %2179 = vrot.lane.b32.xlu0 %v2156, 64
        %v2180 = vpop.permute.xlu0 %2179
        %v2189 = vmul.f32 %v2006, %v2166
        %v2190 = vmul.f32 %v2008, %v2168
        %v2191 = vmul.f32 %v2010, %v2170
        %v2192 = vmul.f32 %v2012, %v2172
        %v2193 = vmul.f32 %v2014, %v2174
        %v2194 = vmul.f32 %v2016, %v2176
        %v2195 = vmul.f32 %v2018, %v2178
        %v2196 = vmul.f32 %v2020, %v2180
        %v2205 = vrot.slane %v2189, 4
        %v2206 = vrot.slane %v2190, 3
        %v2207 = vsel %vm823, %v2206, %v2205
        %v2208 = vrot.slane %v2191, 2
        %v2209 = vsel %vm826, %v2208, %v2207
        %v2210 = vrot.slane %v2192, 1
        %v2211 = vsel %vm829, %v2210, %v2209
        %v2212 = vsel %vm832, %v2193, %v2211
        %v2213 = vrot.slane %v2194, 7
        %v2214 = vsel %vm835, %v2213, %v2212
        %v2215 = vrot.slane %v2195, 6
        %v2216 = vsel %vm838, %v2215, %v2214
        %v2217 = vrot.slane %v2196, 5
        %v2218 = vsel %vm841, %v2217, %v2216
        %2219 = vrot.lane.b32.xlu0 %v2218, 32
        %v2220 = vpop.permute.xlu0 %2219
        %v2221 = vsel %vm484, %v2220, 0
        %2223 = vmatprep.subr.mxu0 0.0
        %2224 = vmatpush1.msra.mxu0 %v331
        %2225 = vmatprep.subr.mxu0 0.0
        %2226 = vmatpush1.msra.mxu0 %v332
        %2227 = vmatprep.subr.mxu0 0.0
        %2228 = vmatpush1.msra.mxu0 %v333
        %2229 = vmatprep.subr.mxu0 0.0
        %2230 = vmatpush1.msra.mxu0 %v334
        %2231 = vmatprep.subr.mxu0 0.0
        %2232 = vmatpush1.msra.mxu0 0.0
        %2233 = vmatprep.subr.mxu0 0.0
        %2234 = vmatpush1.msra.mxu0 0.0
        %2235 = vmatprep.subr.mxu0 0.0
        %2236 = vmatpush1.msra.mxu0 0.0
        %2237 = vmatprep.subr.mxu0 0.0
        %2238 = vmatpush1.msra.mxu0 0.0
        %2239 = vmatprep.subr.mxu0 0.0
        %2240 = vmatpush1.msra.mxu0 0.0
        %2241 = vmatprep.subr.mxu0 0.0
        %2242 = vmatpush1.msra.mxu0 0.0
        %2243 = vmatprep.subr.mxu0 0.0
        %2244 = vmatpush1.msra.mxu0 0.0
        %2245 = vmatprep.subr.mxu0 0.0
        %2246 = vmatpush1.msra.mxu0 0.0
        %2247 = vmatprep.subr.mxu0 0.0
        %2248 = vmatpush1.msra.mxu0 0.0
        %2249 = vmatprep.subr.mxu0 0.0
        %2250 = vmatpush1.msra.mxu0 0.0
        %2251 = vmatprep.subr.mxu0 0.0
        %2252 = vmatpush1.msra.mxu0 0.0
        %2253 = vmatprep.subr.mxu0 0.0
        %2254 = vmatpush1.msra.mxu0 0.0
        %2255 = vmatprep.subr.mxu0 0.0
        %2256 = vmatpush1.msra.mxu0 0.0
        %2257 = vmatprep.subr.mxu0 0.0
        %2258 = vmatpush1.msra.mxu0 0.0
        %2259 = vmatprep.subr.mxu0 0.0
        %2260 = vmatpush1.msra.mxu0 0.0
        %2261 = vmatprep.subr.mxu0 0.0
        %2262 = vmatpush1.msra.mxu0 0.0
        %2263 = vmatprep.subr.mxu0 0.0
        %2264 = vmatpush1.msra.mxu0 0.0
        %2265 = vmatprep.subr.mxu0 0.0
        %2266 = vmatpush1.msra.mxu0 0.0
        %2267 = vmatprep.subr.mxu0 0.0
        %2268 = vmatpush1.msra.mxu0 0.0
        %2269 = vmatprep.subr.mxu0 0.0
        %2270 = vmatpush1.msra.mxu0 0.0
        %2271 = vmatprep.subr.mxu0 0.0
        %2272 = vmatpush1.msra.mxu0 0.0
        %2273 = vmatprep.subr.mxu0 0.0
        %2274 = vmatpush1.msra.mxu0 0.0
        %2275 = vmatprep.subr.mxu0 0.0
        %2276 = vmatpush1.msra.mxu0 0.0
        %2277 = vmatprep.subr.mxu0 0.0
        %2278 = vmatpush1.msra.mxu0 0.0
        %2279 = vmatprep.subr.mxu0 0.0
        %2280 = vmatpush1.msra.mxu0 0.0
        %2281 = vmatprep.subr.mxu0 0.0
        %2282 = vmatpush1.msra.mxu0 0.0
        %2283 = vmatprep.subr.mxu0 0.0
        %2284 = vmatpush1.msra.mxu0 0.0
        %2285 = vmatprep.subr.mxu0 0.0
        %2286 = vmatpush1.msra.mxu0 0.0
        %2287 = vmatprep.mubr.f32.mxu0 0.0
        %2288 = vmatmul.mubr.f32.gmra.mrb[0].mxu0 %v2221
        %v2289 = vpop.f32.mrb[0].mxu0
        %v2290 = vadd.f32 0.0, %v2289
        %v2291 = vpop.f32.mrb[0].mxu0
        %2292 = vdwg.mxu0
        %v2294 = vrot.slane %v2290, 3
        %v2295 = vrot.slane %v2290, 4
        %v2296 = vrot.slane %v2290, 5
        %v2297 = vrot.slane %v2290, 6
        %v2298 = vrot.slane %v2290, 7
        %v2299 = vrot.slane %v2290, 1
        %v2300 = vrot.slane %v2290, 2
        %v2309 = vadd.f32 %v446, %v2294
        %v2310 = vadd.f32 %v451, %v2295
        %v2311 = vadd.f32 %v456, %v2296
        %v2312 = vadd.f32 %v461, %v2297
        %v2313 = vadd.f32 %v466, %v2298
        %v2314 = vadd.f32 %v471, %v2290
        %v2315 = vadd.f32 %v476, %v2299
        %v2316 = vadd.f32 %v481, %v2300
        %v2317 = vxor.u32 %v2309, 2147483648
        %v2318 = vxor.u32 %v2310, 2147483648
        %v2319 = vxor.u32 %v2311, 2147483648
        %v2320 = vxor.u32 %v2312, 2147483648
        %v2321 = vxor.u32 %v2313, 2147483648
        %v2322 = vxor.u32 %v2314, 2147483648
        %v2323 = vxor.u32 %v2315, 2147483648
        %v2324 = vxor.u32 %v2316, 2147483648
        %v2325 = vmul.f32 %v2317, 1.442695
        %v2326 = vpow.pop %v2325
        %v2327 = vmul.f32 %v2318, 1.442695
        %v2328 = vpow.pop %v2327
        %v2329 = vmul.f32 %v2319, 1.442695
        %v2330 = vpow.pop %v2329
        %v2331 = vmul.f32 %v2320, 1.442695
        %v2332 = vpow.pop %v2331
        %v2333 = vmul.f32 %v2321, 1.442695
        %v2334 = vpow.pop %v2333
        %v2335 = vmul.f32 %v2322, 1.442695
        %v2336 = vpow.pop %v2335
        %v2337 = vmul.f32 %v2323, 1.442695
        %v2338 = vpow.pop %v2337
        %v2339 = vmul.f32 %v2324, 1.442695
        %v2340 = vpow.pop %v2339
        %v2341 = vadd.f32 %v2326, 1.0
        %v2342 = vadd.f32 %v2328, 1.0
        %v2343 = vadd.f32 %v2330, 1.0
        %v2344 = vadd.f32 %v2332, 1.0
        %v2345 = vadd.f32 %v2334, 1.0
        %v2346 = vadd.f32 %v2336, 1.0
        %v2347 = vadd.f32 %v2338, 1.0
        %v2348 = vadd.f32 %v2340, 1.0
        %v2349 = vrcp.pop %v2341
        %v2350 = vmul.f32 1.0, %v2349
        %v2351 = vrcp.pop %v2342
        %v2352 = vmul.f32 1.0, %v2351
        %v2353 = vrcp.pop %v2343
        %v2354 = vmul.f32 1.0, %v2353
        %v2355 = vrcp.pop %v2344
        %v2356 = vmul.f32 1.0, %v2355
        %v2357 = vrcp.pop %v2345
        %v2358 = vmul.f32 1.0, %v2357
        %v2359 = vrcp.pop %v2346
        %v2360 = vmul.f32 1.0, %v2359
        %v2361 = vrcp.pop %v2347
        %v2362 = vmul.f32 1.0, %v2361
        %v2363 = vrcp.pop %v2348
        %v2364 = vmul.f32 1.0, %v2363
        %v2365 = vmul.f32 %v2350, 2.0
        %v2366 = vmul.f32 %v2352, 2.0
        %v2367 = vmul.f32 %v2354, 2.0
        %v2368 = vmul.f32 %v2356, 2.0
        %v2369 = vmul.f32 %v2358, 2.0
        %v2370 = vmul.f32 %v2360, 2.0
        %v2371 = vmul.f32 %v2362, 2.0
        %v2372 = vmul.f32 %v2364, 2.0
        %v2373 = vsub.f32 %v2365, 1.0
        %v2374 = vsub.f32 %v2366, 1.0
        %v2375 = vsub.f32 %v2367, 1.0
        %v2376 = vsub.f32 %v2368, 1.0
        %v2377 = vsub.f32 %v2369, 1.0
        %v2378 = vsub.f32 %v2370, 1.0
        %v2379 = vsub.f32 %v2371, 1.0
        %v2380 = vsub.f32 %v2372, 1.0
        %v2389 = vrot.slane %v2141, 7
        %v2390 = vrot.slane %v2142, 7
        %v2391 = vrot.slane %v2143, 7
        %v2392 = vrot.slane %v2144, 7
        %v2393 = vrot.slane %v2145, 7
        %v2394 = vrot.slane %v2146, 7
        %v2395 = vrot.slane %v2147, 7
        %v2396 = vrot.slane %v2148, 7
        %v2405 = vmul.f32 %v2350, %v2389
        %v2406 = vmul.f32 %v2352, %v2390
        %v2407 = vmul.f32 %v2354, %v2391
        %v2408 = vmul.f32 %v2356, %v2392
        %v2409 = vmul.f32 %v2358, %v2393
        %v2410 = vmul.f32 %v2360, %v2394
        %v2411 = vmul.f32 %v2362, %v2395
        %v2412 = vmul.f32 %v2364, %v2396
        %2421 = vrot.lane.b32.xlu0 %v2373, 64
        %v2422 = vpop.permute.xlu0 %2421
        %2423 = vrot.lane.b32.xlu0 %v2374, 64
        %v2424 = vpop.permute.xlu0 %2423
        %2425 = vrot.lane.b32.xlu0 %v2375, 64
        %v2426 = vpop.permute.xlu0 %2425
        %2427 = vrot.lane.b32.xlu0 %v2376, 64
        %v2428 = vpop.permute.xlu0 %2427
        %2429 = vrot.lane.b32.xlu0 %v2377, 64
        %v2430 = vpop.permute.xlu0 %2429
        %2431 = vrot.lane.b32.xlu0 %v2378, 64
        %v2432 = vpop.permute.xlu0 %2431
        %2433 = vrot.lane.b32.xlu0 %v2379, 64
        %v2434 = vpop.permute.xlu0 %2433
        %2435 = vrot.lane.b32.xlu0 %v2380, 64
        %v2436 = vpop.permute.xlu0 %2435
        %v2445 = vmul.f32 %v2350, %v2422
        %v2446 = vmul.f32 %v2352, %v2424
        %v2447 = vmul.f32 %v2354, %v2426
        %v2448 = vmul.f32 %v2356, %v2428
        %v2449 = vmul.f32 %v2358, %v2430
        %v2450 = vmul.f32 %v2360, %v2432
        %v2451 = vmul.f32 %v2362, %v2434
        %v2452 = vmul.f32 %v2364, %v2436
        %2461 = vrot.lane.b32.xlu0 %v2445, 32
        %v2462 = vpop.permute.xlu0 %2461
        %2463 = vrot.lane.b32.xlu0 %v2446, 32
        %v2464 = vpop.permute.xlu0 %2463
        %2465 = vrot.lane.b32.xlu0 %v2447, 32
        %v2466 = vpop.permute.xlu0 %2465
        %2467 = vrot.lane.b32.xlu0 %v2448, 32
        %v2468 = vpop.permute.xlu0 %2467
        %2469 = vrot.lane.b32.xlu0 %v2449, 32
        %v2470 = vpop.permute.xlu0 %2469
        %2471 = vrot.lane.b32.xlu0 %v2450, 32
        %v2472 = vpop.permute.xlu0 %2471
        %2473 = vrot.lane.b32.xlu0 %v2451, 32
        %v2474 = vpop.permute.xlu0 %2473
        %2475 = vrot.lane.b32.xlu0 %v2452, 32
        %v2476 = vpop.permute.xlu0 %2475
        %v2485 = vadd.f32 %v2405, %v2462
        %v2486 = vadd.f32 %v2406, %v2464
        %v2487 = vadd.f32 %v2407, %v2466
        %v2488 = vadd.f32 %v2408, %v2468
        %v2489 = vadd.f32 %v2409, %v2470
        %v2490 = vadd.f32 %v2410, %v2472
        %v2491 = vadd.f32 %v2411, %v2474
        %v2492 = vadd.f32 %v2412, %v2476
        %v2493 = vtanh.pop %v2485
        %v2494 = vtanh.pop %v2486
        %v2495 = vtanh.pop %v2487
        %v2496 = vtanh.pop %v2488
        %v2497 = vtanh.pop %v2489
        %v2498 = vtanh.pop %v2490
        %v2499 = vtanh.pop %v2491
        %v2500 = vtanh.pop %v2492
        %2509 = vrot.lane.b32.xlu0 %v2493, 64
        %v2510 = vpop.permute.xlu0 %2509
        %2511 = vrot.lane.b32.xlu0 %v2494, 64
        %v2512 = vpop.permute.xlu0 %2511
        %2513 = vrot.lane.b32.xlu0 %v2495, 64
        %v2514 = vpop.permute.xlu0 %2513
        %2515 = vrot.lane.b32.xlu0 %v2496, 64
        %v2516 = vpop.permute.xlu0 %2515
        %2517 = vrot.lane.b32.xlu0 %v2497, 64
        %v2518 = vpop.permute.xlu0 %2517
        %2519 = vrot.lane.b32.xlu0 %v2498, 64
        %v2520 = vpop.permute.xlu0 %2519
        %2521 = vrot.lane.b32.xlu0 %v2499, 64
        %v2522 = vpop.permute.xlu0 %2521
        %2523 = vrot.lane.b32.xlu0 %v2500, 64
        %v2524 = vpop.permute.xlu0 %2523
        %v2533 = vmul.f32 %v2350, %v2510
        %v2534 = vmul.f32 %v2352, %v2512
        %v2535 = vmul.f32 %v2354, %v2514
        %v2536 = vmul.f32 %v2356, %v2516
        %v2537 = vmul.f32 %v2358, %v2518
        %v2538 = vmul.f32 %v2360, %v2520
        %v2539 = vmul.f32 %v2362, %v2522
        %v2540 = vmul.f32 %v2364, %v2524
        %v2549 = vrot.slane %v2533, 5
        %v2550 = vrot.slane %v2534, 4
        %v2551 = vsel %vm823, %v2550, %v2549
        %v2552 = vrot.slane %v2535, 3
        %v2553 = vsel %vm826, %v2552, %v2551
        %v2554 = vrot.slane %v2536, 2
        %v2555 = vsel %vm829, %v2554, %v2553
        %v2556 = vrot.slane %v2537, 1
        %v2557 = vsel %vm832, %v2556, %v2555
        %v2558 = vsel %vm835, %v2538, %v2557
        %v2559 = vrot.slane %v2539, 7
        %v2560 = vsel %vm838, %v2559, %v2558
        %v2561 = vrot.slane %v2540, 6
        %v2562 = vsel %vm841, %v2561, %v2560
        %2563 = vrot.lane.b32.xlu0 %v2562, 32
        %v2564 = vpop.permute.xlu0 %2563
        %v2565 = vsel %vm484, %v2564, 0
        %2567 = vmatprep.subr.mxu0 0.0
        %2568 = vmatpush1.msra.mxu0 %v331
        %2569 = vmatprep.subr.mxu0 0.0
        %2570 = vmatpush1.msra.mxu0 %v332
        %2571 = vmatprep.subr.mxu0 0.0
        %2572 = vmatpush1.msra.mxu0 %v333
        %2573 = vmatprep.subr.mxu0 0.0
        %2574 = vmatpush1.msra.mxu0 %v334
        %2575 = vmatprep.subr.mxu0 0.0
        %2576 = vmatpush1.msra.mxu0 0.0
        %2577 = vmatprep.subr.mxu0 0.0
        %2578 = vmatpush1.msra.mxu0 0.0
        %2579 = vmatprep.subr.mxu0 0.0
        %2580 = vmatpush1.msra.mxu0 0.0
        %2581 = vmatprep.subr.mxu0 0.0
        %2582 = vmatpush1.msra.mxu0 0.0
        %2583 = vmatprep.subr.mxu0 0.0
        %2584 = vmatpush1.msra.mxu0 0.0
        %2585 = vmatprep.subr.mxu0 0.0
        %2586 = vmatpush1.msra.mxu0 0.0
        %2587 = vmatprep.subr.mxu0 0.0
        %2588 = vmatpush1.msra.mxu0 0.0
        %2589 = vmatprep.subr.mxu0 0.0
        %2590 = vmatpush1.msra.mxu0 0.0
        %2591 = vmatprep.subr.mxu0 0.0
        %2592 = vmatpush1.msra.mxu0 0.0
        %2593 = vmatprep.subr.mxu0 0.0
        %2594 = vmatpush1.msra.mxu0 0.0
        %2595 = vmatprep.subr.mxu0 0.0
        %2596 = vmatpush1.msra.mxu0 0.0
        %2597 = vmatprep.subr.mxu0 0.0
        %2598 = vmatpush1.msra.mxu0 0.0
        %2599 = vmatprep.subr.mxu0 0.0
        %2600 = vmatpush1.msra.mxu0 0.0
        %2601 = vmatprep.subr.mxu0 0.0
        %2602 = vmatpush1.msra.mxu0 0.0
        %2603 = vmatprep.subr.mxu0 0.0
        %2604 = vmatpush1.msra.mxu0 0.0
        %2605 = vmatprep.subr.mxu0 0.0
        %2606 = vmatpush1.msra.mxu0 0.0
        %2607 = vmatprep.subr.mxu0 0.0
        %2608 = vmatpush1.msra.mxu0 0.0
        %2609 = vmatprep.subr.mxu0 0.0
        %2610 = vmatpush1.msra.mxu0 0.0
        %2611 = vmatprep.subr.mxu0 0.0
        %2612 = vmatpush1.msra.mxu0 0.0
        %2613 = vmatprep.subr.mxu0 0.0
        %2614 = vmatpush1.msra.mxu0 0.0
        %2615 = vmatprep.subr.mxu0 0.0
        %2616 = vmatpush1.msra.mxu0 0.0
        %2617 = vmatprep.subr.mxu0 0.0
        %2618 = vmatpush1.msra.mxu0 0.0
        %2619 = vmatprep.subr.mxu0 0.0
        %2620 = vmatpush1.msra.mxu0 0.0
        %2621 = vmatprep.subr.mxu0 0.0
        %2622 = vmatpush1.msra.mxu0 0.0
        %2623 = vmatprep.subr.mxu0 0.0
        %2624 = vmatpush1.msra.mxu0 0.0
        %2625 = vmatprep.subr.mxu0 0.0
        %2626 = vmatpush1.msra.mxu0 0.0
        %2627 = vmatprep.subr.mxu0 0.0
        %2628 = vmatpush1.msra.mxu0 0.0
        %2629 = vmatprep.subr.mxu0 0.0
        %2630 = vmatpush1.msra.mxu0 0.0
        %2631 = vmatprep.mubr.f32.mxu0 0.0
        %2632 = vmatmul.mubr.f32.gmra.mrb[0].mxu0 %v2565
        %v2633 = vpop.f32.mrb[0].mxu0
        %v2634 = vadd.f32 0.0, %v2633
        %v2635 = vpop.f32.mrb[0].mxu0
        %2636 = vdwg.mxu0
        %v2638 = vrot.slane %v2634, 2
        %v2639 = vrot.slane %v2634, 3
        %v2640 = vrot.slane %v2634, 4
        %v2641 = vrot.slane %v2634, 5
        %v2642 = vrot.slane %v2634, 6
        %v2643 = vrot.slane %v2634, 7
        %v2644 = vrot.slane %v2634, 1
        %v2653 = vadd.f32 %v446, %v2638
        %v2654 = vadd.f32 %v451, %v2639
        %v2655 = vadd.f32 %v456, %v2640
        %v2656 = vadd.f32 %v461, %v2641
        %v2657 = vadd.f32 %v466, %v2642
        %v2658 = vadd.f32 %v471, %v2643
        %v2659 = vadd.f32 %v476, %v2634
        %v2660 = vadd.f32 %v481, %v2644
        %v2661 = vxor.u32 %v2653, 2147483648
        %v2662 = vxor.u32 %v2654, 2147483648
        %v2663 = vxor.u32 %v2655, 2147483648
        %v2664 = vxor.u32 %v2656, 2147483648
        %v2665 = vxor.u32 %v2657, 2147483648
        %v2666 = vxor.u32 %v2658, 2147483648
        %v2667 = vxor.u32 %v2659, 2147483648
        %v2668 = vxor.u32 %v2660, 2147483648
        %v2669 = vmul.f32 %v2661, 1.442695
        %v2670 = vpow.pop %v2669
        %v2671 = vmul.f32 %v2662, 1.442695
        %v2672 = vpow.pop %v2671
        %v2673 = vmul.f32 %v2663, 1.442695
        %v2674 = vpow.pop %v2673
        %v2675 = vmul.f32 %v2664, 1.442695
        %v2676 = vpow.pop %v2675
        %v2677 = vmul.f32 %v2665, 1.442695
        %v2678 = vpow.pop %v2677
        %v2679 = vmul.f32 %v2666, 1.442695
        %v2680 = vpow.pop %v2679
        %v2681 = vmul.f32 %v2667, 1.442695
        %v2682 = vpow.pop %v2681
        %v2683 = vmul.f32 %v2668, 1.442695
        %v2684 = vpow.pop %v2683
        %v2685 = vadd.f32 %v2670, 1.0
        %v2686 = vadd.f32 %v2672, 1.0
        %v2687 = vadd.f32 %v2674, 1.0
        %v2688 = vadd.f32 %v2676, 1.0
        %v2689 = vadd.f32 %v2678, 1.0
        %v2690 = vadd.f32 %v2680, 1.0
        %v2691 = vadd.f32 %v2682, 1.0
        %v2692 = vadd.f32 %v2684, 1.0
        %v2693 = vrcp.pop %v2685
        %v2694 = vmul.f32 1.0, %v2693
        %v2695 = vrcp.pop %v2686
        %v2696 = vmul.f32 1.0, %v2695
        %v2697 = vrcp.pop %v2687
        %v2698 = vmul.f32 1.0, %v2697
        %v2699 = vrcp.pop %v2688
        %v2700 = vmul.f32 1.0, %v2699
        %v2701 = vrcp.pop %v2689
        %v2702 = vmul.f32 1.0, %v2701
        %v2703 = vrcp.pop %v2690
        %v2704 = vmul.f32 1.0, %v2703
        %v2705 = vrcp.pop %v2691
        %v2706 = vmul.f32 1.0, %v2705
        %v2707 = vrcp.pop %v2692
        %v2708 = vmul.f32 1.0, %v2707
        %v2709 = vmul.f32 %v2694, 2.0
        %v2710 = vmul.f32 %v2696, 2.0
        %v2711 = vmul.f32 %v2698, 2.0
        %v2712 = vmul.f32 %v2700, 2.0
        %v2713 = vmul.f32 %v2702, 2.0
        %v2714 = vmul.f32 %v2704, 2.0
        %v2715 = vmul.f32 %v2706, 2.0
        %v2716 = vmul.f32 %v2708, 2.0
        %v2717 = vsub.f32 %v2709, 1.0
        %v2718 = vsub.f32 %v2710, 1.0
        %v2719 = vsub.f32 %v2711, 1.0
        %v2720 = vsub.f32 %v2712, 1.0
        %v2721 = vsub.f32 %v2713, 1.0
        %v2722 = vsub.f32 %v2714, 1.0
        %v2723 = vsub.f32 %v2715, 1.0
        %v2724 = vsub.f32 %v2716, 1.0
        %v2733 = vrot.slane %v2485, 7
        %v2734 = vrot.slane %v2486, 7
        %v2735 = vrot.slane %v2487, 7
        %v2736 = vrot.slane %v2488, 7
        %v2737 = vrot.slane %v2489, 7
        %v2738 = vrot.slane %v2490, 7
        %v2739 = vrot.slane %v2491, 7
        %v2740 = vrot.slane %v2492, 7
        %v2749 = vmul.f32 %v2694, %v2733
        %v2750 = vmul.f32 %v2696, %v2734
        %v2751 = vmul.f32 %v2698, %v2735
        %v2752 = vmul.f32 %v2700, %v2736
        %v2753 = vmul.f32 %v2702, %v2737
        %v2754 = vmul.f32 %v2704, %v2738
        %v2755 = vmul.f32 %v2706, %v2739
        %v2756 = vmul.f32 %v2708, %v2740
        %2765 = vrot.lane.b32.xlu0 %v2717, 64
        %v2766 = vpop.permute.xlu0 %2765
        %2767 = vrot.lane.b32.xlu0 %v2718, 64
        %v2768 = vpop.permute.xlu0 %2767
        %2769 = vrot.lane.b32.xlu0 %v2719, 64
        %v2770 = vpop.permute.xlu0 %2769
        %2771 = vrot.lane.b32.xlu0 %v2720, 64
        %v2772 = vpop.permute.xlu0 %2771
        %2773 = vrot.lane.b32.xlu0 %v2721, 64
        %v2774 = vpop.permute.xlu0 %2773
        %2775 = vrot.lane.b32.xlu0 %v2722, 64
        %v2776 = vpop.permute.xlu0 %2775
        %2777 = vrot.lane.b32.xlu0 %v2723, 64
        %v2778 = vpop.permute.xlu0 %2777
        %2779 = vrot.lane.b32.xlu0 %v2724, 64
        %v2780 = vpop.permute.xlu0 %2779
        %v2789 = vmul.f32 %v2694, %v2766
        %v2790 = vmul.f32 %v2696, %v2768
        %v2791 = vmul.f32 %v2698, %v2770
        %v2792 = vmul.f32 %v2700, %v2772
        %v2793 = vmul.f32 %v2702, %v2774
        %v2794 = vmul.f32 %v2704, %v2776
        %v2795 = vmul.f32 %v2706, %v2778
        %v2796 = vmul.f32 %v2708, %v2780
        %2805 = vrot.lane.b32.xlu0 %v2789, 32
        %v2806 = vpop.permute.xlu0 %2805
        %2807 = vrot.lane.b32.xlu0 %v2790, 32
        %v2808 = vpop.permute.xlu0 %2807
        %2809 = vrot.lane.b32.xlu0 %v2791, 32
        %v2810 = vpop.permute.xlu0 %2809
        %2811 = vrot.lane.b32.xlu0 %v2792, 32
        %v2812 = vpop.permute.xlu0 %2811
        %2813 = vrot.lane.b32.xlu0 %v2793, 32
        %v2814 = vpop.permute.xlu0 %2813
        %2815 = vrot.lane.b32.xlu0 %v2794, 32
        %v2816 = vpop.permute.xlu0 %2815
        %2817 = vrot.lane.b32.xlu0 %v2795, 32
        %v2818 = vpop.permute.xlu0 %2817
        %2819 = vrot.lane.b32.xlu0 %v2796, 32
        %v2820 = vpop.permute.xlu0 %2819
        %v2829 = vadd.f32 %v2749, %v2806
        %v2830 = vadd.f32 %v2750, %v2808
        %v2831 = vadd.f32 %v2751, %v2810
        %v2832 = vadd.f32 %v2752, %v2812
        %v2833 = vadd.f32 %v2753, %v2814
        %v2834 = vadd.f32 %v2754, %v2816
        %v2835 = vadd.f32 %v2755, %v2818
        %v2836 = vadd.f32 %v2756, %v2820
        %v2837 = vtanh.pop %v2829
        %v2838 = vtanh.pop %v2830
        %v2839 = vtanh.pop %v2831
        %v2840 = vtanh.pop %v2832
        %v2841 = vtanh.pop %v2833
        %v2842 = vtanh.pop %v2834
        %v2843 = vtanh.pop %v2835
        %v2844 = vtanh.pop %v2836
        %2853 = vrot.lane.b32.xlu0 %v2837, 64
        %v2854 = vpop.permute.xlu0 %2853
        %2855 = vrot.lane.b32.xlu0 %v2838, 64
        %v2856 = vpop.permute.xlu0 %2855
        %2857 = vrot.lane.b32.xlu0 %v2839, 64
        %v2858 = vpop.permute.xlu0 %2857
        %2859 = vrot.lane.b32.xlu0 %v2840, 64
        %v2860 = vpop.permute.xlu0 %2859
        %2861 = vrot.lane.b32.xlu0 %v2841, 64
        %v2862 = vpop.permute.xlu0 %2861
        %2863 = vrot.lane.b32.xlu0 %v2842, 64
        %v2864 = vpop.permute.xlu0 %2863
        %2865 = vrot.lane.b32.xlu0 %v2843, 64
        %v2866 = vpop.permute.xlu0 %2865
        %2867 = vrot.lane.b32.xlu0 %v2844, 64
        %v2868 = vpop.permute.xlu0 %2867
        %v2877 = vmul.f32 %v2694, %v2854
        %v2878 = vmul.f32 %v2696, %v2856
        %v2879 = vmul.f32 %v2698, %v2858
        %v2880 = vmul.f32 %v2700, %v2860
        %v2881 = vmul.f32 %v2702, %v2862
        %v2882 = vmul.f32 %v2704, %v2864
        %v2883 = vmul.f32 %v2706, %v2866
        %v2884 = vmul.f32 %v2708, %v2868
        %v2893 = vrot.slane %v2877, 6
        %v2894 = vrot.slane %v2878, 5
        %v2895 = vsel %vm823, %v2894, %v2893
        %v2896 = vrot.slane %v2879, 4
        %v2897 = vsel %vm826, %v2896, %v2895
        %v2898 = vrot.slane %v2880, 3
        %v2899 = vsel %vm829, %v2898, %v2897
        %v2900 = vrot.slane %v2881, 2
        %v2901 = vsel %vm832, %v2900, %v2899
        %v2902 = vrot.slane %v2882, 1
        %v2903 = vsel %vm835, %v2902, %v2901
        %v2904 = vsel %vm838, %v2883, %v2903
        %v2905 = vrot.slane %v2884, 7
        %v2906 = vsel %vm841, %v2905, %v2904
        %2907 = vrot.lane.b32.xlu0 %v2906, 32
        %v2908 = vpop.permute.xlu0 %2907
        %v2909 = vsel %vm484, %v2908, 0
        %2911 = vmatprep.subr.mxu0 0.0
        %2912 = vmatpush1.msra.mxu0 %v331
        %2913 = vmatprep.subr.mxu0 0.0
        %2914 = vmatpush1.msra.mxu0 %v332
        %2915 = vmatprep.subr.mxu0 0.0
        %2916 = vmatpush1.msra.mxu0 %v333
        %2917 = vmatprep.subr.mxu0 0.0
        %2918 = vmatpush1.msra.mxu0 %v334
        %2919 = vmatprep.subr.mxu0 0.0
        %2920 = vmatpush1.msra.mxu0 0.0
        %2921 = vmatprep.subr.mxu0 0.0
        %2922 = vmatpush1.msra.mxu0 0.0
        %2923 = vmatprep.subr.mxu0 0.0
        %2924 = vmatpush1.msra.mxu0 0.0
        %2925 = vmatprep.subr.mxu0 0.0
        %2926 = vmatpush1.msra.mxu0 0.0
        %2927 = vmatprep.subr.mxu0 0.0
        %2928 = vmatpush1.msra.mxu0 0.0
        %2929 = vmatprep.subr.mxu0 0.0
        %2930 = vmatpush1.msra.mxu0 0.0
        %2931 = vmatprep.subr.mxu0 0.0
        %2932 = vmatpush1.msra.mxu0 0.0
        %2933 = vmatprep.subr.mxu0 0.0
        %2934 = vmatpush1.msra.mxu0 0.0
        %2935 = vmatprep.subr.mxu0 0.0
        %2936 = vmatpush1.msra.mxu0 0.0
        %2937 = vmatprep.subr.mxu0 0.0
        %2938 = vmatpush1.msra.mxu0 0.0
        %2939 = vmatprep.subr.mxu0 0.0
        %2940 = vmatpush1.msra.mxu0 0.0
        %2941 = vmatprep.subr.mxu0 0.0
        %2942 = vmatpush1.msra.mxu0 0.0
        %2943 = vmatprep.subr.mxu0 0.0
        %2944 = vmatpush1.msra.mxu0 0.0
        %2945 = vmatprep.subr.mxu0 0.0
        %2946 = vmatpush1.msra.mxu0 0.0
        %2947 = vmatprep.subr.mxu0 0.0
        %2948 = vmatpush1.msra.mxu0 0.0
        %2949 = vmatprep.subr.mxu0 0.0
        %2950 = vmatpush1.msra.mxu0 0.0
        %2951 = vmatprep.subr.mxu0 0.0
        %2952 = vmatpush1.msra.mxu0 0.0
        %2953 = vmatprep.subr.mxu0 0.0
        %2954 = vmatpush1.msra.mxu0 0.0
        %2955 = vmatprep.subr.mxu0 0.0
        %2956 = vmatpush1.msra.mxu0 0.0
        %2957 = vmatprep.subr.mxu0 0.0
        %2958 = vmatpush1.msra.mxu0 0.0
        %2959 = vmatprep.subr.mxu0 0.0
        %2960 = vmatpush1.msra.mxu0 0.0
        %2961 = vmatprep.subr.mxu0 0.0
        %2962 = vmatpush1.msra.mxu0 0.0
        %2963 = vmatprep.subr.mxu0 0.0
        %2964 = vmatpush1.msra.mxu0 0.0
        %2965 = vmatprep.subr.mxu0 0.0
        %2966 = vmatpush1.msra.mxu0 0.0
        %2967 = vmatprep.subr.mxu0 0.0
        %2968 = vmatpush1.msra.mxu0 0.0
        %2969 = vmatprep.subr.mxu0 0.0
        %2970 = vmatpush1.msra.mxu0 0.0
        %2971 = vmatprep.subr.mxu0 0.0
        %2972 = vmatpush1.msra.mxu0 0.0
        %2973 = vmatprep.subr.mxu0 0.0
        %2974 = vmatpush1.msra.mxu0 0.0
        %2975 = vmatprep.mubr.f32.mxu0 0.0
        %2976 = vmatmul.mubr.f32.gmra.mrb[0].mxu0 %v2909
        %v2977 = vpop.f32.mrb[0].mxu0
        %v2978 = vadd.f32 0.0, %v2977
        %v2979 = vpop.f32.mrb[0].mxu0
        %2980 = vdwg.mxu0
        %v2982 = vrot.slane %v2978, 1
        %v2983 = vrot.slane %v2978, 2
        %v2984 = vrot.slane %v2978, 3
        %v2985 = vrot.slane %v2978, 4
        %v2986 = vrot.slane %v2978, 5
        %v2987 = vrot.slane %v2978, 6
        %v2988 = vrot.slane %v2978, 7
        %v2997 = vadd.f32 %v446, %v2982
        %v2998 = vadd.f32 %v451, %v2983
        %v2999 = vadd.f32 %v456, %v2984
        %v3000 = vadd.f32 %v461, %v2985
        %v3001 = vadd.f32 %v466, %v2986
        %v3002 = vadd.f32 %v471, %v2987
        %v3003 = vadd.f32 %v476, %v2988
        %v3004 = vadd.f32 %v481, %v2978
        %v3005 = vxor.u32 %v2997, 2147483648
        %v3006 = vxor.u32 %v2998, 2147483648
        %v3007 = vxor.u32 %v2999, 2147483648
        %v3008 = vxor.u32 %v3000, 2147483648
        %v3009 = vxor.u32 %v3001, 2147483648
        %v3010 = vxor.u32 %v3002, 2147483648
        %v3011 = vxor.u32 %v3003, 2147483648
        %v3012 = vxor.u32 %v3004, 2147483648
        %v3013 = vmul.f32 %v3005, 1.442695
        %v3014 = vpow.pop %v3013
        %v3015 = vmul.f32 %v3006, 1.442695
        %v3016 = vpow.pop %v3015
        %v3017 = vmul.f32 %v3007, 1.442695
        %v3018 = vpow.pop %v3017
        %v3019 = vmul.f32 %v3008, 1.442695
        %v3020 = vpow.pop %v3019
        %v3021 = vmul.f32 %v3009, 1.442695
        %v3022 = vpow.pop %v3021
        %v3023 = vmul.f32 %v3010, 1.442695
        %v3024 = vpow.pop %v3023
        %v3025 = vmul.f32 %v3011, 1.442695
        %v3026 = vpow.pop %v3025
        %v3027 = vmul.f32 %v3012, 1.442695
        %v3028 = vpow.pop %v3027
        %v3029 = vadd.f32 %v3014, 1.0
        %v3030 = vadd.f32 %v3016, 1.0
        %v3031 = vadd.f32 %v3018, 1.0
        %v3032 = vadd.f32 %v3020, 1.0
        %v3033 = vadd.f32 %v3022, 1.0
        %v3034 = vadd.f32 %v3024, 1.0
        %v3035 = vadd.f32 %v3026, 1.0
        %v3036 = vadd.f32 %v3028, 1.0
        %v3037 = vrcp.pop %v3029
        %v3038 = vmul.f32 1.0, %v3037
        %v3039 = vrcp.pop %v3030
        %v3040 = vmul.f32 1.0, %v3039
        %v3041 = vrcp.pop %v3031
        %v3042 = vmul.f32 1.0, %v3041
        %v3043 = vrcp.pop %v3032
        %v3044 = vmul.f32 1.0, %v3043
        %v3045 = vrcp.pop %v3033
        %v3046 = vmul.f32 1.0, %v3045
        %v3047 = vrcp.pop %v3034
        %v3048 = vmul.f32 1.0, %v3047
        %v3049 = vrcp.pop %v3035
        %v3050 = vmul.f32 1.0, %v3049
        %v3051 = vrcp.pop %v3036
        %v3052 = vmul.f32 1.0, %v3051
        %v3053 = vmul.f32 %v3038, 2.0
        %v3054 = vmul.f32 %v3040, 2.0
        %v3055 = vmul.f32 %v3042, 2.0
        %v3056 = vmul.f32 %v3044, 2.0
        %v3057 = vmul.f32 %v3046, 2.0
        %v3058 = vmul.f32 %v3048, 2.0
        %v3059 = vmul.f32 %v3050, 2.0
        %v3060 = vmul.f32 %v3052, 2.0
        %v3061 = vsub.f32 %v3053, 1.0
        %v3062 = vsub.f32 %v3054, 1.0
        %v3063 = vsub.f32 %v3055, 1.0
        %v3064 = vsub.f32 %v3056, 1.0
        %v3065 = vsub.f32 %v3057, 1.0
        %v3066 = vsub.f32 %v3058, 1.0
        %v3067 = vsub.f32 %v3059, 1.0
        %v3068 = vsub.f32 %v3060, 1.0
        %v3077 = vrot.slane %v2829, 7
        %v3078 = vrot.slane %v2830, 7
        %v3079 = vrot.slane %v2831, 7
        %v3080 = vrot.slane %v2832, 7
        %v3081 = vrot.slane %v2833, 7
        %v3082 = vrot.slane %v2834, 7
        %v3083 = vrot.slane %v2835, 7
        %v3084 = vrot.slane %v2836, 7
        %v3093 = vmul.f32 %v3038, %v3077
        %v3094 = vmul.f32 %v3040, %v3078
        %v3095 = vmul.f32 %v3042, %v3079
        %v3096 = vmul.f32 %v3044, %v3080
        %v3097 = vmul.f32 %v3046, %v3081
        %v3098 = vmul.f32 %v3048, %v3082
        %v3099 = vmul.f32 %v3050, %v3083
        %v3100 = vmul.f32 %v3052, %v3084
        %3109 = vrot.lane.b32.xlu0 %v3061, 64
        %v3110 = vpop.permute.xlu0 %3109
        %3111 = vrot.lane.b32.xlu0 %v3062, 64
        %v3112 = vpop.permute.xlu0 %3111
        %3113 = vrot.lane.b32.xlu0 %v3063, 64
        %v3114 = vpop.permute.xlu0 %3113
        %3115 = vrot.lane.b32.xlu0 %v3064, 64
        %v3116 = vpop.permute.xlu0 %3115
        %3117 = vrot.lane.b32.xlu0 %v3065, 64
        %v3118 = vpop.permute.xlu0 %3117
        %3119 = vrot.lane.b32.xlu0 %v3066, 64
        %v3120 = vpop.permute.xlu0 %3119
        %3121 = vrot.lane.b32.xlu0 %v3067, 64
        %v3122 = vpop.permute.xlu0 %3121
        %3123 = vrot.lane.b32.xlu0 %v3068, 64
        %v3124 = vpop.permute.xlu0 %3123
        %v3133 = vmul.f32 %v3038, %v3110
        %v3134 = vmul.f32 %v3040, %v3112
        %v3135 = vmul.f32 %v3042, %v3114
        %v3136 = vmul.f32 %v3044, %v3116
        %v3137 = vmul.f32 %v3046, %v3118
        %v3138 = vmul.f32 %v3048, %v3120
        %v3139 = vmul.f32 %v3050, %v3122
        %v3140 = vmul.f32 %v3052, %v3124
        %3149 = vrot.lane.b32.xlu0 %v3133, 32
        %v3150 = vpop.permute.xlu0 %3149
        %3151 = vrot.lane.b32.xlu0 %v3134, 32
        %v3152 = vpop.permute.xlu0 %3151
        %3153 = vrot.lane.b32.xlu0 %v3135, 32
        %v3154 = vpop.permute.xlu0 %3153
        %3155 = vrot.lane.b32.xlu0 %v3136, 32
        %v3156 = vpop.permute.xlu0 %3155
        %3157 = vrot.lane.b32.xlu0 %v3137, 32
        %v3158 = vpop.permute.xlu0 %3157
        %3159 = vrot.lane.b32.xlu0 %v3138, 32
        %v3160 = vpop.permute.xlu0 %3159
        %3161 = vrot.lane.b32.xlu0 %v3139, 32
        %v3162 = vpop.permute.xlu0 %3161
        %3163 = vrot.lane.b32.xlu0 %v3140, 32
        %v3164 = vpop.permute.xlu0 %3163
        %v3173 = vadd.f32 %v3093, %v3150
        %v3174 = vadd.f32 %v3094, %v3152
        %v3175 = vadd.f32 %v3095, %v3154
        %v3176 = vadd.f32 %v3096, %v3156
        %v3177 = vadd.f32 %v3097, %v3158
        %v3178 = vadd.f32 %v3098, %v3160
        %v3179 = vadd.f32 %v3099, %v3162
        %v3180 = vadd.f32 %v3100, %v3164
        %v3181 = vtanh.pop %v3173
        %v3182 = vtanh.pop %v3174
        %v3183 = vtanh.pop %v3175
        %v3184 = vtanh.pop %v3176
        %v3185 = vtanh.pop %v3177
        %v3186 = vtanh.pop %v3178
        %v3187 = vtanh.pop %v3179
        %v3188 = vtanh.pop %v3180
        %3197 = vrot.lane.b32.xlu0 %v3181, 64
        %v3198 = vpop.permute.xlu0 %3197
        %3199 = vrot.lane.b32.xlu0 %v3182, 64
        %v3200 = vpop.permute.xlu0 %3199
        %3201 = vrot.lane.b32.xlu0 %v3183, 64
        %v3202 = vpop.permute.xlu0 %3201
        %3203 = vrot.lane.b32.xlu0 %v3184, 64
        %v3204 = vpop.permute.xlu0 %3203
        %3205 = vrot.lane.b32.xlu0 %v3185, 64
        %v3206 = vpop.permute.xlu0 %3205
        %3207 = vrot.lane.b32.xlu0 %v3186, 64
        %v3208 = vpop.permute.xlu0 %3207
        %3209 = vrot.lane.b32.xlu0 %v3187, 64
        %v3210 = vpop.permute.xlu0 %3209
        %3211 = vrot.lane.b32.xlu0 %v3188, 64
        %v3212 = vpop.permute.xlu0 %3211
        %v3221 = vmul.f32 %v3038, %v3198
        %v3222 = vmul.f32 %v3040, %v3200
        %v3223 = vmul.f32 %v3042, %v3202
        %v3224 = vmul.f32 %v3044, %v3204
        %v3225 = vmul.f32 %v3046, %v3206
        %v3226 = vmul.f32 %v3048, %v3208
        %v3227 = vmul.f32 %v3050, %v3210
        %v3228 = vmul.f32 %v3052, %v3212
        %v3237 = vrot.slane %v3222, 7
        %v3238 = vrot.slane %v3223, 6
        %v3239 = vsel %vm823, %v3238, %v3237
        %v3240 = vrot.slane %v3224, 5
        %v3241 = vsel %vm826, %v3240, %v3239
        %v3242 = vrot.slane %v3225, 4
        %v3243 = vsel %vm829, %v3242, %v3241
        %v3244 = vrot.slane %v3226, 3
        %v3245 = vsel %vm832, %v3244, %v3243
        %v3246 = vrot.slane %v3227, 2
        %v3247 = vsel %vm835, %v3246, %v3245
        %v3248 = vrot.slane %v3228, 1
        %v3249 = vsel %vm838, %v3248, %v3247
        %3250 = vrot.lane.b32.xlu0 %v3221, 32
        %v3251 = vpop.permute.xlu0 %3250
        %3252 = vrot.lane.b32.xlu0 %v3249, 32
        %v3253 = vpop.permute.xlu0 %3252
        %vm3256 = vcmask 261127
        %3257 = vst.msk [vmem:[#allocation2 - $0x7] sm:$0x80] %vm3256, %v3251
        %vm3258 = vcmask 260096
        %3259 = vst.msk [vmem:[#allocation2 + $0x1] sm:$0x7f] %vm3258, %v3253
        %v3268 = vrot.slane %v3174, 7
        %v3269 = vrot.slane %v3175, 6
        %v3270 = vsel %vm823, %v3269, %v3268
        %v3271 = vrot.slane %v3176, 5
        %v3272 = vsel %vm826, %v3271, %v3270
        %v3273 = vrot.slane %v3177, 4
        %v3274 = vsel %vm829, %v3273, %v3272
        %v3275 = vrot.slane %v3178, 3
        %v3276 = vsel %vm832, %v3275, %v3274
        %v3277 = vrot.slane %v3179, 2
        %v3278 = vsel %vm835, %v3277, %v3276
        %v3279 = vrot.slane %v3180, 1
        %v3280 = vsel %vm838, %v3279, %v3278
        %3281 = vrot.lane.b32.xlu0 %v3173, 96
        %v3282 = vpop.permute.xlu0 %3281
        %3283 = vrot.lane.b32.xlu0 %v3280, 96
        %v3284 = vpop.permute.xlu0 %3283
        %3287 = vst.msk [vmem:[#allocation3 - $0x7] sm:$0x80] %vm3256, %v3282
        %3288 = vst.msk [vmem:[#allocation3 + $0x1] sm:$0x7f] %vm3258, %v3284
        %p3289 = scmp.eq.s32.totalorder %s28, 1
        // Predicated region
        $region65: #{tpu_custom_call.1} parent=43 // pred_check
          %p3290 = pneg %p3289
        $region66: #{tpu_custom_call.1} parent=43 // pred_check_branch
          %3292 = sbr.rel (%p3290) target = $region68
        $region67: #{tpu_custom_call.1} parent=43 // pred_region
          %v3293 = vld [vmem:[#allocation10] sm:$0xff]
          %v3294 = vld [vmem:[#allocation10 + $0x8] sm:$0xff]
          %v3295 = vld [vmem:[#allocation10 + $0x10] sm:$0xff]
          %v3296 = vld [vmem:[#allocation10 + $0x18] sm:$0xff]
          %v3297 = vld [vmem:[%s5] sm:$0x1]
          %v3299 = vlaneseq
          %v3300 = vshrl.u32 %v3299, 7
          %v3301 = vsub.s32 0, %v3300
          %v3302 = vrot.slane %v3297, %v3301
          %v3304 = vrot.slane %v3221, 7
          %v3305 = vrot.slane %v3222, 6
          %v3306 = vsel %vm823, %v3305, %v3304
          %v3307 = vrot.slane %v3223, 5
          %v3308 = vsel %vm826, %v3307, %v3306
          %v3309 = vrot.slane %v3224, 4
          %v3310 = vsel %vm829, %v3309, %v3308
          %v3311 = vrot.slane %v3225, 3
          %v3312 = vsel %vm832, %v3311, %v3310
          %v3313 = vrot.slane %v3226, 2
          %v3314 = vsel %vm835, %v3313, %v3312
          %v3315 = vrot.slane %v3227, 1
          %v3316 = vsel %vm838, %v3315, %v3314
          %v3317 = vsel %vm841, %v3228, %v3316
          %3318 = vrot.lane.b32.xlu0 %v3317, 32
          %v3319 = vpop.permute.xlu0 %3318
          %v3320 = vsel %vm484, %v3319, 0
          %3322 = vmatprep.subr.mxu0 0.0
          %3323 = vmatpush1.msra.mxu0 %v3293
          %3324 = vmatprep.subr.mxu0 0.0
          %3325 = vmatpush1.msra.mxu0 %v3294
          %3326 = vmatprep.subr.mxu0 0.0
          %3327 = vmatpush1.msra.mxu0 %v3295
          %3328 = vmatprep.subr.mxu0 0.0
          %3329 = vmatpush1.msra.mxu0 %v3296
          %3330 = vmatprep.subr.mxu0 0.0
          %3331 = vmatpush1.msra.mxu0 0.0
          %3332 = vmatprep.subr.mxu0 0.0
          %3333 = vmatpush1.msra.mxu0 0.0
          %3334 = vmatprep.subr.mxu0 0.0
          %3335 = vmatpush1.msra.mxu0 0.0
          %3336 = vmatprep.subr.mxu0 0.0
          %3337 = vmatpush1.msra.mxu0 0.0
          %3338 = vmatprep.subr.mxu0 0.0
          %3339 = vmatpush1.msra.mxu0 0.0
          %3340 = vmatprep.subr.mxu0 0.0
          %3341 = vmatpush1.msra.mxu0 0.0
          %3342 = vmatprep.subr.mxu0 0.0
          %3343 = vmatpush1.msra.mxu0 0.0
          %3344 = vmatprep.subr.mxu0 0.0
          %3345 = vmatpush1.msra.mxu0 0.0
          %3346 = vmatprep.subr.mxu0 0.0
          %3347 = vmatpush1.msra.mxu0 0.0
          %3348 = vmatprep.subr.mxu0 0.0
          %3349 = vmatpush1.msra.mxu0 0.0
          %3350 = vmatprep.subr.mxu0 0.0
          %3351 = vmatpush1.msra.mxu0 0.0
          %3352 = vmatprep.subr.mxu0 0.0
          %3353 = vmatpush1.msra.mxu0 0.0
          %3354 = vmatprep.subr.mxu0 0.0
          %3355 = vmatpush1.msra.mxu0 0.0
          %3356 = vmatprep.subr.mxu0 0.0
          %3357 = vmatpush1.msra.mxu0 0.0
          %3358 = vmatprep.subr.mxu0 0.0
          %3359 = vmatpush1.msra.mxu0 0.0
          %3360 = vmatprep.subr.mxu0 0.0
          %3361 = vmatpush1.msra.mxu0 0.0
          %3362 = vmatprep.subr.mxu0 0.0
          %3363 = vmatpush1.msra.mxu0 0.0
          %3364 = vmatprep.subr.mxu0 0.0
          %3365 = vmatpush1.msra.mxu0 0.0
          %3366 = vmatprep.subr.mxu0 0.0
          %3367 = vmatpush1.msra.mxu0 0.0
          %3368 = vmatprep.subr.mxu0 0.0
          %3369 = vmatpush1.msra.mxu0 0.0
          %3370 = vmatprep.subr.mxu0 0.0
          %3371 = vmatpush1.msra.mxu0 0.0
          %3372 = vmatprep.subr.mxu0 0.0
          %3373 = vmatpush1.msra.mxu0 0.0
          %3374 = vmatprep.subr.mxu0 0.0
          %3375 = vmatpush1.msra.mxu0 0.0
          %3376 = vmatprep.subr.mxu0 0.0
          %3377 = vmatpush1.msra.mxu0 0.0
          %3378 = vmatprep.subr.mxu0 0.0
          %3379 = vmatpush1.msra.mxu0 0.0
          %3380 = vmatprep.subr.mxu0 0.0
          %3381 = vmatpush1.msra.mxu0 0.0
          %3382 = vmatprep.subr.mxu0 0.0
          %3383 = vmatpush1.msra.mxu0 0.0
          %3384 = vmatprep.subr.mxu0 0.0
          %3385 = vmatpush1.msra.mxu0 0.0
          %3386 = vmatprep.mubr.f32.mxu0 0.0
          %3387 = vmatmul.mubr.f32.gmra.mrb[0].mxu0 %v3320
          %v3388 = vpop.f32.mrb[0].mxu0
          %v3389 = vadd.f32 %v3302, %v3388
          %v3390 = vpop.f32.mrb[0].mxu0
          %3391 = vdwg.mxu0
          %3392 = vst.msk [vmem:[#allocation12] sm:$0xff] %vm484, %v3389
        $region68: #{tpu_custom_call.1} parent=43 // pred_fallthru
          _
        // Predicated region
        $region69: #{tpu_custom_call.1} parent=43 // pred_check
          %p3393 = pneg %p186
        $region70: #{tpu_custom_call.1} parent=43 // pred_check_branch
          %3395 = sbr.rel (%p3393) target = $region72
        $region71: #{tpu_custom_call.1} parent=43 // pred_region
          %s3397 = ssub.s32 128, 128
          %3398 = vsyncadd [#allocation6], %s3397
          %s3399 = smul.addr %s27, 128
          %s3400 = scalar_lea.hbm %s6, %s3399
          %s3402 = sshll.u32 [#allocation12], 4
          %s3403 = int_to_ptr.vmem [resolvable:$true] %s3402
          %3405 = dma.vmem_to_hbm [thread:$0]  %s3403, 128, %s3400, [#allocation6]
        $region72: #{tpu_custom_call.1} parent=43 // pred_fallthru
          _
        // Predicated region
        $region73: #{tpu_custom_call.1} parent=43 // pred_check
          %p3406 = pneg %p186
        $region74: #{tpu_custom_call.1} parent=43 // pred_check_branch
          %3408 = sbr.rel (%p3406) target = $region76
        $region75: #{tpu_custom_call.1} parent=43 // pred_region
          %3409 = dma.done [#allocation6], 128
        $region76: #{tpu_custom_call.1} parent=43 // pred_fallthru
          _
      $region44: #{tpu_custom_call.1} parent=5 // pred_fallthru
        _
      %p3410 = scmp.le.s32.totalorder 2, %s18
      // Predicated region
      $region77: #{tpu_custom_call.1} parent=5 // pred_check
        %p3411 = pneg %p3410
      $region78: #{tpu_custom_call.1} parent=5 // pred_check_branch
        %3413 = sbr.rel (%p3411) target = $region80
      $region79: #{tpu_custom_call.1} parent=5 // pred_region
        %s3414 = ssub.s32 %s18, 2
      $region80: #{tpu_custom_call.1} parent=5 // pred_fallthru
        _
    $region6: #{tpu_custom_call.1} parent=1 // loop_footer
      %s22 = sadd.s32 1, %s18
    $region7: #{tpu_custom_call.1} parent=1 // loop_footer_branch
      %17 = sbr.rel target = $region3
    $region8: #{tpu_custom_call.1} parent=1 // loop_exit
      _
    %3415 = vsyncpa [#allocation5], 1
    %s3416 = scalar_lea.sflag [#allocation5], 1
    %3417 = vsyncpa %s3416, 1
    %3418 = vsyncpa [#allocation8], 1
    %3419 = vsyncpa [#allocation11], 1
    %3420 = vsyncpa [#allocation6], 1
    %s3421 = scalar_lea.sflag [#allocation6], 1
    %3422 = vsyncpa %s3421, 1

</llo_original>
